<compile_context>
chip_gen: v5e
topology: v5e:2x2
jax: 0.10.0
libtpu: 0.0.40
codegen_flags: <defaults>
</compile_context>

<pallas_src>
import functools
import math

import jax
import jax.numpy as jnp
from jax.experimental import pallas as pl
from jax.experimental.pallas import tpu as pltpu  # noqa: F401  (TPU backend)

# ------------------------- small synthetic RoBERTa config -------------------------
VOCAB = 100
HIDDEN = 32
N_HEADS = 4
HEAD_DIM = HIDDEN // N_HEADS
N_LAYERS = 2
INTERMEDIATE = 64
OUTDIM = 16
LN_EPS = 1e-5          # RoBERTa body layer norm eps
RESIZER_EPS = 1e-12    # FeatureResizer LayerNorm eps
PAD_ID = 1


# ============================== in-kernel helpers ==================================
def _ln(x, g, b, eps):
    mu = jnp.mean(x, axis=-1, keepdims=True)
    var = jnp.mean(jnp.square(x - mu), axis=-1, keepdims=True)
    return (x - mu) * jax.lax.rsqrt(var + eps) * g + b


def _softmax_rows(s):
    s = s - jnp.max(s, axis=-1, keepdims=True)
    p = jnp.exp(s)
    # normalize with approx reciprocal (EUP slot) instead of a VALU divide
    return p * pl.reciprocal(jnp.sum(p, axis=-1, keepdims=True), approx=True)


# ================================ Pallas kernel ====================================
def _roberta_fused_kernel(x_ref, mask_ref,
                          embg_ref, embb_ref,
                          wqkv_ref, bqkv_ref, wo_ref, bo_ref,
                          ln1g_ref, ln1b_ref,
                          wf1_ref, bf1_ref, wf2_ref, bf2_ref,
                          ln2g_ref, ln2b_ref,
                          wp_ref, bp_ref,
                          wr_ref, br_ref, rg_ref, rb_ref,
                          out_ref, *, batch, seq, n_layers, n_heads, head_dim,
                          ln_eps, resizer_eps):
    """Fully fused RoBERTa body + pooler + FeatureResizer. Activations stay (B*S, HIDDEN)."""
    hidden = n_heads * head_dim
    scale = 1.0 / math.sqrt(head_dim)

    mask = mask_ref[...]                                             # (B, S) additive 0/-1e9
    h = _ln(x_ref[...], embg_ref[...], embb_ref[...], ln_eps)        # embedding LayerNorm

    for l in range(n_layers):
        x = h
        # fused QKV projection: one MXU matmul with (H, 3H) weight for layer l
        qkv = jnp.dot(x, wqkv_ref[l], preferred_element_type=jnp.float32) + bqkv_ref[l]
        q = qkv[:, 0 * hidden:1 * hidden]
        k = qkv[:, 1 * hidden:2 * hidden]
        v = qkv[:, 2 * hidden:3 * hidden]

        # per-(batch, head) attention; head split via static lane slices (no HBM transposes)
        batch_rows = []
        for b in range(batch):
            r0, r1 = b * seq, (b + 1) * seq
            qb, kb, vb = q[r0:r1], k[r0:r1], v[r0:r1]
            mb = mask[b:b + 1, :]                                    # (1, S) broadcast
            head_outs = []
            for hh in range(n_heads):
                c0, c1 = hh * head_dim, (hh + 1) * head_dim
                qh, kh, vh = qb[:, c0:c1], kb[:, c0:c1], vb[:, c0:c1]
                s = jnp.dot(qh, kh.T, preferred_element_type=jnp.float32) * scale + mb
                p = _softmax_rows(s)
                head_outs.append(jnp.dot(p, vh, preferred_element_type=jnp.float32))
            batch_rows.append(jnp.concatenate(head_outs, axis=-1))   # (S, H)
        ctx = jnp.concatenate(batch_rows, axis=0)                     # (B*S, H)

        attn_out = jnp.dot(ctx, wo_ref[l], preferred_element_type=jnp.float32) + bo_ref[l]
        h1 = _ln(x + attn_out, ln1g_ref[l], ln1b_ref[l], ln_eps)

        f = jnp.dot(h1, wf1_ref[l], preferred_element_type=jnp.float32) + bf1_ref[l]
        f = jax.nn.gelu(f, approximate=True)
        f = jnp.dot(f, wf2_ref[l], preferred_element_type=jnp.float32) + bf2_ref[l]
        h = _ln(h1 + f, ln2g_ref[l], ln2b_ref[l], ln_eps)

    # pooler: tanh linear on the CLS row (token 0) of each sequence
    cls = jnp.concatenate([h[b * seq:b * seq + 1, :] for b in range(batch)], axis=0)  # (B, H)
    pooled = jnp.tanh(
        jnp.dot(cls, wp_ref[...], preferred_element_type=jnp.float32) + bp_ref[...])

    # FeatureResizer on [all hidden rows ; pooled CLS] in one matmul + LayerNorm
    stacked = jnp.concatenate([h, pooled], axis=0)                    # (B*S + B, H)
    y = jnp.dot(stacked, wr_ref[...], preferred_element_type=jnp.float32) + br_ref[...]
    out_ref[...] = _ln(y, rg_ref[...], rb_ref[...], resizer_eps)


# ================================ Pallas wrapper ===================================
def _full_spec(shape):
    n = len(shape)
    return pl.BlockSpec(shape, lambda i, _n=n: (0,) * _n)


def pallas_roberta_forward_fused(x_emb, add_mask, params, *, batch, seq):
    M, H = x_emb.shape
    OUT = params["resizer"]["w"].shape[1]
    st = params["stacked"]
    kernel = functools.partial(
        _roberta_fused_kernel, batch=batch, seq=seq, n_layers=N_LAYERS,
        n_heads=N_HEADS, head_dim=HEAD_DIM, ln_eps=LN_EPS, resizer_eps=RESIZER_EPS)
    args = [
        x_emb, add_mask,
        params["emb_ln_g"].reshape(1, H), params["emb_ln_b"].reshape(1, H),
        st["wqkv"], st["bqkv"], st["wo"], st["bo"],
        st["ln1_g"], st["ln1_b"],
        st["wf1"], st["bf1"], st["wf2"], st["bf2"],
        st["ln2_g"], st["ln2_b"],
        params["pooler"]["w"], params["pooler"]["b"].reshape(1, H),
        params["resizer"]["w"], params["resizer"]["b"].reshape(1, OUT),
        params["resizer"]["ln_g"].reshape(1, OUT), params["resizer"]["ln_b"].reshape(1, OUT),
    ]
    return pl.pallas_call(
        kernel,
        grid=(1,),
        in_specs=[_full_spec(a.shape) for a in args],
        out_specs=_full_spec((M + batch, OUT)),
        out_shape=jax.ShapeDtypeStruct((M + batch, OUT), jnp.float32),
    )(*args)


# ============================ parameter initialization =============================
def _dense(key, fan_in, fan_out):
    kw, _ = jax.random.split(key)
    w = 0.02 * jax.random.normal(kw, (fan_in, fan_out), jnp.float32)
    b = jnp.zeros((fan_out,), jnp.float32)
    return {"w": w, "b": b}


def init_params(key, max_seq):
    keys = jax.random.split(key, 8 + 8 * N_LAYERS)
    ki = iter(keys)
    params = {
        "word_emb": 0.02 * jax.random.normal(next(ki), (VOCAB, HIDDEN), jnp.float32),
        "pos_emb": 0.02 * jax.random.normal(next(ki), (max_seq + 2, HIDDEN), jnp.float32),
        "type_emb": 0.02 * jax.random.normal(next(ki), (1, HIDDEN), jnp.float32),
        "emb_ln_g": jnp.ones((HIDDEN,), jnp.float32),
        "emb_ln_b": jnp.zeros((HIDDEN,), jnp.float32),
        "pooler": _dense(next(ki), HIDDEN, HIDDEN),
        "resizer": {
            **_dense(next(ki), HIDDEN, OUTDIM),
            "ln_g": jnp.ones((OUTDIM,), jnp.float32),
            "ln_b": jnp.zeros((OUTDIM,), jnp.float32),
        },
    }
    names = ("wqkv", "bqkv", "wo", "bo", "ln1_g", "ln1_b",
             "wf1", "bf1", "wf2", "bf2", "ln2_g", "ln2_b")
    lists = {n: [] for n in names}
    for _ in range(N_LAYERS):
        q = _dense(next(ki), HIDDEN, HIDDEN)
        k = _dense(next(ki), HIDDEN, HIDDEN)
        v = _dense(next(ki), HIDDEN, HIDDEN)
        o = _dense(next(ki), HIDDEN, HIDDEN)
        f1 = _dense(next(ki), HIDDEN, INTERMEDIATE)
        f2 = _dense(next(ki), INTERMEDIATE, HIDDEN)
        lists["wqkv"].append(jnp.concatenate([q["w"], k["w"], v["w"]], axis=1))     # (H, 3H)
        lists["bqkv"].append(jnp.concatenate([q["b"], k["b"], v["b"]]).reshape(1, 3 * HIDDEN))
        lists["wo"].append(o["w"])
        lists["bo"].append(o["b"].reshape(1, HIDDEN))
        lists["ln1_g"].append(jnp.ones((1, HIDDEN), jnp.float32))
        lists["ln1_b"].append(jnp.zeros((1, HIDDEN), jnp.float32))
        lists["wf1"].append(f1["w"])
        lists["bf1"].append(f1["b"].reshape(1, INTERMEDIATE))
        lists["wf2"].append(f2["w"])
        lists["bf2"].append(f2["b"].reshape(1, HIDDEN))
        lists["ln2_g"].append(jnp.ones((1, HIDDEN), jnp.float32))
        lists["ln2_b"].append(jnp.zeros((1, HIDDEN), jnp.float32))
    # stacked (leading layer axis) so the fused kernel indexes layer l with a static slice
    params["stacked"] = {n: jnp.stack(v, axis=0) for n, v in lists.items()}
    return params


# ================================ model forward ====================================
def roberta_forward(params, input_ids, attention_mask):
    """Mirrors Roberta.forward (tokenizer replaced by explicit ids/mask inputs)."""
    B, S = input_ids.shape

    # --- embeddings (gathers are glue; everything downstream is one fused Pallas kernel) ---
    # RoBERTa create_position_ids_from_input_ids: padded tokens keep padding_idx.
    mask_int = (input_ids != PAD_ID).astype(jnp.int32)
    position_ids = jnp.cumsum(mask_int, axis=1) * mask_int + PAD_ID
    emb = (params["word_emb"][input_ids]
           + params["pos_emb"][position_ids]
           + params["type_emb"][0][None, None, :])
    x_emb = emb.reshape(B * S, HIDDEN)

    # additive attention mask, (B, S): 0 where valid, -1e9 where padded.
    add_mask = (1.0 - attention_mask.astype(jnp.float32)) * -1e9

    # ONE fused kernel: emb-LN -> N_LAYERS encoder layers -> pooler -> FeatureResizer
    y = pallas_roberta_forward_fused(x_emb, add_mask, params, batch=B, seq=S)
    mem_resized_flat = y[:B * S]                                     # resized last_hidden rows
    text_cls_resized = y[B * S:]                                     # resized pooled CLS (B, OUT)

    # text_memory = last_hidden_state.transpose(0, 1) -> (S, B, H); resizer is row-wise,
    # so transpose the small resized result instead.
    text_memory_resized = mem_resized_flat.reshape(B, S, OUTDIM).transpose(1, 0, 2)

    # text_attention_mask = tokenized.attention_mask.ne(1).bool() -> True where padded
    text_attention_mask = attention_mask != 1

    tokenized = {"input_ids": input_ids, "attention_mask": attention_mask}
    return (text_attention_mask, text_memory_resized, tokenized), text_cls_resized


# ===================================== main =========================================
if __name__ == "__main__":
    key = jax.random.PRNGKey(0)
    B, S = 2, 8

    params = init_params(key, max_seq=S)

    kid = jax.random.fold_in(key, 999)
    input_ids = jax.random.randint(kid, (B, S), 2, VOCAB, dtype=jnp.int32)
    attention_mask = jnp.ones((B, S), jnp.int32).at[1, 5:].set(0)  # 2nd seq padded
    input_ids = jnp.where(attention_mask == 1, input_ids, PAD_ID)

    (text_attention_mask, text_memory_resized, tokenized), text_cls_resized = \
        roberta_forward(params, input_ids, attention_mask)

    jax.block_until_ready((text_attention_mask, text_memory_resized, text_cls_resized))

    assert text_attention_mask.shape == (B, S) and text_attention_mask.dtype == jnp.bool_
    assert text_memory_resized.shape == (S, B, OUTDIM)
    assert text_cls_resized.shape == (B, OUTDIM)
    print("KERNEL_OK")
</pallas_src>

<mosaic_0001>
module attributes {stable_mosaic.version = 11 : i64} {
  func.func @_roberta_fused_kernel(%arg0: i32, %arg1: memref<16x32xf32, #tpu.memory_space<vmem>>, %arg2: memref<2x8xf32, #tpu.memory_space<vmem>>, %arg3: memref<1x32xf32, #tpu.memory_space<vmem>>, %arg4: memref<1x32xf32, #tpu.memory_space<vmem>>, %arg5: memref<2x32x96xf32, #tpu.memory_space<vmem>>, %arg6: memref<2x1x96xf32, #tpu.memory_space<vmem>>, %arg7: memref<2x32x32xf32, #tpu.memory_space<vmem>>, %arg8: memref<2x1x32xf32, #tpu.memory_space<vmem>>, %arg9: memref<2x1x32xf32, #tpu.memory_space<vmem>>, %arg10: memref<2x1x32xf32, #tpu.memory_space<vmem>>, %arg11: memref<2x32x64xf32, #tpu.memory_space<vmem>>, %arg12: memref<2x1x64xf32, #tpu.memory_space<vmem>>, %arg13: memref<2x64x32xf32, #tpu.memory_space<vmem>>, %arg14: memref<2x1x32xf32, #tpu.memory_space<vmem>>, %arg15: memref<2x1x32xf32, #tpu.memory_space<vmem>>, %arg16: memref<2x1x32xf32, #tpu.memory_space<vmem>>, %arg17: memref<32x32xf32, #tpu.memory_space<vmem>>, %arg18: memref<1x32xf32, #tpu.memory_space<vmem>>, %arg19: memref<32x16xf32, #tpu.memory_space<vmem>>, %arg20: memref<1x16xf32, #tpu.memory_space<vmem>>, %arg21: memref<1x16xf32, #tpu.memory_space<vmem>>, %arg22: memref<1x16xf32, #tpu.memory_space<vmem>>, %arg23: memref<18x16xf32, #tpu.memory_space<vmem>>) attributes {dimension_semantics = [#tpu.dimension_semantics<arbitrary>], iteration_bounds = array<i64: 1>, scalar_prefetch = 0 : i64, scratch_operands = 0 : i64, tpu.core_type = #tpu.core_type<tc>, window_params = [{pipeline_mode = #tpu.pipeline_mode<synchronous>, transform_indices = @transform_0, window_bounds = array<i64: 16, 32>}, {pipeline_mode = #tpu.pipeline_mode<synchronous>, transform_indices = @transform_1, window_bounds = array<i64: 2, 8>}, {pipeline_mode = #tpu.pipeline_mode<synchronous>, transform_indices = @transform_2, window_bounds = array<i64: 1, 32>}, {pipeline_mode = #tpu.pipeline_mode<synchronous>, transform_indices = @transform_3, window_bounds = array<i64: 1, 32>}, {pipeline_mode = #tpu.pipeline_mode<synchronous>, transform_indices = @transform_4, window_bounds = array<i64: 2, 32, 96>}, {pipeline_mode = #tpu.pipeline_mode<synchronous>, transform_indices = @transform_5, window_bounds = array<i64: 2, 1, 96>}, {pipeline_mode = #tpu.pipeline_mode<synchronous>, transform_indices = @transform_6, window_bounds = array<i64: 2, 32, 32>}, {pipeline_mode = #tpu.pipeline_mode<synchronous>, transform_indices = @transform_7, window_bounds = array<i64: 2, 1, 32>}, {pipeline_mode = #tpu.pipeline_mode<synchronous>, transform_indices = @transform_8, window_bounds = array<i64: 2, 1, 32>}, {pipeline_mode = #tpu.pipeline_mode<synchronous>, transform_indices = @transform_9, window_bounds = array<i64: 2, 1, 32>}, {pipeline_mode = #tpu.pipeline_mode<synchronous>, transform_indices = @transform_10, window_bounds = array<i64: 2, 32, 64>}, {pipeline_mode = #tpu.pipeline_mode<synchronous>, transform_indices = @transform_11, window_bounds = array<i64: 2, 1, 64>}, {pipeline_mode = #tpu.pipeline_mode<synchronous>, transform_indices = @transform_12, window_bounds = array<i64: 2, 64, 32>}, {pipeline_mode = #tpu.pipeline_mode<synchronous>, transform_indices = @transform_13, window_bounds = array<i64: 2, 1, 32>}, {pipeline_mode = #tpu.pipeline_mode<synchronous>, transform_indices = @transform_14, window_bounds = array<i64: 2, 1, 32>}, {pipeline_mode = #tpu.pipeline_mode<synchronous>, transform_indices = @transform_15, window_bounds = array<i64: 2, 1, 32>}, {pipeline_mode = #tpu.pipeline_mode<synchronous>, transform_indices = @transform_16, window_bounds = array<i64: 32, 32>}, {pipeline_mode = #tpu.pipeline_mode<synchronous>, transform_indices = @transform_17, window_bounds = array<i64: 1, 32>}, {pipeline_mode = #tpu.pipeline_mode<synchronous>, transform_indices = @transform_18, window_bounds = array<i64: 32, 16>}, {pipeline_mode = #tpu.pipeline_mode<synchronous>, transform_indices = @transform_19, window_bounds = array<i64: 1, 16>}, {pipeline_mode = #tpu.pipeline_mode<synchronous>, transform_indices = @transform_20, window_bounds = array<i64: 1, 16>}, {pipeline_mode = #tpu.pipeline_mode<synchronous>, transform_indices = @transform_21, window_bounds = array<i64: 1, 16>}, {pipeline_mode = #tpu.pipeline_mode<synchronous>, transform_indices = @transform_22, window_bounds = array<i64: 18, 16>}]} {
    %c0 = arith.constant 0 : index
    %c0_0 = arith.constant 0 : index
    %0 = vector.load %arg2[%c0, %c0_0] : memref<2x8xf32, #tpu.memory_space<vmem>>, vector<2x8xf32>
    %c0_1 = arith.constant 0 : index
    %c0_2 = arith.constant 0 : index
    %1 = vector.load %arg1[%c0_1, %c0_2] : memref<16x32xf32, #tpu.memory_space<vmem>>, vector<16x32xf32>
    %c0_3 = arith.constant 0 : index
    %c0_4 = arith.constant 0 : index
    %2 = vector.load %arg3[%c0_3, %c0_4] : memref<1x32xf32, #tpu.memory_space<vmem>>, vector<1x32xf32>
    %c0_5 = arith.constant 0 : index
    %c0_6 = arith.constant 0 : index
    %3 = vector.load %arg4[%c0_5, %c0_6] : memref<1x32xf32, #tpu.memory_space<vmem>>, vector<1x32xf32>
    %cst = arith.constant dense<0.000000e+00> : vector<16xf32>
    %4 = vector.multi_reduction <add>, %1, %cst [1] : vector<16x32xf32> to vector<16xf32>
    %5 = vector.shape_cast %4 : vector<16xf32> to vector<16x1xf32>
    %cst_7 = arith.constant 3.200000e+01 : f32
    %6 = vector.broadcast %cst_7 : f32 to vector<16x1xf32>
    %7 = arith.divf %5, %6 : vector<16x1xf32>
    %8 = vector.broadcast %7 : vector<16x1xf32> to vector<16x32xf32>
    %9 = arith.subf %1, %8 : vector<16x32xf32>
    %10 = arith.mulf %9, %9 : vector<16x32xf32>
    %cst_8 = arith.constant dense<0.000000e+00> : vector<16xf32>
    %11 = vector.multi_reduction <add>, %10, %cst_8 [1] : vector<16x32xf32> to vector<16xf32>
    %12 = vector.shape_cast %11 : vector<16xf32> to vector<16x1xf32>
    %cst_9 = arith.constant 3.200000e+01 : f32
    %13 = vector.broadcast %cst_9 : f32 to vector<16x1xf32>
    %14 = arith.divf %12, %13 : vector<16x1xf32>
    %15 = vector.broadcast %7 : vector<16x1xf32> to vector<16x32xf32>
    %16 = arith.subf %1, %15 : vector<16x32xf32>
    %cst_10 = arith.constant 9.99999974E-6 : f32
    %17 = vector.broadcast %cst_10 : f32 to vector<16x1xf32>
    %18 = arith.addf %14, %17 : vector<16x1xf32>
    %19 = math.rsqrt %18 : vector<16x1xf32>
    %20 = vector.broadcast %19 : vector<16x1xf32> to vector<16x32xf32>
    %21 = arith.mulf %16, %20 : vector<16x32xf32>
    %22 = vector.broadcast %2 : vector<1x32xf32> to vector<16x32xf32>
    %23 = arith.mulf %21, %22 : vector<16x32xf32>
    %24 = vector.broadcast %3 : vector<1x32xf32> to vector<16x32xf32>
    %25 = arith.addf %23, %24 : vector<16x32xf32>
    %c0_11 = arith.constant 0 : index
    %c0_12 = arith.constant 0 : index
    %c0_13 = arith.constant 0 : index
    %26 = vector.load %arg5[%c0_11, %c0_12, %c0_13] : memref<2x32x96xf32, #tpu.memory_space<vmem>>, vector<1x32x96xf32>
    %27 = vector.shape_cast %26 : vector<1x32x96xf32> to vector<32x96xf32>
    %cst_14 = arith.constant dense<0.000000e+00> : vector<16x96xf32>
    %28 = tpu.matmul %25, %27, %cst_14 {dimension_numbers = #tpu.dot_dimension_numbers<[1], [0], [0], [1], [0, 0, 1, 1], [], []>} : vector<16x32xf32>, vector<32x96xf32>, vector<16x96xf32> -> vector<16x96xf32>
    %c0_15 = arith.constant 0 : index
    %c0_16 = arith.constant 0 : index
    %c0_17 = arith.constant 0 : index
    %29 = vector.load %arg6[%c0_15, %c0_16, %c0_17] : memref<2x1x96xf32, #tpu.memory_space<vmem>>, vector<1x1x96xf32>
    %30 = vector.shape_cast %29 : vector<1x1x96xf32> to vector<1x96xf32>
    %31 = vector.broadcast %30 : vector<1x96xf32> to vector<16x96xf32>
    %32 = arith.addf %28, %31 : vector<16x96xf32>
    %33 = vector.extract_strided_slice %32 {offsets = [0, 0], sizes = [16, 32], strides = [1, 1]} : vector<16x96xf32> to vector<16x32xf32>
    %34 = vector.extract_strided_slice %32 {offsets = [0, 32], sizes = [16, 32], strides = [1, 1]} : vector<16x96xf32> to vector<16x32xf32>
    %35 = vector.extract_strided_slice %32 {offsets = [0, 64], sizes = [16, 32], strides = [1, 1]} : vector<16x96xf32> to vector<16x32xf32>
    %36 = vector.extract_strided_slice %33 {offsets = [0, 0], sizes = [8, 32], strides = [1, 1]} : vector<16x32xf32> to vector<8x32xf32>
    %37 = vector.extract_strided_slice %34 {offsets = [0, 0], sizes = [8, 32], strides = [1, 1]} : vector<16x32xf32> to vector<8x32xf32>
    %38 = vector.extract_strided_slice %35 {offsets = [0, 0], sizes = [8, 32], strides = [1, 1]} : vector<16x32xf32> to vector<8x32xf32>
    %39 = vector.extract_strided_slice %0 {offsets = [0, 0], sizes = [1, 8], strides = [1, 1]} : vector<2x8xf32> to vector<1x8xf32>
    %40 = vector.extract_strided_slice %36 {offsets = [0, 0], sizes = [8, 8], strides = [1, 1]} : vector<8x32xf32> to vector<8x8xf32>
    %41 = vector.extract_strided_slice %37 {offsets = [0, 0], sizes = [8, 8], strides = [1, 1]} : vector<8x32xf32> to vector<8x8xf32>
    %42 = vector.extract_strided_slice %38 {offsets = [0, 0], sizes = [8, 8], strides = [1, 1]} : vector<8x32xf32> to vector<8x8xf32>
    %43 = tpu.transpose %41, [1, 0] : vector<8x8xf32> -> vector<8x8xf32>
    %cst_18 = arith.constant dense<0.000000e+00> : vector<8x8xf32>
    %44 = tpu.matmul %40, %43, %cst_18 {dimension_numbers = #tpu.dot_dimension_numbers<[1], [0], [0], [1], [0, 0, 1, 1], [], []>} : vector<8x8xf32>, vector<8x8xf32>, vector<8x8xf32> -> vector<8x8xf32>
    %cst_19 = arith.constant 0.353553385 : f32
    %45 = vector.broadcast %cst_19 : f32 to vector<8x8xf32>
    %46 = arith.mulf %44, %45 : vector<8x8xf32>
    %47 = vector.broadcast %39 : vector<1x8xf32> to vector<8x8xf32>
    %48 = arith.addf %46, %47 : vector<8x8xf32>
    %cst_20 = arith.constant dense<0xFF800000> : vector<8xf32>
    %49 = vector.multi_reduction <maximumf>, %48, %cst_20 [1] : vector<8x8xf32> to vector<8xf32>
    %50 = vector.shape_cast %49 : vector<8xf32> to vector<8x1xf32>
    %51 = vector.broadcast %50 : vector<8x1xf32> to vector<8x8xf32>
    %52 = arith.subf %48, %51 : vector<8x8xf32>
    %53 = math.exp %52 : vector<8x8xf32>
    %cst_21 = arith.constant dense<0.000000e+00> : vector<8xf32>
    %54 = vector.multi_reduction <add>, %53, %cst_21 [1] : vector<8x8xf32> to vector<8xf32>
    %55 = vector.shape_cast %54 : vector<8xf32> to vector<8x1xf32>
    %56 = tpu.reciprocal %55 {approx = true} : vector<8x1xf32> -> vector<8x1xf32>
    %57 = vector.broadcast %56 : vector<8x1xf32> to vector<8x8xf32>
    %58 = arith.mulf %53, %57 : vector<8x8xf32>
    %cst_22 = arith.constant dense<0.000000e+00> : vector<8x8xf32>
    %59 = tpu.matmul %58, %42, %cst_22 {dimension_numbers = #tpu.dot_dimension_numbers<[1], [0], [0], [1], [0, 0, 1, 1], [], []>} : vector<8x8xf32>, vector<8x8xf32>, vector<8x8xf32> -> vector<8x8xf32>
    %60 = vector.extract_strided_slice %36 {offsets = [0, 8], sizes = [8, 8], strides = [1, 1]} : vector<8x32xf32> to vector<8x8xf32>
    %61 = vector.extract_strided_slice %37 {offsets = [0, 8], sizes = [8, 8], strides = [1, 1]} : vector<8x32xf32> to vector<8x8xf32>
    %62 = vector.extract_strided_slice %38 {offsets = [0, 8], sizes = [8, 8], strides = [1, 1]} : vector<8x32xf32> to vector<8x8xf32>
    %63 = tpu.transpose %61, [1, 0] : vector<8x8xf32> -> vector<8x8xf32>
    %cst_23 = arith.constant dense<0.000000e+00> : vector<8x8xf32>
    %64 = tpu.matmul %60, %63, %cst_23 {dimension_numbers = #tpu.dot_dimension_numbers<[1], [0], [0], [1], [0, 0, 1, 1], [], []>} : vector<8x8xf32>, vector<8x8xf32>, vector<8x8xf32> -> vector<8x8xf32>
    %cst_24 = arith.constant 0.353553385 : f32
    %65 = vector.broadcast %cst_24 : f32 to vector<8x8xf32>
    %66 = arith.mulf %64, %65 : vector<8x8xf32>
    %67 = vector.broadcast %39 : vector<1x8xf32> to vector<8x8xf32>
    %68 = arith.addf %66, %67 : vector<8x8xf32>
    %cst_25 = arith.constant dense<0xFF800000> : vector<8xf32>
    %69 = vector.multi_reduction <maximumf>, %68, %cst_25 [1] : vector<8x8xf32> to vector<8xf32>
    %70 = vector.shape_cast %69 : vector<8xf32> to vector<8x1xf32>
    %71 = vector.broadcast %70 : vector<8x1xf32> to vector<8x8xf32>
    %72 = arith.subf %68, %71 : vector<8x8xf32>
    %73 = math.exp %72 : vector<8x8xf32>
    %cst_26 = arith.constant dense<0.000000e+00> : vector<8xf32>
    %74 = vector.multi_reduction <add>, %73, %cst_26 [1] : vector<8x8xf32> to vector<8xf32>
    %75 = vector.shape_cast %74 : vector<8xf32> to vector<8x1xf32>
    %76 = tpu.reciprocal %75 {approx = true} : vector<8x1xf32> -> vector<8x1xf32>
    %77 = vector.broadcast %76 : vector<8x1xf32> to vector<8x8xf32>
    %78 = arith.mulf %73, %77 : vector<8x8xf32>
    %cst_27 = arith.constant dense<0.000000e+00> : vector<8x8xf32>
    %79 = tpu.matmul %78, %62, %cst_27 {dimension_numbers = #tpu.dot_dimension_numbers<[1], [0], [0], [1], [0, 0, 1, 1], [], []>} : vector<8x8xf32>, vector<8x8xf32>, vector<8x8xf32> -> vector<8x8xf32>
    %80 = vector.extract_strided_slice %36 {offsets = [0, 16], sizes = [8, 8], strides = [1, 1]} : vector<8x32xf32> to vector<8x8xf32>
    %81 = vector.extract_strided_slice %37 {offsets = [0, 16], sizes = [8, 8], strides = [1, 1]} : vector<8x32xf32> to vector<8x8xf32>
    %82 = vector.extract_strided_slice %38 {offsets = [0, 16], sizes = [8, 8], strides = [1, 1]} : vector<8x32xf32> to vector<8x8xf32>
    %83 = tpu.transpose %81, [1, 0] : vector<8x8xf32> -> vector<8x8xf32>
    %cst_28 = arith.constant dense<0.000000e+00> : vector<8x8xf32>
    %84 = tpu.matmul %80, %83, %cst_28 {dimension_numbers = #tpu.dot_dimension_numbers<[1], [0], [0], [1], [0, 0, 1, 1], [], []>} : vector<8x8xf32>, vector<8x8xf32>, vector<8x8xf32> -> vector<8x8xf32>
    %cst_29 = arith.constant 0.353553385 : f32
    %85 = vector.broadcast %cst_29 : f32 to vector<8x8xf32>
    %86 = arith.mulf %84, %85 : vector<8x8xf32>
    %87 = vector.broadcast %39 : vector<1x8xf32> to vector<8x8xf32>
    %88 = arith.addf %86, %87 : vector<8x8xf32>
    %cst_30 = arith.constant dense<0xFF800000> : vector<8xf32>
    %89 = vector.multi_reduction <maximumf>, %88, %cst_30 [1] : vector<8x8xf32> to vector<8xf32>
    %90 = vector.shape_cast %89 : vector<8xf32> to vector<8x1xf32>
    %91 = vector.broadcast %90 : vector<8x1xf32> to vector<8x8xf32>
    %92 = arith.subf %88, %91 : vector<8x8xf32>
    %93 = math.exp %92 : vector<8x8xf32>
    %cst_31 = arith.constant dense<0.000000e+00> : vector<8xf32>
    %94 = vector.multi_reduction <add>, %93, %cst_31 [1] : vector<8x8xf32> to vector<8xf32>
    %95 = vector.shape_cast %94 : vector<8xf32> to vector<8x1xf32>
    %96 = tpu.reciprocal %95 {approx = true} : vector<8x1xf32> -> vector<8x1xf32>
    %97 = vector.broadcast %96 : vector<8x1xf32> to vector<8x8xf32>
    %98 = arith.mulf %93, %97 : vector<8x8xf32>
    %cst_32 = arith.constant dense<0.000000e+00> : vector<8x8xf32>
    %99 = tpu.matmul %98, %82, %cst_32 {dimension_numbers = #tpu.dot_dimension_numbers<[1], [0], [0], [1], [0, 0, 1, 1], [], []>} : vector<8x8xf32>, vector<8x8xf32>, vector<8x8xf32> -> vector<8x8xf32>
    %100 = vector.extract_strided_slice %36 {offsets = [0, 24], sizes = [8, 8], strides = [1, 1]} : vector<8x32xf32> to vector<8x8xf32>
    %101 = vector.extract_strided_slice %37 {offsets = [0, 24], sizes = [8, 8], strides = [1, 1]} : vector<8x32xf32> to vector<8x8xf32>
    %102 = vector.extract_strided_slice %38 {offsets = [0, 24], sizes = [8, 8], strides = [1, 1]} : vector<8x32xf32> to vector<8x8xf32>
    %103 = tpu.transpose %101, [1, 0] : vector<8x8xf32> -> vector<8x8xf32>
    %cst_33 = arith.constant dense<0.000000e+00> : vector<8x8xf32>
    %104 = tpu.matmul %100, %103, %cst_33 {dimension_numbers = #tpu.dot_dimension_numbers<[1], [0], [0], [1], [0, 0, 1, 1], [], []>} : vector<8x8xf32>, vector<8x8xf32>, vector<8x8xf32> -> vector<8x8xf32>
    %cst_34 = arith.constant 0.353553385 : f32
    %105 = vector.broadcast %cst_34 : f32 to vector<8x8xf32>
    %106 = arith.mulf %104, %105 : vector<8x8xf32>
    %107 = vector.broadcast %39 : vector<1x8xf32> to vector<8x8xf32>
    %108 = arith.addf %106, %107 : vector<8x8xf32>
    %cst_35 = arith.constant dense<0xFF800000> : vector<8xf32>
    %109 = vector.multi_reduction <maximumf>, %108, %cst_35 [1] : vector<8x8xf32> to vector<8xf32>
    %110 = vector.shape_cast %109 : vector<8xf32> to vector<8x1xf32>
    %111 = vector.broadcast %110 : vector<8x1xf32> to vector<8x8xf32>
    %112 = arith.subf %108, %111 : vector<8x8xf32>
    %113 = math.exp %112 : vector<8x8xf32>
    %cst_36 = arith.constant dense<0.000000e+00> : vector<8xf32>
    %114 = vector.multi_reduction <add>, %113, %cst_36 [1] : vector<8x8xf32> to vector<8xf32>
    %115 = vector.shape_cast %114 : vector<8xf32> to vector<8x1xf32>
    %116 = tpu.reciprocal %115 {approx = true} : vector<8x1xf32> -> vector<8x1xf32>
    %117 = vector.broadcast %116 : vector<8x1xf32> to vector<8x8xf32>
    %118 = arith.mulf %113, %117 : vector<8x8xf32>
    %cst_37 = arith.constant dense<0.000000e+00> : vector<8x8xf32>
    %119 = tpu.matmul %118, %102, %cst_37 {dimension_numbers = #tpu.dot_dimension_numbers<[1], [0], [0], [1], [0, 0, 1, 1], [], []>} : vector<8x8xf32>, vector<8x8xf32>, vector<8x8xf32> -> vector<8x8xf32>
    %120 = tpu.concatenate %59, %79, %99, %119 in 1 : vector<8x8xf32>, vector<8x8xf32>, vector<8x8xf32>, vector<8x8xf32> -> vector<8x32xf32>
    %121 = vector.extract_strided_slice %33 {offsets = [8, 0], sizes = [8, 32], strides = [1, 1]} : vector<16x32xf32> to vector<8x32xf32>
    %122 = vector.extract_strided_slice %34 {offsets = [8, 0], sizes = [8, 32], strides = [1, 1]} : vector<16x32xf32> to vector<8x32xf32>
    %123 = vector.extract_strided_slice %35 {offsets = [8, 0], sizes = [8, 32], strides = [1, 1]} : vector<16x32xf32> to vector<8x32xf32>
    %124 = vector.extract_strided_slice %0 {offsets = [1, 0], sizes = [1, 8], strides = [1, 1]} : vector<2x8xf32> to vector<1x8xf32>
    %125 = vector.extract_strided_slice %121 {offsets = [0, 0], sizes = [8, 8], strides = [1, 1]} : vector<8x32xf32> to vector<8x8xf32>
    %126 = vector.extract_strided_slice %122 {offsets = [0, 0], sizes = [8, 8], strides = [1, 1]} : vector<8x32xf32> to vector<8x8xf32>
    %127 = vector.extract_strided_slice %123 {offsets = [0, 0], sizes = [8, 8], strides = [1, 1]} : vector<8x32xf32> to vector<8x8xf32>
    %128 = tpu.transpose %126, [1, 0] : vector<8x8xf32> -> vector<8x8xf32>
    %cst_38 = arith.constant dense<0.000000e+00> : vector<8x8xf32>
    %129 = tpu.matmul %125, %128, %cst_38 {dimension_numbers = #tpu.dot_dimension_numbers<[1], [0], [0], [1], [0, 0, 1, 1], [], []>} : vector<8x8xf32>, vector<8x8xf32>, vector<8x8xf32> -> vector<8x8xf32>
    %cst_39 = arith.constant 0.353553385 : f32
    %130 = vector.broadcast %cst_39 : f32 to vector<8x8xf32>
    %131 = arith.mulf %129, %130 : vector<8x8xf32>
    %132 = vector.broadcast %124 : vector<1x8xf32> to vector<8x8xf32>
    %133 = arith.addf %131, %132 : vector<8x8xf32>
    %cst_40 = arith.constant dense<0xFF800000> : vector<8xf32>
    %134 = vector.multi_reduction <maximumf>, %133, %cst_40 [1] : vector<8x8xf32> to vector<8xf32>
    %135 = vector.shape_cast %134 : vector<8xf32> to vector<8x1xf32>
    %136 = vector.broadcast %135 : vector<8x1xf32> to vector<8x8xf32>
    %137 = arith.subf %133, %136 : vector<8x8xf32>
    %138 = math.exp %137 : vector<8x8xf32>
    %cst_41 = arith.constant dense<0.000000e+00> : vector<8xf32>
    %139 = vector.multi_reduction <add>, %138, %cst_41 [1] : vector<8x8xf32> to vector<8xf32>
    %140 = vector.shape_cast %139 : vector<8xf32> to vector<8x1xf32>
    %141 = tpu.reciprocal %140 {approx = true} : vector<8x1xf32> -> vector<8x1xf32>
    %142 = vector.broadcast %141 : vector<8x1xf32> to vector<8x8xf32>
    %143 = arith.mulf %138, %142 : vector<8x8xf32>
    %cst_42 = arith.constant dense<0.000000e+00> : vector<8x8xf32>
    %144 = tpu.matmul %143, %127, %cst_42 {dimension_numbers = #tpu.dot_dimension_numbers<[1], [0], [0], [1], [0, 0, 1, 1], [], []>} : vector<8x8xf32>, vector<8x8xf32>, vector<8x8xf32> -> vector<8x8xf32>
    %145 = vector.extract_strided_slice %121 {offsets = [0, 8], sizes = [8, 8], strides = [1, 1]} : vector<8x32xf32> to vector<8x8xf32>
    %146 = vector.extract_strided_slice %122 {offsets = [0, 8], sizes = [8, 8], strides = [1, 1]} : vector<8x32xf32> to vector<8x8xf32>
    %147 = vector.extract_strided_slice %123 {offsets = [0, 8], sizes = [8, 8], strides = [1, 1]} : vector<8x32xf32> to vector<8x8xf32>
    %148 = tpu.transpose %146, [1, 0] : vector<8x8xf32> -> vector<8x8xf32>
    %cst_43 = arith.constant dense<0.000000e+00> : vector<8x8xf32>
    %149 = tpu.matmul %145, %148, %cst_43 {dimension_numbers = #tpu.dot_dimension_numbers<[1], [0], [0], [1], [0, 0, 1, 1], [], []>} : vector<8x8xf32>, vector<8x8xf32>, vector<8x8xf32> -> vector<8x8xf32>
    %cst_44 = arith.constant 0.353553385 : f32
    %150 = vector.broadcast %cst_44 : f32 to vector<8x8xf32>
    %151 = arith.mulf %149, %150 : vector<8x8xf32>
    %152 = vector.broadcast %124 : vector<1x8xf32> to vector<8x8xf32>
    %153 = arith.addf %151, %152 : vector<8x8xf32>
    %cst_45 = arith.constant dense<0xFF800000> : vector<8xf32>
    %154 = vector.multi_reduction <maximumf>, %153, %cst_45 [1] : vector<8x8xf32> to vector<8xf32>
    %155 = vector.shape_cast %154 : vector<8xf32> to vector<8x1xf32>
    %156 = vector.broadcast %155 : vector<8x1xf32> to vector<8x8xf32>
    %157 = arith.subf %153, %156 : vector<8x8xf32>
    %158 = math.exp %157 : vector<8x8xf32>
    %cst_46 = arith.constant dense<0.000000e+00> : vector<8xf32>
    %159 = vector.multi_reduction <add>, %158, %cst_46 [1] : vector<8x8xf32> to vector<8xf32>
    %160 = vector.shape_cast %159 : vector<8xf32> to vector<8x1xf32>
    %161 = tpu.reciprocal %160 {approx = true} : vector<8x1xf32> -> vector<8x1xf32>
    %162 = vector.broadcast %161 : vector<8x1xf32> to vector<8x8xf32>
    %163 = arith.mulf %158, %162 : vector<8x8xf32>
    %cst_47 = arith.constant dense<0.000000e+00> : vector<8x8xf32>
    %164 = tpu.matmul %163, %147, %cst_47 {dimension_numbers = #tpu.dot_dimension_numbers<[1], [0], [0], [1], [0, 0, 1, 1], [], []>} : vector<8x8xf32>, vector<8x8xf32>, vector<8x8xf32> -> vector<8x8xf32>
    %165 = vector.extract_strided_slice %121 {offsets = [0, 16], sizes = [8, 8], strides = [1, 1]} : vector<8x32xf32> to vector<8x8xf32>
    %166 = vector.extract_strided_slice %122 {offsets = [0, 16], sizes = [8, 8], strides = [1, 1]} : vector<8x32xf32> to vector<8x8xf32>
    %167 = vector.extract_strided_slice %123 {offsets = [0, 16], sizes = [8, 8], strides = [1, 1]} : vector<8x32xf32> to vector<8x8xf32>
    %168 = tpu.transpose %166, [1, 0] : vector<8x8xf32> -> vector<8x8xf32>
    %cst_48 = arith.constant dense<0.000000e+00> : vector<8x8xf32>
    %169 = tpu.matmul %165, %168, %cst_48 {dimension_numbers = #tpu.dot_dimension_numbers<[1], [0], [0], [1], [0, 0, 1, 1], [], []>} : vector<8x8xf32>, vector<8x8xf32>, vector<8x8xf32> -> vector<8x8xf32>
    %cst_49 = arith.constant 0.353553385 : f32
    %170 = vector.broadcast %cst_49 : f32 to vector<8x8xf32>
    %171 = arith.mulf %169, %170 : vector<8x8xf32>
    %172 = vector.broadcast %124 : vector<1x8xf32> to vector<8x8xf32>
    %173 = arith.addf %171, %172 : vector<8x8xf32>
    %cst_50 = arith.constant dense<0xFF800000> : vector<8xf32>
    %174 = vector.multi_reduction <maximumf>, %173, %cst_50 [1] : vector<8x8xf32> to vector<8xf32>
    %175 = vector.shape_cast %174 : vector<8xf32> to vector<8x1xf32>
    %176 = vector.broadcast %175 : vector<8x1xf32> to vector<8x8xf32>
    %177 = arith.subf %173, %176 : vector<8x8xf32>
    %178 = math.exp %177 : vector<8x8xf32>
    %cst_51 = arith.constant dense<0.000000e+00> : vector<8xf32>
    %179 = vector.multi_reduction <add>, %178, %cst_51 [1] : vector<8x8xf32> to vector<8xf32>
    %180 = vector.shape_cast %179 : vector<8xf32> to vector<8x1xf32>
    %181 = tpu.reciprocal %180 {approx = true} : vector<8x1xf32> -> vector<8x1xf32>
    %182 = vector.broadcast %181 : vector<8x1xf32> to vector<8x8xf32>
    %183 = arith.mulf %178, %182 : vector<8x8xf32>
    %cst_52 = arith.constant dense<0.000000e+00> : vector<8x8xf32>
    %184 = tpu.matmul %183, %167, %cst_52 {dimension_numbers = #tpu.dot_dimension_numbers<[1], [0], [0], [1], [0, 0, 1, 1], [], []>} : vector<8x8xf32>, vector<8x8xf32>, vector<8x8xf32> -> vector<8x8xf32>
    %185 = vector.extract_strided_slice %121 {offsets = [0, 24], sizes = [8, 8], strides = [1, 1]} : vector<8x32xf32> to vector<8x8xf32>
    %186 = vector.extract_strided_slice %122 {offsets = [0, 24], sizes = [8, 8], strides = [1, 1]} : vector<8x32xf32> to vector<8x8xf32>
    %187 = vector.extract_strided_slice %123 {offsets = [0, 24], sizes = [8, 8], strides = [1, 1]} : vector<8x32xf32> to vector<8x8xf32>
    %188 = tpu.transpose %186, [1, 0] : vector<8x8xf32> -> vector<8x8xf32>
    %cst_53 = arith.constant dense<0.000000e+00> : vector<8x8xf32>
    %189 = tpu.matmul %185, %188, %cst_53 {dimension_numbers = #tpu.dot_dimension_numbers<[1], [0], [0], [1], [0, 0, 1, 1], [], []>} : vector<8x8xf32>, vector<8x8xf32>, vector<8x8xf32> -> vector<8x8xf32>
    %cst_54 = arith.constant 0.353553385 : f32
    %190 = vector.broadcast %cst_54 : f32 to vector<8x8xf32>
    %191 = arith.mulf %189, %190 : vector<8x8xf32>
    %192 = vector.broadcast %124 : vector<1x8xf32> to vector<8x8xf32>
    %193 = arith.addf %191, %192 : vector<8x8xf32>
    %cst_55 = arith.constant dense<0xFF800000> : vector<8xf32>
    %194 = vector.multi_reduction <maximumf>, %193, %cst_55 [1] : vector<8x8xf32> to vector<8xf32>
    %195 = vector.shape_cast %194 : vector<8xf32> to vector<8x1xf32>
    %196 = vector.broadcast %195 : vector<8x1xf32> to vector<8x8xf32>
    %197 = arith.subf %193, %196 : vector<8x8xf32>
    %198 = math.exp %197 : vector<8x8xf32>
    %cst_56 = arith.constant dense<0.000000e+00> : vector<8xf32>
    %199 = vector.multi_reduction <add>, %198, %cst_56 [1] : vector<8x8xf32> to vector<8xf32>
    %200 = vector.shape_cast %199 : vector<8xf32> to vector<8x1xf32>
    %201 = tpu.reciprocal %200 {approx = true} : vector<8x1xf32> -> vector<8x1xf32>
    %202 = vector.broadcast %201 : vector<8x1xf32> to vector<8x8xf32>
    %203 = arith.mulf %198, %202 : vector<8x8xf32>
    %cst_57 = arith.constant dense<0.000000e+00> : vector<8x8xf32>
    %204 = tpu.matmul %203, %187, %cst_57 {dimension_numbers = #tpu.dot_dimension_numbers<[1], [0], [0], [1], [0, 0, 1, 1], [], []>} : vector<8x8xf32>, vector<8x8xf32>, vector<8x8xf32> -> vector<8x8xf32>
    %205 = tpu.concatenate %144, %164, %184, %204 in 1 : vector<8x8xf32>, vector<8x8xf32>, vector<8x8xf32>, vector<8x8xf32> -> vector<8x32xf32>
    %206 = tpu.concatenate %120, %205 in 0 : vector<8x32xf32>, vector<8x32xf32> -> vector<16x32xf32>
    %c0_58 = arith.constant 0 : index
    %c0_59 = arith.constant 0 : index
    %c0_60 = arith.constant 0 : index
    %207 = vector.load %arg7[%c0_58, %c0_59, %c0_60] : memref<2x32x32xf32, #tpu.memory_space<vmem>>, vector<1x32x32xf32>
    %208 = vector.shape_cast %207 : vector<1x32x32xf32> to vector<32x32xf32>
    %cst_61 = arith.constant dense<0.000000e+00> : vector<16x32xf32>
    %209 = tpu.matmul %206, %208, %cst_61 {dimension_numbers = #tpu.dot_dimension_numbers<[1], [0], [0], [1], [0, 0, 1, 1], [], []>} : vector<16x32xf32>, vector<32x32xf32>, vector<16x32xf32> -> vector<16x32xf32>
    %c0_62 = arith.constant 0 : index
    %c0_63 = arith.constant 0 : index
    %c0_64 = arith.constant 0 : index
    %210 = vector.load %arg8[%c0_62, %c0_63, %c0_64] : memref<2x1x32xf32, #tpu.memory_space<vmem>>, vector<1x1x32xf32>
    %211 = vector.shape_cast %210 : vector<1x1x32xf32> to vector<1x32xf32>
    %212 = vector.broadcast %211 : vector<1x32xf32> to vector<16x32xf32>
    %213 = arith.addf %209, %212 : vector<16x32xf32>
    %214 = arith.addf %25, %213 : vector<16x32xf32>
    %c0_65 = arith.constant 0 : index
    %c0_66 = arith.constant 0 : index
    %c0_67 = arith.constant 0 : index
    %215 = vector.load %arg9[%c0_65, %c0_66, %c0_67] : memref<2x1x32xf32, #tpu.memory_space<vmem>>, vector<1x1x32xf32>
    %216 = vector.shape_cast %215 : vector<1x1x32xf32> to vector<1x32xf32>
    %c0_68 = arith.constant 0 : index
    %c0_69 = arith.constant 0 : index
    %c0_70 = arith.constant 0 : index
    %217 = vector.load %arg10[%c0_68, %c0_69, %c0_70] : memref<2x1x32xf32, #tpu.memory_space<vmem>>, vector<1x1x32xf32>
    %218 = vector.shape_cast %217 : vector<1x1x32xf32> to vector<1x32xf32>
    %cst_71 = arith.constant dense<0.000000e+00> : vector<16xf32>
    %219 = vector.multi_reduction <add>, %214, %cst_71 [1] : vector<16x32xf32> to vector<16xf32>
    %220 = vector.shape_cast %219 : vector<16xf32> to vector<16x1xf32>
    %cst_72 = arith.constant 3.200000e+01 : f32
    %221 = vector.broadcast %cst_72 : f32 to vector<16x1xf32>
    %222 = arith.divf %220, %221 : vector<16x1xf32>
    %223 = vector.broadcast %222 : vector<16x1xf32> to vector<16x32xf32>
    %224 = arith.subf %214, %223 : vector<16x32xf32>
    %225 = arith.mulf %224, %224 : vector<16x32xf32>
    %cst_73 = arith.constant dense<0.000000e+00> : vector<16xf32>
    %226 = vector.multi_reduction <add>, %225, %cst_73 [1] : vector<16x32xf32> to vector<16xf32>
    %227 = vector.shape_cast %226 : vector<16xf32> to vector<16x1xf32>
    %cst_74 = arith.constant 3.200000e+01 : f32
    %228 = vector.broadcast %cst_74 : f32 to vector<16x1xf32>
    %229 = arith.divf %227, %228 : vector<16x1xf32>
    %230 = vector.broadcast %222 : vector<16x1xf32> to vector<16x32xf32>
    %231 = arith.subf %214, %230 : vector<16x32xf32>
    %cst_75 = arith.constant 9.99999974E-6 : f32
    %232 = vector.broadcast %cst_75 : f32 to vector<16x1xf32>
    %233 = arith.addf %229, %232 : vector<16x1xf32>
    %234 = math.rsqrt %233 : vector<16x1xf32>
    %235 = vector.broadcast %234 : vector<16x1xf32> to vector<16x32xf32>
    %236 = arith.mulf %231, %235 : vector<16x32xf32>
    %237 = vector.broadcast %216 : vector<1x32xf32> to vector<16x32xf32>
    %238 = arith.mulf %236, %237 : vector<16x32xf32>
    %239 = vector.broadcast %218 : vector<1x32xf32> to vector<16x32xf32>
    %240 = arith.addf %238, %239 : vector<16x32xf32>
    %c0_76 = arith.constant 0 : index
    %c0_77 = arith.constant 0 : index
    %c0_78 = arith.constant 0 : index
    %241 = vector.load %arg11[%c0_76, %c0_77, %c0_78] : memref<2x32x64xf32, #tpu.memory_space<vmem>>, vector<1x32x64xf32>
    %242 = vector.shape_cast %241 : vector<1x32x64xf32> to vector<32x64xf32>
    %cst_79 = arith.constant dense<0.000000e+00> : vector<16x64xf32>
    %243 = tpu.matmul %240, %242, %cst_79 {dimension_numbers = #tpu.dot_dimension_numbers<[1], [0], [0], [1], [0, 0, 1, 1], [], []>} : vector<16x32xf32>, vector<32x64xf32>, vector<16x64xf32> -> vector<16x64xf32>
    %c0_80 = arith.constant 0 : index
    %c0_81 = arith.constant 0 : index
    %c0_82 = arith.constant 0 : index
    %244 = vector.load %arg12[%c0_80, %c0_81, %c0_82] : memref<2x1x64xf32, #tpu.memory_space<vmem>>, vector<1x1x64xf32>
    %245 = vector.shape_cast %244 : vector<1x1x64xf32> to vector<1x64xf32>
    %246 = vector.broadcast %245 : vector<1x64xf32> to vector<16x64xf32>
    %247 = arith.addf %243, %246 : vector<16x64xf32>
    %248 = arith.mulf %247, %247 : vector<16x64xf32>
    %249 = arith.mulf %247, %248 : vector<16x64xf32>
    %cst_83 = arith.constant 4.471500e-02 : f32
    %250 = vector.broadcast %cst_83 : f32 to vector<16x64xf32>
    %251 = arith.mulf %250, %249 : vector<16x64xf32>
    %252 = arith.addf %247, %251 : vector<16x64xf32>
    %cst_84 = arith.constant 0.797884583 : f32
    %253 = vector.broadcast %cst_84 : f32 to vector<16x64xf32>
    %254 = arith.mulf %253, %252 : vector<16x64xf32>
    %255 = math.tanh %254 : vector<16x64xf32>
    %cst_85 = arith.constant 1.000000e+00 : f32
    %256 = vector.broadcast %cst_85 : f32 to vector<16x64xf32>
    %257 = arith.addf %256, %255 : vector<16x64xf32>
    %cst_86 = arith.constant 5.000000e-01 : f32
    %258 = vector.broadcast %cst_86 : f32 to vector<16x64xf32>
    %259 = arith.mulf %258, %257 : vector<16x64xf32>
    %260 = arith.mulf %247, %259 : vector<16x64xf32>
    %c0_87 = arith.constant 0 : index
    %c0_88 = arith.constant 0 : index
    %c0_89 = arith.constant 0 : index
    %261 = vector.load %arg13[%c0_87, %c0_88, %c0_89] : memref<2x64x32xf32, #tpu.memory_space<vmem>>, vector<1x64x32xf32>
    %262 = vector.shape_cast %261 : vector<1x64x32xf32> to vector<64x32xf32>
    %cst_90 = arith.constant dense<0.000000e+00> : vector<16x32xf32>
    %263 = tpu.matmul %260, %262, %cst_90 {dimension_numbers = #tpu.dot_dimension_numbers<[1], [0], [0], [1], [0, 0, 1, 1], [], []>} : vector<16x64xf32>, vector<64x32xf32>, vector<16x32xf32> -> vector<16x32xf32>
    %c0_91 = arith.constant 0 : index
    %c0_92 = arith.constant 0 : index
    %c0_93 = arith.constant 0 : index
    %264 = vector.load %arg14[%c0_91, %c0_92, %c0_93] : memref<2x1x32xf32, #tpu.memory_space<vmem>>, vector<1x1x32xf32>
    %265 = vector.shape_cast %264 : vector<1x1x32xf32> to vector<1x32xf32>
    %266 = vector.broadcast %265 : vector<1x32xf32> to vector<16x32xf32>
    %267 = arith.addf %263, %266 : vector<16x32xf32>
    %268 = arith.addf %240, %267 : vector<16x32xf32>
    %c0_94 = arith.constant 0 : index
    %c0_95 = arith.constant 0 : index
    %c0_96 = arith.constant 0 : index
    %269 = vector.load %arg15[%c0_94, %c0_95, %c0_96] : memref<2x1x32xf32, #tpu.memory_space<vmem>>, vector<1x1x32xf32>
    %270 = vector.shape_cast %269 : vector<1x1x32xf32> to vector<1x32xf32>
    %c0_97 = arith.constant 0 : index
    %c0_98 = arith.constant 0 : index
    %c0_99 = arith.constant 0 : index
    %271 = vector.load %arg16[%c0_97, %c0_98, %c0_99] : memref<2x1x32xf32, #tpu.memory_space<vmem>>, vector<1x1x32xf32>
    %272 = vector.shape_cast %271 : vector<1x1x32xf32> to vector<1x32xf32>
    %cst_100 = arith.constant dense<0.000000e+00> : vector<16xf32>
    %273 = vector.multi_reduction <add>, %268, %cst_100 [1] : vector<16x32xf32> to vector<16xf32>
    %274 = vector.shape_cast %273 : vector<16xf32> to vector<16x1xf32>
    %cst_101 = arith.constant 3.200000e+01 : f32
    %275 = vector.broadcast %cst_101 : f32 to vector<16x1xf32>
    %276 = arith.divf %274, %275 : vector<16x1xf32>
    %277 = vector.broadcast %276 : vector<16x1xf32> to vector<16x32xf32>
    %278 = arith.subf %268, %277 : vector<16x32xf32>
    %279 = arith.mulf %278, %278 : vector<16x32xf32>
    %cst_102 = arith.constant dense<0.000000e+00> : vector<16xf32>
    %280 = vector.multi_reduction <add>, %279, %cst_102 [1] : vector<16x32xf32> to vector<16xf32>
    %281 = vector.shape_cast %280 : vector<16xf32> to vector<16x1xf32>
    %cst_103 = arith.constant 3.200000e+01 : f32
    %282 = vector.broadcast %cst_103 : f32 to vector<16x1xf32>
    %283 = arith.divf %281, %282 : vector<16x1xf32>
    %284 = vector.broadcast %276 : vector<16x1xf32> to vector<16x32xf32>
    %285 = arith.subf %268, %284 : vector<16x32xf32>
    %cst_104 = arith.constant 9.99999974E-6 : f32
    %286 = vector.broadcast %cst_104 : f32 to vector<16x1xf32>
    %287 = arith.addf %283, %286 : vector<16x1xf32>
    %288 = math.rsqrt %287 : vector<16x1xf32>
    %289 = vector.broadcast %288 : vector<16x1xf32> to vector<16x32xf32>
    %290 = arith.mulf %285, %289 : vector<16x32xf32>
    %291 = vector.broadcast %270 : vector<1x32xf32> to vector<16x32xf32>
    %292 = arith.mulf %290, %291 : vector<16x32xf32>
    %293 = vector.broadcast %272 : vector<1x32xf32> to vector<16x32xf32>
    %294 = arith.addf %292, %293 : vector<16x32xf32>
    %c1 = arith.constant 1 : index
    %c0_105 = arith.constant 0 : index
    %c0_106 = arith.constant 0 : index
    %295 = vector.load %arg5[%c1, %c0_105, %c0_106] : memref<2x32x96xf32, #tpu.memory_space<vmem>>, vector<1x32x96xf32>
    %296 = vector.shape_cast %295 : vector<1x32x96xf32> to vector<32x96xf32>
    %cst_107 = arith.constant dense<0.000000e+00> : vector<16x96xf32>
    %297 = tpu.matmul %294, %296, %cst_107 {dimension_numbers = #tpu.dot_dimension_numbers<[1], [0], [0], [1], [0, 0, 1, 1], [], []>} : vector<16x32xf32>, vector<32x96xf32>, vector<16x96xf32> -> vector<16x96xf32>
    %c1_108 = arith.constant 1 : index
    %c0_109 = arith.constant 0 : index
    %c0_110 = arith.constant 0 : index
    %298 = vector.load %arg6[%c1_108, %c0_109, %c0_110] : memref<2x1x96xf32, #tpu.memory_space<vmem>>, vector<1x1x96xf32>
    %299 = vector.shape_cast %298 : vector<1x1x96xf32> to vector<1x96xf32>
    %300 = vector.broadcast %299 : vector<1x96xf32> to vector<16x96xf32>
    %301 = arith.addf %297, %300 : vector<16x96xf32>
    %302 = vector.extract_strided_slice %301 {offsets = [0, 0], sizes = [16, 32], strides = [1, 1]} : vector<16x96xf32> to vector<16x32xf32>
    %303 = vector.extract_strided_slice %301 {offsets = [0, 32], sizes = [16, 32], strides = [1, 1]} : vector<16x96xf32> to vector<16x32xf32>
    %304 = vector.extract_strided_slice %301 {offsets = [0, 64], sizes = [16, 32], strides = [1, 1]} : vector<16x96xf32> to vector<16x32xf32>
    %305 = vector.extract_strided_slice %302 {offsets = [0, 0], sizes = [8, 32], strides = [1, 1]} : vector<16x32xf32> to vector<8x32xf32>
    %306 = vector.extract_strided_slice %303 {offsets = [0, 0], sizes = [8, 32], strides = [1, 1]} : vector<16x32xf32> to vector<8x32xf32>
    %307 = vector.extract_strided_slice %304 {offsets = [0, 0], sizes = [8, 32], strides = [1, 1]} : vector<16x32xf32> to vector<8x32xf32>
    %308 = vector.extract_strided_slice %0 {offsets = [0, 0], sizes = [1, 8], strides = [1, 1]} : vector<2x8xf32> to vector<1x8xf32>
    %309 = vector.extract_strided_slice %305 {offsets = [0, 0], sizes = [8, 8], strides = [1, 1]} : vector<8x32xf32> to vector<8x8xf32>
    %310 = vector.extract_strided_slice %306 {offsets = [0, 0], sizes = [8, 8], strides = [1, 1]} : vector<8x32xf32> to vector<8x8xf32>
    %311 = vector.extract_strided_slice %307 {offsets = [0, 0], sizes = [8, 8], strides = [1, 1]} : vector<8x32xf32> to vector<8x8xf32>
    %312 = tpu.transpose %310, [1, 0] : vector<8x8xf32> -> vector<8x8xf32>
    %cst_111 = arith.constant dense<0.000000e+00> : vector<8x8xf32>
    %313 = tpu.matmul %309, %312, %cst_111 {dimension_numbers = #tpu.dot_dimension_numbers<[1], [0], [0], [1], [0, 0, 1, 1], [], []>} : vector<8x8xf32>, vector<8x8xf32>, vector<8x8xf32> -> vector<8x8xf32>
    %cst_112 = arith.constant 0.353553385 : f32
    %314 = vector.broadcast %cst_112 : f32 to vector<8x8xf32>
    %315 = arith.mulf %313, %314 : vector<8x8xf32>
    %316 = vector.broadcast %308 : vector<1x8xf32> to vector<8x8xf32>
    %317 = arith.addf %315, %316 : vector<8x8xf32>
    %cst_113 = arith.constant dense<0xFF800000> : vector<8xf32>
    %318 = vector.multi_reduction <maximumf>, %317, %cst_113 [1] : vector<8x8xf32> to vector<8xf32>
    %319 = vector.shape_cast %318 : vector<8xf32> to vector<8x1xf32>
    %320 = vector.broadcast %319 : vector<8x1xf32> to vector<8x8xf32>
    %321 = arith.subf %317, %320 : vector<8x8xf32>
    %322 = math.exp %321 : vector<8x8xf32>
    %cst_114 = arith.constant dense<0.000000e+00> : vector<8xf32>
    %323 = vector.multi_reduction <add>, %322, %cst_114 [1] : vector<8x8xf32> to vector<8xf32>
    %324 = vector.shape_cast %323 : vector<8xf32> to vector<8x1xf32>
    %325 = tpu.reciprocal %324 {approx = true} : vector<8x1xf32> -> vector<8x1xf32>
    %326 = vector.broadcast %325 : vector<8x1xf32> to vector<8x8xf32>
    %327 = arith.mulf %322, %326 : vector<8x8xf32>
    %cst_115 = arith.constant dense<0.000000e+00> : vector<8x8xf32>
    %328 = tpu.matmul %327, %311, %cst_115 {dimension_numbers = #tpu.dot_dimension_numbers<[1], [0], [0], [1], [0, 0, 1, 1], [], []>} : vector<8x8xf32>, vector<8x8xf32>, vector<8x8xf32> -> vector<8x8xf32>
    %329 = vector.extract_strided_slice %305 {offsets = [0, 8], sizes = [8, 8], strides = [1, 1]} : vector<8x32xf32> to vector<8x8xf32>
    %330 = vector.extract_strided_slice %306 {offsets = [0, 8], sizes = [8, 8], strides = [1, 1]} : vector<8x32xf32> to vector<8x8xf32>
    %331 = vector.extract_strided_slice %307 {offsets = [0, 8], sizes = [8, 8], strides = [1, 1]} : vector<8x32xf32> to vector<8x8xf32>
    %332 = tpu.transpose %330, [1, 0] : vector<8x8xf32> -> vector<8x8xf32>
    %cst_116 = arith.constant dense<0.000000e+00> : vector<8x8xf32>
    %333 = tpu.matmul %329, %332, %cst_116 {dimension_numbers = #tpu.dot_dimension_numbers<[1], [0], [0], [1], [0, 0, 1, 1], [], []>} : vector<8x8xf32>, vector<8x8xf32>, vector<8x8xf32> -> vector<8x8xf32>
    %cst_117 = arith.constant 0.353553385 : f32
    %334 = vector.broadcast %cst_117 : f32 to vector<8x8xf32>
    %335 = arith.mulf %333, %334 : vector<8x8xf32>
    %336 = vector.broadcast %308 : vector<1x8xf32> to vector<8x8xf32>
    %337 = arith.addf %335, %336 : vector<8x8xf32>
    %cst_118 = arith.constant dense<0xFF800000> : vector<8xf32>
    %338 = vector.multi_reduction <maximumf>, %337, %cst_118 [1] : vector<8x8xf32> to vector<8xf32>
    %339 = vector.shape_cast %338 : vector<8xf32> to vector<8x1xf32>
    %340 = vector.broadcast %339 : vector<8x1xf32> to vector<8x8xf32>
    %341 = arith.subf %337, %340 : vector<8x8xf32>
    %342 = math.exp %341 : vector<8x8xf32>
    %cst_119 = arith.constant dense<0.000000e+00> : vector<8xf32>
    %343 = vector.multi_reduction <add>, %342, %cst_119 [1] : vector<8x8xf32> to vector<8xf32>
    %344 = vector.shape_cast %343 : vector<8xf32> to vector<8x1xf32>
    %345 = tpu.reciprocal %344 {approx = true} : vector<8x1xf32> -> vector<8x1xf32>
    %346 = vector.broadcast %345 : vector<8x1xf32> to vector<8x8xf32>
    %347 = arith.mulf %342, %346 : vector<8x8xf32>
    %cst_120 = arith.constant dense<0.000000e+00> : vector<8x8xf32>
    %348 = tpu.matmul %347, %331, %cst_120 {dimension_numbers = #tpu.dot_dimension_numbers<[1], [0], [0], [1], [0, 0, 1, 1], [], []>} : vector<8x8xf32>, vector<8x8xf32>, vector<8x8xf32> -> vector<8x8xf32>
    %349 = vector.extract_strided_slice %305 {offsets = [0, 16], sizes = [8, 8], strides = [1, 1]} : vector<8x32xf32> to vector<8x8xf32>
    %350 = vector.extract_strided_slice %306 {offsets = [0, 16], sizes = [8, 8], strides = [1, 1]} : vector<8x32xf32> to vector<8x8xf32>
    %351 = vector.extract_strided_slice %307 {offsets = [0, 16], sizes = [8, 8], strides = [1, 1]} : vector<8x32xf32> to vector<8x8xf32>
    %352 = tpu.transpose %350, [1, 0] : vector<8x8xf32> -> vector<8x8xf32>
    %cst_121 = arith.constant dense<0.000000e+00> : vector<8x8xf32>
    %353 = tpu.matmul %349, %352, %cst_121 {dimension_numbers = #tpu.dot_dimension_numbers<[1], [0], [0], [1], [0, 0, 1, 1], [], []>} : vector<8x8xf32>, vector<8x8xf32>, vector<8x8xf32> -> vector<8x8xf32>
    %cst_122 = arith.constant 0.353553385 : f32
    %354 = vector.broadcast %cst_122 : f32 to vector<8x8xf32>
    %355 = arith.mulf %353, %354 : vector<8x8xf32>
    %356 = vector.broadcast %308 : vector<1x8xf32> to vector<8x8xf32>
    %357 = arith.addf %355, %356 : vector<8x8xf32>
    %cst_123 = arith.constant dense<0xFF800000> : vector<8xf32>
    %358 = vector.multi_reduction <maximumf>, %357, %cst_123 [1] : vector<8x8xf32> to vector<8xf32>
    %359 = vector.shape_cast %358 : vector<8xf32> to vector<8x1xf32>
    %360 = vector.broadcast %359 : vector<8x1xf32> to vector<8x8xf32>
    %361 = arith.subf %357, %360 : vector<8x8xf32>
    %362 = math.exp %361 : vector<8x8xf32>
    %cst_124 = arith.constant dense<0.000000e+00> : vector<8xf32>
    %363 = vector.multi_reduction <add>, %362, %cst_124 [1] : vector<8x8xf32> to vector<8xf32>
    %364 = vector.shape_cast %363 : vector<8xf32> to vector<8x1xf32>
    %365 = tpu.reciprocal %364 {approx = true} : vector<8x1xf32> -> vector<8x1xf32>
    %366 = vector.broadcast %365 : vector<8x1xf32> to vector<8x8xf32>
    %367 = arith.mulf %362, %366 : vector<8x8xf32>
    %cst_125 = arith.constant dense<0.000000e+00> : vector<8x8xf32>
    %368 = tpu.matmul %367, %351, %cst_125 {dimension_numbers = #tpu.dot_dimension_numbers<[1], [0], [0], [1], [0, 0, 1, 1], [], []>} : vector<8x8xf32>, vector<8x8xf32>, vector<8x8xf32> -> vector<8x8xf32>
    %369 = vector.extract_strided_slice %305 {offsets = [0, 24], sizes = [8, 8], strides = [1, 1]} : vector<8x32xf32> to vector<8x8xf32>
    %370 = vector.extract_strided_slice %306 {offsets = [0, 24], sizes = [8, 8], strides = [1, 1]} : vector<8x32xf32> to vector<8x8xf32>
    %371 = vector.extract_strided_slice %307 {offsets = [0, 24], sizes = [8, 8], strides = [1, 1]} : vector<8x32xf32> to vector<8x8xf32>
    %372 = tpu.transpose %370, [1, 0] : vector<8x8xf32> -> vector<8x8xf32>
    %cst_126 = arith.constant dense<0.000000e+00> : vector<8x8xf32>
    %373 = tpu.matmul %369, %372, %cst_126 {dimension_numbers = #tpu.dot_dimension_numbers<[1], [0], [0], [1], [0, 0, 1, 1], [], []>} : vector<8x8xf32>, vector<8x8xf32>, vector<8x8xf32> -> vector<8x8xf32>
    %cst_127 = arith.constant 0.353553385 : f32
    %374 = vector.broadcast %cst_127 : f32 to vector<8x8xf32>
    %375 = arith.mulf %373, %374 : vector<8x8xf32>
    %376 = vector.broadcast %308 : vector<1x8xf32> to vector<8x8xf32>
    %377 = arith.addf %375, %376 : vector<8x8xf32>
    %cst_128 = arith.constant dense<0xFF800000> : vector<8xf32>
    %378 = vector.multi_reduction <maximumf>, %377, %cst_128 [1] : vector<8x8xf32> to vector<8xf32>
    %379 = vector.shape_cast %378 : vector<8xf32> to vector<8x1xf32>
    %380 = vector.broadcast %379 : vector<8x1xf32> to vector<8x8xf32>
    %381 = arith.subf %377, %380 : vector<8x8xf32>
    %382 = math.exp %381 : vector<8x8xf32>
    %cst_129 = arith.constant dense<0.000000e+00> : vector<8xf32>
    %383 = vector.multi_reduction <add>, %382, %cst_129 [1] : vector<8x8xf32> to vector<8xf32>
    %384 = vector.shape_cast %383 : vector<8xf32> to vector<8x1xf32>
    %385 = tpu.reciprocal %384 {approx = true} : vector<8x1xf32> -> vector<8x1xf32>
    %386 = vector.broadcast %385 : vector<8x1xf32> to vector<8x8xf32>
    %387 = arith.mulf %382, %386 : vector<8x8xf32>
    %cst_130 = arith.constant dense<0.000000e+00> : vector<8x8xf32>
    %388 = tpu.matmul %387, %371, %cst_130 {dimension_numbers = #tpu.dot_dimension_numbers<[1], [0], [0], [1], [0, 0, 1, 1], [], []>} : vector<8x8xf32>, vector<8x8xf32>, vector<8x8xf32> -> vector<8x8xf32>
    %389 = tpu.concatenate %328, %348, %368, %388 in 1 : vector<8x8xf32>, vector<8x8xf32>, vector<8x8xf32>, vector<8x8xf32> -> vector<8x32xf32>
    %390 = vector.extract_strided_slice %302 {offsets = [8, 0], sizes = [8, 32], strides = [1, 1]} : vector<16x32xf32> to vector<8x32xf32>
    %391 = vector.extract_strided_slice %303 {offsets = [8, 0], sizes = [8, 32], strides = [1, 1]} : vector<16x32xf32> to vector<8x32xf32>
    %392 = vector.extract_strided_slice %304 {offsets = [8, 0], sizes = [8, 32], strides = [1, 1]} : vector<16x32xf32> to vector<8x32xf32>
    %393 = vector.extract_strided_slice %0 {offsets = [1, 0], sizes = [1, 8], strides = [1, 1]} : vector<2x8xf32> to vector<1x8xf32>
    %394 = vector.extract_strided_slice %390 {offsets = [0, 0], sizes = [8, 8], strides = [1, 1]} : vector<8x32xf32> to vector<8x8xf32>
    %395 = vector.extract_strided_slice %391 {offsets = [0, 0], sizes = [8, 8], strides = [1, 1]} : vector<8x32xf32> to vector<8x8xf32>
    %396 = vector.extract_strided_slice %392 {offsets = [0, 0], sizes = [8, 8], strides = [1, 1]} : vector<8x32xf32> to vector<8x8xf32>
    %397 = tpu.transpose %395, [1, 0] : vector<8x8xf32> -> vector<8x8xf32>
    %cst_131 = arith.constant dense<0.000000e+00> : vector<8x8xf32>
    %398 = tpu.matmul %394, %397, %cst_131 {dimension_numbers = #tpu.dot_dimension_numbers<[1], [0], [0], [1], [0, 0, 1, 1], [], []>} : vector<8x8xf32>, vector<8x8xf32>, vector<8x8xf32> -> vector<8x8xf32>
    %cst_132 = arith.constant 0.353553385 : f32
    %399 = vector.broadcast %cst_132 : f32 to vector<8x8xf32>
    %400 = arith.mulf %398, %399 : vector<8x8xf32>
    %401 = vector.broadcast %393 : vector<1x8xf32> to vector<8x8xf32>
    %402 = arith.addf %400, %401 : vector<8x8xf32>
    %cst_133 = arith.constant dense<0xFF800000> : vector<8xf32>
    %403 = vector.multi_reduction <maximumf>, %402, %cst_133 [1] : vector<8x8xf32> to vector<8xf32>
    %404 = vector.shape_cast %403 : vector<8xf32> to vector<8x1xf32>
    %405 = vector.broadcast %404 : vector<8x1xf32> to vector<8x8xf32>
    %406 = arith.subf %402, %405 : vector<8x8xf32>
    %407 = math.exp %406 : vector<8x8xf32>
    %cst_134 = arith.constant dense<0.000000e+00> : vector<8xf32>
    %408 = vector.multi_reduction <add>, %407, %cst_134 [1] : vector<8x8xf32> to vector<8xf32>
    %409 = vector.shape_cast %408 : vector<8xf32> to vector<8x1xf32>
    %410 = tpu.reciprocal %409 {approx = true} : vector<8x1xf32> -> vector<8x1xf32>
    %411 = vector.broadcast %410 : vector<8x1xf32> to vector<8x8xf32>
    %412 = arith.mulf %407, %411 : vector<8x8xf32>
    %cst_135 = arith.constant dense<0.000000e+00> : vector<8x8xf32>
    %413 = tpu.matmul %412, %396, %cst_135 {dimension_numbers = #tpu.dot_dimension_numbers<[1], [0], [0], [1], [0, 0, 1, 1], [], []>} : vector<8x8xf32>, vector<8x8xf32>, vector<8x8xf32> -> vector<8x8xf32>
    %414 = vector.extract_strided_slice %390 {offsets = [0, 8], sizes = [8, 8], strides = [1, 1]} : vector<8x32xf32> to vector<8x8xf32>
    %415 = vector.extract_strided_slice %391 {offsets = [0, 8], sizes = [8, 8], strides = [1, 1]} : vector<8x32xf32> to vector<8x8xf32>
    %416 = vector.extract_strided_slice %392 {offsets = [0, 8], sizes = [8, 8], strides = [1, 1]} : vector<8x32xf32> to vector<8x8xf32>
    %417 = tpu.transpose %415, [1, 0] : vector<8x8xf32> -> vector<8x8xf32>
    %cst_136 = arith.constant dense<0.000000e+00> : vector<8x8xf32>
    %418 = tpu.matmul %414, %417, %cst_136 {dimension_numbers = #tpu.dot_dimension_numbers<[1], [0], [0], [1], [0, 0, 1, 1], [], []>} : vector<8x8xf32>, vector<8x8xf32>, vector<8x8xf32> -> vector<8x8xf32>
    %cst_137 = arith.constant 0.353553385 : f32
    %419 = vector.broadcast %cst_137 : f32 to vector<8x8xf32>
    %420 = arith.mulf %418, %419 : vector<8x8xf32>
    %421 = vector.broadcast %393 : vector<1x8xf32> to vector<8x8xf32>
    %422 = arith.addf %420, %421 : vector<8x8xf32>
    %cst_138 = arith.constant dense<0xFF800000> : vector<8xf32>
    %423 = vector.multi_reduction <maximumf>, %422, %cst_138 [1] : vector<8x8xf32> to vector<8xf32>
    %424 = vector.shape_cast %423 : vector<8xf32> to vector<8x1xf32>
    %425 = vector.broadcast %424 : vector<8x1xf32> to vector<8x8xf32>
    %426 = arith.subf %422, %425 : vector<8x8xf32>
    %427 = math.exp %426 : vector<8x8xf32>
    %cst_139 = arith.constant dense<0.000000e+00> : vector<8xf32>
    %428 = vector.multi_reduction <add>, %427, %cst_139 [1] : vector<8x8xf32> to vector<8xf32>
    %429 = vector.shape_cast %428 : vector<8xf32> to vector<8x1xf32>
    %430 = tpu.reciprocal %429 {approx = true} : vector<8x1xf32> -> vector<8x1xf32>
    %431 = vector.broadcast %430 : vector<8x1xf32> to vector<8x8xf32>
    %432 = arith.mulf %427, %431 : vector<8x8xf32>
    %cst_140 = arith.constant dense<0.000000e+00> : vector<8x8xf32>
    %433 = tpu.matmul %432, %416, %cst_140 {dimension_numbers = #tpu.dot_dimension_numbers<[1], [0], [0], [1], [0, 0, 1, 1], [], []>} : vector<8x8xf32>, vector<8x8xf32>, vector<8x8xf32> -> vector<8x8xf32>
    %434 = vector.extract_strided_slice %390 {offsets = [0, 16], sizes = [8, 8], strides = [1, 1]} : vector<8x32xf32> to vector<8x8xf32>
    %435 = vector.extract_strided_slice %391 {offsets = [0, 16], sizes = [8, 8], strides = [1, 1]} : vector<8x32xf32> to vector<8x8xf32>
    %436 = vector.extract_strided_slice %392 {offsets = [0, 16], sizes = [8, 8], strides = [1, 1]} : vector<8x32xf32> to vector<8x8xf32>
    %437 = tpu.transpose %435, [1, 0] : vector<8x8xf32> -> vector<8x8xf32>
    %cst_141 = arith.constant dense<0.000000e+00> : vector<8x8xf32>
    %438 = tpu.matmul %434, %437, %cst_141 {dimension_numbers = #tpu.dot_dimension_numbers<[1], [0], [0], [1], [0, 0, 1, 1], [], []>} : vector<8x8xf32>, vector<8x8xf32>, vector<8x8xf32> -> vector<8x8xf32>
    %cst_142 = arith.constant 0.353553385 : f32
    %439 = vector.broadcast %cst_142 : f32 to vector<8x8xf32>
    %440 = arith.mulf %438, %439 : vector<8x8xf32>
    %441 = vector.broadcast %393 : vector<1x8xf32> to vector<8x8xf32>
    %442 = arith.addf %440, %441 : vector<8x8xf32>
    %cst_143 = arith.constant dense<0xFF800000> : vector<8xf32>
    %443 = vector.multi_reduction <maximumf>, %442, %cst_143 [1] : vector<8x8xf32> to vector<8xf32>
    %444 = vector.shape_cast %443 : vector<8xf32> to vector<8x1xf32>
    %445 = vector.broadcast %444 : vector<8x1xf32> to vector<8x8xf32>
    %446 = arith.subf %442, %445 : vector<8x8xf32>
    %447 = math.exp %446 : vector<8x8xf32>
    %cst_144 = arith.constant dense<0.000000e+00> : vector<8xf32>
    %448 = vector.multi_reduction <add>, %447, %cst_144 [1] : vector<8x8xf32> to vector<8xf32>
    %449 = vector.shape_cast %448 : vector<8xf32> to vector<8x1xf32>
    %450 = tpu.reciprocal %449 {approx = true} : vector<8x1xf32> -> vector<8x1xf32>
    %451 = vector.broadcast %450 : vector<8x1xf32> to vector<8x8xf32>
    %452 = arith.mulf %447, %451 : vector<8x8xf32>
    %cst_145 = arith.constant dense<0.000000e+00> : vector<8x8xf32>
    %453 = tpu.matmul %452, %436, %cst_145 {dimension_numbers = #tpu.dot_dimension_numbers<[1], [0], [0], [1], [0, 0, 1, 1], [], []>} : vector<8x8xf32>, vector<8x8xf32>, vector<8x8xf32> -> vector<8x8xf32>
    %454 = vector.extract_strided_slice %390 {offsets = [0, 24], sizes = [8, 8], strides = [1, 1]} : vector<8x32xf32> to vector<8x8xf32>
    %455 = vector.extract_strided_slice %391 {offsets = [0, 24], sizes = [8, 8], strides = [1, 1]} : vector<8x32xf32> to vector<8x8xf32>
    %456 = vector.extract_strided_slice %392 {offsets = [0, 24], sizes = [8, 8], strides = [1, 1]} : vector<8x32xf32> to vector<8x8xf32>
    %457 = tpu.transpose %455, [1, 0] : vector<8x8xf32> -> vector<8x8xf32>
    %cst_146 = arith.constant dense<0.000000e+00> : vector<8x8xf32>
    %458 = tpu.matmul %454, %457, %cst_146 {dimension_numbers = #tpu.dot_dimension_numbers<[1], [0], [0], [1], [0, 0, 1, 1], [], []>} : vector<8x8xf32>, vector<8x8xf32>, vector<8x8xf32> -> vector<8x8xf32>
    %cst_147 = arith.constant 0.353553385 : f32
    %459 = vector.broadcast %cst_147 : f32 to vector<8x8xf32>
    %460 = arith.mulf %458, %459 : vector<8x8xf32>
    %461 = vector.broadcast %393 : vector<1x8xf32> to vector<8x8xf32>
    %462 = arith.addf %460, %461 : vector<8x8xf32>
    %cst_148 = arith.constant dense<0xFF800000> : vector<8xf32>
    %463 = vector.multi_reduction <maximumf>, %462, %cst_148 [1] : vector<8x8xf32> to vector<8xf32>
    %464 = vector.shape_cast %463 : vector<8xf32> to vector<8x1xf32>
    %465 = vector.broadcast %464 : vector<8x1xf32> to vector<8x8xf32>
    %466 = arith.subf %462, %465 : vector<8x8xf32>
    %467 = math.exp %466 : vector<8x8xf32>
    %cst_149 = arith.constant dense<0.000000e+00> : vector<8xf32>
    %468 = vector.multi_reduction <add>, %467, %cst_149 [1] : vector<8x8xf32> to vector<8xf32>
    %469 = vector.shape_cast %468 : vector<8xf32> to vector<8x1xf32>
    %470 = tpu.reciprocal %469 {approx = true} : vector<8x1xf32> -> vector<8x1xf32>
    %471 = vector.broadcast %470 : vector<8x1xf32> to vector<8x8xf32>
    %472 = arith.mulf %467, %471 : vector<8x8xf32>
    %cst_150 = arith.constant dense<0.000000e+00> : vector<8x8xf32>
    %473 = tpu.matmul %472, %456, %cst_150 {dimension_numbers = #tpu.dot_dimension_numbers<[1], [0], [0], [1], [0, 0, 1, 1], [], []>} : vector<8x8xf32>, vector<8x8xf32>, vector<8x8xf32> -> vector<8x8xf32>
    %474 = tpu.concatenate %413, %433, %453, %473 in 1 : vector<8x8xf32>, vector<8x8xf32>, vector<8x8xf32>, vector<8x8xf32> -> vector<8x32xf32>
    %475 = tpu.concatenate %389, %474 in 0 : vector<8x32xf32>, vector<8x32xf32> -> vector<16x32xf32>
    %c1_151 = arith.constant 1 : index
    %c0_152 = arith.constant 0 : index
    %c0_153 = arith.constant 0 : index
    %476 = vector.load %arg7[%c1_151, %c0_152, %c0_153] : memref<2x32x32xf32, #tpu.memory_space<vmem>>, vector<1x32x32xf32>
    %477 = vector.shape_cast %476 : vector<1x32x32xf32> to vector<32x32xf32>
    %cst_154 = arith.constant dense<0.000000e+00> : vector<16x32xf32>
    %478 = tpu.matmul %475, %477, %cst_154 {dimension_numbers = #tpu.dot_dimension_numbers<[1], [0], [0], [1], [0, 0, 1, 1], [], []>} : vector<16x32xf32>, vector<32x32xf32>, vector<16x32xf32> -> vector<16x32xf32>
    %c1_155 = arith.constant 1 : index
    %c0_156 = arith.constant 0 : index
    %c0_157 = arith.constant 0 : index
    %479 = vector.load %arg8[%c1_155, %c0_156, %c0_157] : memref<2x1x32xf32, #tpu.memory_space<vmem>>, vector<1x1x32xf32>
    %480 = vector.shape_cast %479 : vector<1x1x32xf32> to vector<1x32xf32>
    %481 = vector.broadcast %480 : vector<1x32xf32> to vector<16x32xf32>
    %482 = arith.addf %478, %481 : vector<16x32xf32>
    %483 = arith.addf %294, %482 : vector<16x32xf32>
    %c1_158 = arith.constant 1 : index
    %c0_159 = arith.constant 0 : index
    %c0_160 = arith.constant 0 : index
    %484 = vector.load %arg9[%c1_158, %c0_159, %c0_160] : memref<2x1x32xf32, #tpu.memory_space<vmem>>, vector<1x1x32xf32>
    %485 = vector.shape_cast %484 : vector<1x1x32xf32> to vector<1x32xf32>
    %c1_161 = arith.constant 1 : index
    %c0_162 = arith.constant 0 : index
    %c0_163 = arith.constant 0 : index
    %486 = vector.load %arg10[%c1_161, %c0_162, %c0_163] : memref<2x1x32xf32, #tpu.memory_space<vmem>>, vector<1x1x32xf32>
    %487 = vector.shape_cast %486 : vector<1x1x32xf32> to vector<1x32xf32>
    %cst_164 = arith.constant dense<0.000000e+00> : vector<16xf32>
    %488 = vector.multi_reduction <add>, %483, %cst_164 [1] : vector<16x32xf32> to vector<16xf32>
    %489 = vector.shape_cast %488 : vector<16xf32> to vector<16x1xf32>
    %cst_165 = arith.constant 3.200000e+01 : f32
    %490 = vector.broadcast %cst_165 : f32 to vector<16x1xf32>
    %491 = arith.divf %489, %490 : vector<16x1xf32>
    %492 = vector.broadcast %491 : vector<16x1xf32> to vector<16x32xf32>
    %493 = arith.subf %483, %492 : vector<16x32xf32>
    %494 = arith.mulf %493, %493 : vector<16x32xf32>
    %cst_166 = arith.constant dense<0.000000e+00> : vector<16xf32>
    %495 = vector.multi_reduction <add>, %494, %cst_166 [1] : vector<16x32xf32> to vector<16xf32>
    %496 = vector.shape_cast %495 : vector<16xf32> to vector<16x1xf32>
    %cst_167 = arith.constant 3.200000e+01 : f32
    %497 = vector.broadcast %cst_167 : f32 to vector<16x1xf32>
    %498 = arith.divf %496, %497 : vector<16x1xf32>
    %499 = vector.broadcast %491 : vector<16x1xf32> to vector<16x32xf32>
    %500 = arith.subf %483, %499 : vector<16x32xf32>
    %cst_168 = arith.constant 9.99999974E-6 : f32
    %501 = vector.broadcast %cst_168 : f32 to vector<16x1xf32>
    %502 = arith.addf %498, %501 : vector<16x1xf32>
    %503 = math.rsqrt %502 : vector<16x1xf32>
    %504 = vector.broadcast %503 : vector<16x1xf32> to vector<16x32xf32>
    %505 = arith.mulf %500, %504 : vector<16x32xf32>
    %506 = vector.broadcast %485 : vector<1x32xf32> to vector<16x32xf32>
    %507 = arith.mulf %505, %506 : vector<16x32xf32>
    %508 = vector.broadcast %487 : vector<1x32xf32> to vector<16x32xf32>
    %509 = arith.addf %507, %508 : vector<16x32xf32>
    %c1_169 = arith.constant 1 : index
    %c0_170 = arith.constant 0 : index
    %c0_171 = arith.constant 0 : index
    %510 = vector.load %arg11[%c1_169, %c0_170, %c0_171] : memref<2x32x64xf32, #tpu.memory_space<vmem>>, vector<1x32x64xf32>
    %511 = vector.shape_cast %510 : vector<1x32x64xf32> to vector<32x64xf32>
    %cst_172 = arith.constant dense<0.000000e+00> : vector<16x64xf32>
    %512 = tpu.matmul %509, %511, %cst_172 {dimension_numbers = #tpu.dot_dimension_numbers<[1], [0], [0], [1], [0, 0, 1, 1], [], []>} : vector<16x32xf32>, vector<32x64xf32>, vector<16x64xf32> -> vector<16x64xf32>
    %c1_173 = arith.constant 1 : index
    %c0_174 = arith.constant 0 : index
    %c0_175 = arith.constant 0 : index
    %513 = vector.load %arg12[%c1_173, %c0_174, %c0_175] : memref<2x1x64xf32, #tpu.memory_space<vmem>>, vector<1x1x64xf32>
    %514 = vector.shape_cast %513 : vector<1x1x64xf32> to vector<1x64xf32>
    %515 = vector.broadcast %514 : vector<1x64xf32> to vector<16x64xf32>
    %516 = arith.addf %512, %515 : vector<16x64xf32>
    %517 = arith.mulf %516, %516 : vector<16x64xf32>
    %518 = arith.mulf %516, %517 : vector<16x64xf32>
    %cst_176 = arith.constant 4.471500e-02 : f32
    %519 = vector.broadcast %cst_176 : f32 to vector<16x64xf32>
    %520 = arith.mulf %519, %518 : vector<16x64xf32>
    %521 = arith.addf %516, %520 : vector<16x64xf32>
    %cst_177 = arith.constant 0.797884583 : f32
    %522 = vector.broadcast %cst_177 : f32 to vector<16x64xf32>
    %523 = arith.mulf %522, %521 : vector<16x64xf32>
    %524 = math.tanh %523 : vector<16x64xf32>
    %cst_178 = arith.constant 1.000000e+00 : f32
    %525 = vector.broadcast %cst_178 : f32 to vector<16x64xf32>
    %526 = arith.addf %525, %524 : vector<16x64xf32>
    %cst_179 = arith.constant 5.000000e-01 : f32
    %527 = vector.broadcast %cst_179 : f32 to vector<16x64xf32>
    %528 = arith.mulf %527, %526 : vector<16x64xf32>
    %529 = arith.mulf %516, %528 : vector<16x64xf32>
    %c1_180 = arith.constant 1 : index
    %c0_181 = arith.constant 0 : index
    %c0_182 = arith.constant 0 : index
    %530 = vector.load %arg13[%c1_180, %c0_181, %c0_182] : memref<2x64x32xf32, #tpu.memory_space<vmem>>, vector<1x64x32xf32>
    %531 = vector.shape_cast %530 : vector<1x64x32xf32> to vector<64x32xf32>
    %cst_183 = arith.constant dense<0.000000e+00> : vector<16x32xf32>
    %532 = tpu.matmul %529, %531, %cst_183 {dimension_numbers = #tpu.dot_dimension_numbers<[1], [0], [0], [1], [0, 0, 1, 1], [], []>} : vector<16x64xf32>, vector<64x32xf32>, vector<16x32xf32> -> vector<16x32xf32>
    %c1_184 = arith.constant 1 : index
    %c0_185 = arith.constant 0 : index
    %c0_186 = arith.constant 0 : index
    %533 = vector.load %arg14[%c1_184, %c0_185, %c0_186] : memref<2x1x32xf32, #tpu.memory_space<vmem>>, vector<1x1x32xf32>
    %534 = vector.shape_cast %533 : vector<1x1x32xf32> to vector<1x32xf32>
    %535 = vector.broadcast %534 : vector<1x32xf32> to vector<16x32xf32>
    %536 = arith.addf %532, %535 : vector<16x32xf32>
    %537 = arith.addf %509, %536 : vector<16x32xf32>
    %c1_187 = arith.constant 1 : index
    %c0_188 = arith.constant 0 : index
    %c0_189 = arith.constant 0 : index
    %538 = vector.load %arg15[%c1_187, %c0_188, %c0_189] : memref<2x1x32xf32, #tpu.memory_space<vmem>>, vector<1x1x32xf32>
    %539 = vector.shape_cast %538 : vector<1x1x32xf32> to vector<1x32xf32>
    %c1_190 = arith.constant 1 : index
    %c0_191 = arith.constant 0 : index
    %c0_192 = arith.constant 0 : index
    %540 = vector.load %arg16[%c1_190, %c0_191, %c0_192] : memref<2x1x32xf32, #tpu.memory_space<vmem>>, vector<1x1x32xf32>
    %541 = vector.shape_cast %540 : vector<1x1x32xf32> to vector<1x32xf32>
    %cst_193 = arith.constant dense<0.000000e+00> : vector<16xf32>
    %542 = vector.multi_reduction <add>, %537, %cst_193 [1] : vector<16x32xf32> to vector<16xf32>
    %543 = vector.shape_cast %542 : vector<16xf32> to vector<16x1xf32>
    %cst_194 = arith.constant 3.200000e+01 : f32
    %544 = vector.broadcast %cst_194 : f32 to vector<16x1xf32>
    %545 = arith.divf %543, %544 : vector<16x1xf32>
    %546 = vector.broadcast %545 : vector<16x1xf32> to vector<16x32xf32>
    %547 = arith.subf %537, %546 : vector<16x32xf32>
    %548 = arith.mulf %547, %547 : vector<16x32xf32>
    %cst_195 = arith.constant dense<0.000000e+00> : vector<16xf32>
    %549 = vector.multi_reduction <add>, %548, %cst_195 [1] : vector<16x32xf32> to vector<16xf32>
    %550 = vector.shape_cast %549 : vector<16xf32> to vector<16x1xf32>
    %cst_196 = arith.constant 3.200000e+01 : f32
    %551 = vector.broadcast %cst_196 : f32 to vector<16x1xf32>
    %552 = arith.divf %550, %551 : vector<16x1xf32>
    %553 = vector.broadcast %545 : vector<16x1xf32> to vector<16x32xf32>
    %554 = arith.subf %537, %553 : vector<16x32xf32>
    %cst_197 = arith.constant 9.99999974E-6 : f32
    %555 = vector.broadcast %cst_197 : f32 to vector<16x1xf32>
    %556 = arith.addf %552, %555 : vector<16x1xf32>
    %557 = math.rsqrt %556 : vector<16x1xf32>
    %558 = vector.broadcast %557 : vector<16x1xf32> to vector<16x32xf32>
    %559 = arith.mulf %554, %558 : vector<16x32xf32>
    %560 = vector.broadcast %539 : vector<1x32xf32> to vector<16x32xf32>
    %561 = arith.mulf %559, %560 : vector<16x32xf32>
    %562 = vector.broadcast %541 : vector<1x32xf32> to vector<16x32xf32>
    %563 = arith.addf %561, %562 : vector<16x32xf32>
    %564 = vector.extract_strided_slice %563 {offsets = [0, 0], sizes = [1, 32], strides = [1, 1]} : vector<16x32xf32> to vector<1x32xf32>
    %565 = vector.extract_strided_slice %563 {offsets = [8, 0], sizes = [1, 32], strides = [1, 1]} : vector<16x32xf32> to vector<1x32xf32>
    %566 = tpu.concatenate %564, %565 in 0 : vector<1x32xf32>, vector<1x32xf32> -> vector<2x32xf32>
    %c0_198 = arith.constant 0 : index
    %c0_199 = arith.constant 0 : index
    %567 = vector.load %arg17[%c0_198, %c0_199] : memref<32x32xf32, #tpu.memory_space<vmem>>, vector<32x32xf32>
    %cst_200 = arith.constant dense<0.000000e+00> : vector<2x32xf32>
    %568 = tpu.matmul %566, %567, %cst_200 {dimension_numbers = #tpu.dot_dimension_numbers<[1], [0], [0], [1], [0, 0, 1, 1], [], []>} : vector<2x32xf32>, vector<32x32xf32>, vector<2x32xf32> -> vector<2x32xf32>
    %c0_201 = arith.constant 0 : index
    %c0_202 = arith.constant 0 : index
    %569 = vector.load %arg18[%c0_201, %c0_202] : memref<1x32xf32, #tpu.memory_space<vmem>>, vector<1x32xf32>
    %570 = vector.broadcast %569 : vector<1x32xf32> to vector<2x32xf32>
    %571 = arith.addf %568, %570 : vector<2x32xf32>
    %572 = math.tanh %571 : vector<2x32xf32>
    %573 = tpu.concatenate %563, %572 in 0 : vector<16x32xf32>, vector<2x32xf32> -> vector<18x32xf32>
    %c0_203 = arith.constant 0 : index
    %c0_204 = arith.constant 0 : index
    %574 = vector.load %arg19[%c0_203, %c0_204] : memref<32x16xf32, #tpu.memory_space<vmem>>, vector<32x16xf32>
    %cst_205 = arith.constant dense<0.000000e+00> : vector<18x16xf32>
    %575 = tpu.matmul %573, %574, %cst_205 {dimension_numbers = #tpu.dot_dimension_numbers<[1], [0], [0], [1], [0, 0, 1, 1], [], []>} : vector<18x32xf32>, vector<32x16xf32>, vector<18x16xf32> -> vector<18x16xf32>
    %c0_206 = arith.constant 0 : index
    %c0_207 = arith.constant 0 : index
    %576 = vector.load %arg20[%c0_206, %c0_207] : memref<1x16xf32, #tpu.memory_space<vmem>>, vector<1x16xf32>
    %577 = vector.broadcast %576 : vector<1x16xf32> to vector<18x16xf32>
    %578 = arith.addf %575, %577 : vector<18x16xf32>
    %c0_208 = arith.constant 0 : index
    %c0_209 = arith.constant 0 : index
    %579 = vector.load %arg21[%c0_208, %c0_209] : memref<1x16xf32, #tpu.memory_space<vmem>>, vector<1x16xf32>
    %c0_210 = arith.constant 0 : index
    %c0_211 = arith.constant 0 : index
    %580 = vector.load %arg22[%c0_210, %c0_211] : memref<1x16xf32, #tpu.memory_space<vmem>>, vector<1x16xf32>
    %cst_212 = arith.constant dense<0.000000e+00> : vector<18xf32>
    %581 = vector.multi_reduction <add>, %578, %cst_212 [1] : vector<18x16xf32> to vector<18xf32>
    %582 = vector.shape_cast %581 : vector<18xf32> to vector<18x1xf32>
    %cst_213 = arith.constant 1.600000e+01 : f32
    %583 = vector.broadcast %cst_213 : f32 to vector<18x1xf32>
    %584 = arith.divf %582, %583 : vector<18x1xf32>
    %585 = vector.broadcast %584 : vector<18x1xf32> to vector<18x16xf32>
    %586 = arith.subf %578, %585 : vector<18x16xf32>
    %587 = arith.mulf %586, %586 : vector<18x16xf32>
    %cst_214 = arith.constant dense<0.000000e+00> : vector<18xf32>
    %588 = vector.multi_reduction <add>, %587, %cst_214 [1] : vector<18x16xf32> to vector<18xf32>
    %589 = vector.shape_cast %588 : vector<18xf32> to vector<18x1xf32>
    %cst_215 = arith.constant 1.600000e+01 : f32
    %590 = vector.broadcast %cst_215 : f32 to vector<18x1xf32>
    %591 = arith.divf %589, %590 : vector<18x1xf32>
    %592 = vector.broadcast %584 : vector<18x1xf32> to vector<18x16xf32>
    %593 = arith.subf %578, %592 : vector<18x16xf32>
    %cst_216 = arith.constant 9.99999996E-13 : f32
    %594 = vector.broadcast %cst_216 : f32 to vector<18x1xf32>
    %595 = arith.addf %591, %594 : vector<18x1xf32>
    %596 = math.rsqrt %595 : vector<18x1xf32>
    %597 = vector.broadcast %596 : vector<18x1xf32> to vector<18x16xf32>
    %598 = arith.mulf %593, %597 : vector<18x16xf32>
    %599 = vector.broadcast %579 : vector<1x16xf32> to vector<18x16xf32>
    %600 = arith.mulf %598, %599 : vector<18x16xf32>
    %601 = vector.broadcast %580 : vector<1x16xf32> to vector<18x16xf32>
    %602 = arith.addf %600, %601 : vector<18x16xf32>
    %c0_217 = arith.constant 0 : index
    %c0_218 = arith.constant 0 : index
    %603 = vector.load %arg23[%c0_217, %c0_218] : memref<18x16xf32, #tpu.memory_space<vmem>>, vector<18x16xf32>
    tpu.vector_store %arg23[%c0_217, %c0_218], %602 {strides = array<i32>} : memref<18x16xf32, #tpu.memory_space<vmem>>, vector<18x16xf32>,
    return
  }
  func.func @transform_0(%arg0: i32) -> (i32, i32) {
    %c0_i32 = arith.constant 0 : i32
    %c0_i32_0 = arith.constant 0 : i32
    %c0_i32_1 = arith.constant 0 : i32
    return %c0_i32, %c0_i32_0 : i32, i32
  }
  func.func @transform_1(%arg0: i32) -> (i32, i32) {
    %c0_i32 = arith.constant 0 : i32
    %c0_i32_0 = arith.constant 0 : i32
    %c0_i32_1 = arith.constant 0 : i32
    return %c0_i32, %c0_i32_0 : i32, i32
  }
  func.func @transform_2(%arg0: i32) -> (i32, i32) {
    %c0_i32 = arith.constant 0 : i32
    %c0_i32_0 = arith.constant 0 : i32
    %c0_i32_1 = arith.constant 0 : i32
    return %c0_i32, %c0_i32_0 : i32, i32
  }
  func.func @transform_3(%arg0: i32) -> (i32, i32) {
    %c0_i32 = arith.constant 0 : i32
    %c0_i32_0 = arith.constant 0 : i32
    %c0_i32_1 = arith.constant 0 : i32
    return %c0_i32, %c0_i32_0 : i32, i32
  }
  func.func @transform_4(%arg0: i32) -> (i32, i32, i32) {
    %c0_i32 = arith.constant 0 : i32
    %c0_i32_0 = arith.constant 0 : i32
    %c0_i32_1 = arith.constant 0 : i32
    %c0_i32_2 = arith.constant 0 : i32
    return %c0_i32, %c0_i32_0, %c0_i32_1 : i32, i32, i32
  }
  func.func @transform_5(%arg0: i32) -> (i32, i32, i32) {
    %c0_i32 = arith.constant 0 : i32
    %c0_i32_0 = arith.constant 0 : i32
    %c0_i32_1 = arith.constant 0 : i32
    %c0_i32_2 = arith.constant 0 : i32
    return %c0_i32, %c0_i32_0, %c0_i32_1 : i32, i32, i32
  }
  func.func @transform_6(%arg0: i32) -> (i32, i32, i32) {
    %c0_i32 = arith.constant 0 : i32
    %c0_i32_0 = arith.constant 0 : i32
    %c0_i32_1 = arith.constant 0 : i32
    %c0_i32_2 = arith.constant 0 : i32
    return %c0_i32, %c0_i32_0, %c0_i32_1 : i32, i32, i32
  }
  func.func @transform_7(%arg0: i32) -> (i32, i32, i32) {
    %c0_i32 = arith.constant 0 : i32
    %c0_i32_0 = arith.constant 0 : i32
    %c0_i32_1 = arith.constant 0 : i32
    %c0_i32_2 = arith.constant 0 : i32
    return %c0_i32, %c0_i32_0, %c0_i32_1 : i32, i32, i32
  }
  func.func @transform_8(%arg0: i32) -> (i32, i32, i32) {
    %c0_i32 = arith.constant 0 : i32
    %c0_i32_0 = arith.constant 0 : i32
    %c0_i32_1 = arith.constant 0 : i32
    %c0_i32_2 = arith.constant 0 : i32
    return %c0_i32, %c0_i32_0, %c0_i32_1 : i32, i32, i32
  }
  func.func @transform_9(%arg0: i32) -> (i32, i32, i32) {
    %c0_i32 = arith.constant 0 : i32
    %c0_i32_0 = arith.constant 0 : i32
    %c0_i32_1 = arith.constant 0 : i32
    %c0_i32_2 = arith.constant 0 : i32
    return %c0_i32, %c0_i32_0, %c0_i32_1 : i32, i32, i32
  }
  func.func @transform_10(%arg0: i32) -> (i32, i32, i32) {
    %c0_i32 = arith.constant 0 : i32
    %c0_i32_0 = arith.constant 0 : i32
    %c0_i32_1 = arith.constant 0 : i32
    %c0_i32_2 = arith.constant 0 : i32
    return %c0_i32, %c0_i32_0, %c0_i32_1 : i32, i32, i32
  }
  func.func @transform_11(%arg0: i32) -> (i32, i32, i32) {
    %c0_i32 = arith.constant 0 : i32
    %c0_i32_0 = arith.constant 0 : i32
    %c0_i32_1 = arith.constant 0 : i32
    %c0_i32_2 = arith.constant 0 : i32
    return %c0_i32, %c0_i32_0, %c0_i32_1 : i32, i32, i32
  }
  func.func @transform_12(%arg0: i32) -> (i32, i32, i32) {
    %c0_i32 = arith.constant 0 : i32
    %c0_i32_0 = arith.constant 0 : i32
    %c0_i32_1 = arith.constant 0 : i32
    %c0_i32_2 = arith.constant 0 : i32
    return %c0_i32, %c0_i32_0, %c0_i32_1 : i32, i32, i32
  }
  func.func @transform_13(%arg0: i32) -> (i32, i32, i32) {
    %c0_i32 = arith.constant 0 : i32
    %c0_i32_0 = arith.constant 0 : i32
    %c0_i32_1 = arith.constant 0 : i32
    %c0_i32_2 = arith.constant 0 : i32
    return %c0_i32, %c0_i32_0, %c0_i32_1 : i32, i32, i32
  }
  func.func @transform_14(%arg0: i32) -> (i32, i32, i32) {
    %c0_i32 = arith.constant 0 : i32
    %c0_i32_0 = arith.constant 0 : i32
    %c0_i32_1 = arith.constant 0 : i32
    %c0_i32_2 = arith.constant 0 : i32
    return %c0_i32, %c0_i32_0, %c0_i32_1 : i32, i32, i32
  }
  func.func @transform_15(%arg0: i32) -> (i32, i32, i32) {
    %c0_i32 = arith.constant 0 : i32
    %c0_i32_0 = arith.constant 0 : i32
    %c0_i32_1 = arith.constant 0 : i32
    %c0_i32_2 = arith.constant 0 : i32
    return %c0_i32, %c0_i32_0, %c0_i32_1 : i32, i32, i32
  }
  func.func @transform_16(%arg0: i32) -> (i32, i32) {
    %c0_i32 = arith.constant 0 : i32
    %c0_i32_0 = arith.constant 0 : i32
    %c0_i32_1 = arith.constant 0 : i32
    return %c0_i32, %c0_i32_0 : i32, i32
  }
  func.func @transform_17(%arg0: i32) -> (i32, i32) {
    %c0_i32 = arith.constant 0 : i32
    %c0_i32_0 = arith.constant 0 : i32
    %c0_i32_1 = arith.constant 0 : i32
    return %c0_i32, %c0_i32_0 : i32, i32
  }
  func.func @transform_18(%arg0: i32) -> (i32, i32) {
    %c0_i32 = arith.constant 0 : i32
    %c0_i32_0 = arith.constant 0 : i32
    %c0_i32_1 = arith.constant 0 : i32
    return %c0_i32, %c0_i32_0 : i32, i32
  }
  func.func @transform_19(%arg0: i32) -> (i32, i32) {
    %c0_i32 = arith.constant 0 : i32
    %c0_i32_0 = arith.constant 0 : i32
    %c0_i32_1 = arith.constant 0 : i32
    return %c0_i32, %c0_i32_0 : i32, i32
  }
  func.func @transform_20(%arg0: i32) -> (i32, i32) {
    %c0_i32 = arith.constant 0 : i32
    %c0_i32_0 = arith.constant 0 : i32
    %c0_i32_1 = arith.constant 0 : i32
    return %c0_i32, %c0_i32_0 : i32, i32
  }
  func.func @transform_21(%arg0: i32) -> (i32, i32) {
    %c0_i32 = arith.constant 0 : i32
    %c0_i32_0 = arith.constant 0 : i32
    %c0_i32_1 = arith.constant 0 : i32
    return %c0_i32, %c0_i32_0 : i32, i32
  }
  func.func @transform_22(%arg0: i32) -> (i32, i32) {
    %c0_i32 = arith.constant 0 : i32
    %c0_i32_0 = arith.constant 0 : i32
    %c0_i32_1 = arith.constant 0 : i32
    return %c0_i32, %c0_i32_0 : i32, i32
  }
}

</mosaic_0001>

<llo_original>
// kernel: tpu_custom_call.1
$region0: #{tpu_custom_call.1}
  #allocation0 [shape = 'u32[]', space=smem, size = 0x4, offset = 0x4, fixed_abs, tag = 'smem constant byte address 0x4 - core index']
  #allocation1 [shape = 'u32[72,128]{1,0:T(1,128)}', space=vmem, size = 0x9000, scoped, tag = 'internal scratch']
  %s0 = inlined_call_operand.vmem [shape: f32[16,32], index: 0, kind: input, shape index: {}]
  %s1 = inlined_call_operand.hbm [shape: f32[2,8], index: 1, kind: input, shape index: {}]
  %s2 = inlined_call_operand.hbm [shape: f32[1,32], index: 2, kind: input, shape index: {}]
  %s3 = inlined_call_operand.vmem [shape: f32[1,32], index: 3, kind: input, shape index: {}]
  %s4 = inlined_call_operand.vmem [shape: f32[2,32,96], index: 4, kind: input, shape index: {}]
  %s5 = inlined_call_operand.hbm [shape: f32[2,1,96], index: 5, kind: input, shape index: {}]
  %s6 = inlined_call_operand.vmem [shape: f32[2,32,32], index: 6, kind: input, shape index: {}]
  %s7 = inlined_call_operand.hbm [shape: f32[2,1,32], index: 7, kind: input, shape index: {}]
  %s8 = inlined_call_operand.hbm [shape: f32[2,1,32], index: 8, kind: input, shape index: {}]
  %s9 = inlined_call_operand.hbm [shape: f32[2,1,32], index: 9, kind: input, shape index: {}]
  %s10 = inlined_call_operand.vmem [shape: f32[2,32,64], index: 10, kind: input, shape index: {}]
  %s11 = inlined_call_operand.hbm [shape: f32[2,1,64], index: 11, kind: input, shape index: {}]
  %s12 = inlined_call_operand.vmem [shape: f32[2,64,32], index: 12, kind: input, shape index: {}]
  %s13 = inlined_call_operand.hbm [shape: f32[2,1,32], index: 13, kind: input, shape index: {}]
  %s14 = inlined_call_operand.hbm [shape: f32[2,1,32], index: 14, kind: input, shape index: {}]
  %s15 = inlined_call_operand.hbm [shape: f32[2,1,32], index: 15, kind: input, shape index: {}]
  %s16 = inlined_call_operand.vmem [shape: f32[32,32], index: 16, kind: input, shape index: {}]
  %s17 = inlined_call_operand.hbm [shape: f32[1,32], index: 17, kind: input, shape index: {}]
  %s18 = inlined_call_operand.vmem [shape: f32[32,16], index: 18, kind: input, shape index: {}]
  %s19 = inlined_call_operand.hbm [shape: f32[1,16], index: 19, kind: input, shape index: {}]
  %s20 = inlined_call_operand.hbm [shape: f32[1,16], index: 20, kind: input, shape index: {}]
  %s21 = inlined_call_operand.vmem [shape: f32[1,16], index: 21, kind: input, shape index: {}]
  %s22 = inlined_call_operand.vmem [shape: f32[18,16], index: 22, kind: output, shape index: {}]
  %s23 = sld [smem:[#allocation0]]
  $region150: #{tpu_custom_call.1} parent=0
    _
  %s25 = ssub.s32 1, %s23
  %s26 = scalar_select 0, %s25, %s23
  $region1: #{tpu_custom_call.1} parent=0
    #allocation2 [shape = 'u8[1024]{0}', space=vmem, size = 0x400, scoped, tag = 'input window, operand 1, single buffered']
    #allocation3 [shape = 's32[1]{0}', space=sflag, size = 0x4, scoped, tag = 'scoped memory for tpu_custom_call.1']
    #allocation4 [shape = 'u8[512]{0}', space=vmem, size = 0x400, scoped, tag = 'input window, operand 2, single buffered']
    #allocation5 [shape = 's32[1]{0}', space=sflag, size = 0x4, scoped, tag = 'scoped memory for tpu_custom_call.1']
    #allocation6 [shape = 'u8[1024]{0}', space=vmem, size = 0x400, scoped, tag = 'input window, operand 5, single buffered']
    #allocation7 [shape = 'u8[1024]{0}', space=vmem, size = 0x400, scoped, tag = 'input window, operand 7, single buffered']
    #allocation8 [shape = 's32[1]{0}', space=sflag, size = 0x4, scoped, tag = 'scoped memory for tpu_custom_call.1']
    #allocation9 [shape = 'u8[1024]{0}', space=vmem, size = 0x400, scoped, tag = 'input window, operand 8, single buffered']
    #allocation10 [shape = 'u8[1024]{0}', space=vmem, size = 0x400, scoped, tag = 'input window, operand 9, single buffered']
    #allocation11 [shape = 's32[1]{0}', space=sflag, size = 0x4, scoped, tag = 'scoped memory for tpu_custom_call.1']
    #allocation12 [shape = 'u8[1024]{0}', space=vmem, size = 0x400, scoped, tag = 'input window, operand 11, single buffered']
    #allocation13 [shape = 'u8[1024]{0}', space=vmem, size = 0x400, scoped, tag = 'input window, operand 13, single buffered']
    #allocation14 [shape = 's32[1]{0}', space=sflag, size = 0x4, scoped, tag = 'scoped memory for tpu_custom_call.1']
    #allocation15 [shape = 'u8[1024]{0}', space=vmem, size = 0x400, scoped, tag = 'input window, operand 14, single buffered']
    #allocation16 [shape = 'u8[1024]{0}', space=vmem, size = 0x400, scoped, tag = 'input window, operand 15, single buffered']
    #allocation17 [shape = 's32[1]{0}', space=sflag, size = 0x4, scoped, tag = 'scoped memory for tpu_custom_call.1']
    #allocation18 [shape = 'u8[512]{0}', space=vmem, size = 0x400, scoped, tag = 'input window, operand 17, single buffered']
    #allocation19 [shape = 'u8[512]{0}', space=vmem, size = 0x400, scoped, tag = 'input window, operand 19, single buffered']
    #allocation20 [shape = 's32[1]{0}', space=sflag, size = 0x4, scoped, tag = 'scoped memory for tpu_custom_call.1']
    #allocation21 [shape = 'u8[512]{0}', space=vmem, size = 0x400, scoped, tag = 'input window, operand 20, single buffered']
    %27 = vsyncpa [#allocation3], 0
    %28 = vsyncpa [#allocation5], 0
    %29 = vsyncpa [#allocation8], 0
    %30 = vsyncpa [#allocation11], 0
    %31 = vsyncpa [#allocation14], 0
    %32 = vsyncpa [#allocation17], 0
    %33 = vsyncpa [#allocation20], 0
    // Predicated region
    $region2: #{tpu_custom_call.1} parent=1 // pred_check
      _
    $region3: #{tpu_custom_call.1} parent=1 // pred_check_branch
      %35 = sbr.rel (0) target = $region5
    $region4: #{tpu_custom_call.1} parent=1 // pred_region
      _
    $region5: #{tpu_custom_call.1} parent=1 // pred_fallthru
      _
    // Predicated region
    $region6: #{tpu_custom_call.1} parent=1 // pred_check
      _
    $region7: #{tpu_custom_call.1} parent=1 // pred_check_branch
      %37 = sbr.rel (0) target = $region9
    $region8: #{tpu_custom_call.1} parent=1 // pred_region
      %39 = vsyncadd [#allocation3], 0
      %s41 = sshll.u32 %s1, 4
      %s42 = int_to_ptr.hbm [resolvable:$true] %s41
      %s43 = sshll.u32 [#allocation2], 4
      %s44 = int_to_ptr.vmem [resolvable:$true] %s43
      %46 = dma.hbm_to_vmem [thread:$0]  %s42, 32, %s44, [#allocation3]
    $region9: #{tpu_custom_call.1} parent=1 // pred_fallthru
      _
    // Predicated region
    $region10: #{tpu_custom_call.1} parent=1 // pred_check
      _
    $region11: #{tpu_custom_call.1} parent=1 // pred_check_branch
      %48 = sbr.rel (0) target = $region13
    $region12: #{tpu_custom_call.1} parent=1 // pred_region
      %50 = vsyncadd [#allocation5], 0
      %s52 = sshll.u32 %s2, 4
      %s53 = int_to_ptr.hbm [resolvable:$true] %s52
      %s54 = sshll.u32 [#allocation4], 4
      %s55 = int_to_ptr.vmem [resolvable:$true] %s54
      %57 = dma.hbm_to_vmem [thread:$0]  %s53, 16, %s55, [#allocation5]
    $region13: #{tpu_custom_call.1} parent=1 // pred_fallthru
      _
    // Predicated region
    $region14: #{tpu_custom_call.1} parent=1 // pred_check
      _
    $region15: #{tpu_custom_call.1} parent=1 // pred_check_branch
      %59 = sbr.rel (0) target = $region17
    $region16: #{tpu_custom_call.1} parent=1 // pred_region
      _
    $region17: #{tpu_custom_call.1} parent=1 // pred_fallthru
      _
    // Predicated region
    $region18: #{tpu_custom_call.1} parent=1 // pred_check
      _
    $region19: #{tpu_custom_call.1} parent=1 // pred_check_branch
      %61 = sbr.rel (0) target = $region21
    $region20: #{tpu_custom_call.1} parent=1 // pred_region
      _
    $region21: #{tpu_custom_call.1} parent=1 // pred_fallthru
      _
    // Predicated region
    $region22: #{tpu_custom_call.1} parent=1 // pred_check
      _
    $region23: #{tpu_custom_call.1} parent=1 // pred_check_branch
      %63 = sbr.rel (0) target = $region25
    $region24: #{tpu_custom_call.1} parent=1 // pred_region
      %65 = vsyncadd [#allocation5], 0
      %s66 = sshll.u32 %s5, 4
      %s67 = int_to_ptr.hbm [resolvable:$true] %s66
      %s68 = sshll.u32 [#allocation6], 4
      %s69 = int_to_ptr.vmem [resolvable:$true] %s68
      %74 = dma.hbm_to_vmem [thread:$0]  %s67, 32, %s69, [#allocation5], 16, 16, 1
    $region25: #{tpu_custom_call.1} parent=1 // pred_fallthru
      _
    // Predicated region
    $region26: #{tpu_custom_call.1} parent=1 // pred_check
      _
    $region27: #{tpu_custom_call.1} parent=1 // pred_check_branch
      %76 = sbr.rel (0) target = $region29
    $region28: #{tpu_custom_call.1} parent=1 // pred_region
      _
    $region29: #{tpu_custom_call.1} parent=1 // pred_fallthru
      _
    // Predicated region
    $region30: #{tpu_custom_call.1} parent=1 // pred_check
      _
    $region31: #{tpu_custom_call.1} parent=1 // pred_check_branch
      %78 = sbr.rel (0) target = $region33
    $region32: #{tpu_custom_call.1} parent=1 // pred_region
      %80 = vsyncadd [#allocation8], 0
      %s81 = sshll.u32 %s7, 4
      %s82 = int_to_ptr.hbm [resolvable:$true] %s81
      %s83 = sshll.u32 [#allocation7], 4
      %s84 = int_to_ptr.vmem [resolvable:$true] %s83
      %89 = dma.hbm_to_vmem [thread:$0]  %s82, 32, %s84, [#allocation8], 16, 16, 1
    $region33: #{tpu_custom_call.1} parent=1 // pred_fallthru
      _
    // Predicated region
    $region34: #{tpu_custom_call.1} parent=1 // pred_check
      _
    $region35: #{tpu_custom_call.1} parent=1 // pred_check_branch
      %91 = sbr.rel (0) target = $region37
    $region36: #{tpu_custom_call.1} parent=1 // pred_region
      %93 = vsyncadd [#allocation8], 0
      %s94 = sshll.u32 %s8, 4
      %s95 = int_to_ptr.hbm [resolvable:$true] %s94
      %s96 = sshll.u32 [#allocation9], 4
      %s97 = int_to_ptr.vmem [resolvable:$true] %s96
      %102 = dma.hbm_to_vmem [thread:$0]  %s95, 32, %s97, [#allocation8], 16, 16, 1
    $region37: #{tpu_custom_call.1} parent=1 // pred_fallthru
      _
    // Predicated region
    $region38: #{tpu_custom_call.1} parent=1 // pred_check
      _
    $region39: #{tpu_custom_call.1} parent=1 // pred_check_branch
      %104 = sbr.rel (0) target = $region41
    $region40: #{tpu_custom_call.1} parent=1 // pred_region
      %106 = vsyncadd [#allocation11], 0
      %s107 = sshll.u32 %s9, 4
      %s108 = int_to_ptr.hbm [resolvable:$true] %s107
      %s109 = sshll.u32 [#allocation10], 4
      %s110 = int_to_ptr.vmem [resolvable:$true] %s109
      %115 = dma.hbm_to_vmem [thread:$0]  %s108, 32, %s110, [#allocation11], 16, 16, 1
    $region41: #{tpu_custom_call.1} parent=1 // pred_fallthru
      _
    // Predicated region
    $region42: #{tpu_custom_call.1} parent=1 // pred_check
      _
    $region43: #{tpu_custom_call.1} parent=1 // pred_check_branch
      %117 = sbr.rel (0) target = $region45
    $region44: #{tpu_custom_call.1} parent=1 // pred_region
      _
    $region45: #{tpu_custom_call.1} parent=1 // pred_fallthru
      _
    // Predicated region
    $region46: #{tpu_custom_call.1} parent=1 // pred_check
      _
    $region47: #{tpu_custom_call.1} parent=1 // pred_check_branch
      %119 = sbr.rel (0) target = $region49
    $region48: #{tpu_custom_call.1} parent=1 // pred_region
      %121 = vsyncadd [#allocation11], 0
      %s122 = sshll.u32 %s11, 4
      %s123 = int_to_ptr.hbm [resolvable:$true] %s122
      %s124 = sshll.u32 [#allocation12], 4
      %s125 = int_to_ptr.vmem [resolvable:$true] %s124
      %130 = dma.hbm_to_vmem [thread:$0]  %s123, 32, %s125, [#allocation11], 16, 16, 1
    $region49: #{tpu_custom_call.1} parent=1 // pred_fallthru
      _
    // Predicated region
    $region50: #{tpu_custom_call.1} parent=1 // pred_check
      _
    $region51: #{tpu_custom_call.1} parent=1 // pred_check_branch
      %132 = sbr.rel (0) target = $region53
    $region52: #{tpu_custom_call.1} parent=1 // pred_region
      _
    $region53: #{tpu_custom_call.1} parent=1 // pred_fallthru
      _
    // Predicated region
    $region54: #{tpu_custom_call.1} parent=1 // pred_check
      _
    $region55: #{tpu_custom_call.1} parent=1 // pred_check_branch
      %134 = sbr.rel (0) target = $region57
    $region56: #{tpu_custom_call.1} parent=1 // pred_region
      %136 = vsyncadd [#allocation14], 0
      %s137 = sshll.u32 %s13, 4
      %s138 = int_to_ptr.hbm [resolvable:$true] %s137
      %s139 = sshll.u32 [#allocation13], 4
      %s140 = int_to_ptr.vmem [resolvable:$true] %s139
      %145 = dma.hbm_to_vmem [thread:$0]  %s138, 32, %s140, [#allocation14], 16, 16, 1
    $region57: #{tpu_custom_call.1} parent=1 // pred_fallthru
      _
    // Predicated region
    $region58: #{tpu_custom_call.1} parent=1 // pred_check
      _
    $region59: #{tpu_custom_call.1} parent=1 // pred_check_branch
      %147 = sbr.rel (0) target = $region61
    $region60: #{tpu_custom_call.1} parent=1 // pred_region
      %149 = vsyncadd [#allocation14], 0
      %s150 = sshll.u32 %s14, 4
      %s151 = int_to_ptr.hbm [resolvable:$true] %s150
      %s152 = sshll.u32 [#allocation15], 4
      %s153 = int_to_ptr.vmem [resolvable:$true] %s152
      %158 = dma.hbm_to_vmem [thread:$0]  %s151, 32, %s153, [#allocation14], 16, 16, 1
    $region61: #{tpu_custom_call.1} parent=1 // pred_fallthru
      _
    // Predicated region
    $region62: #{tpu_custom_call.1} parent=1 // pred_check
      _
    $region63: #{tpu_custom_call.1} parent=1 // pred_check_branch
      %160 = sbr.rel (0) target = $region65
    $region64: #{tpu_custom_call.1} parent=1 // pred_region
      %162 = vsyncadd [#allocation17], 0
      %s163 = sshll.u32 %s15, 4
      %s164 = int_to_ptr.hbm [resolvable:$true] %s163
      %s165 = sshll.u32 [#allocation16], 4
      %s166 = int_to_ptr.vmem [resolvable:$true] %s165
      %171 = dma.hbm_to_vmem [thread:$0]  %s164, 32, %s166, [#allocation17], 16, 16, 1
    $region65: #{tpu_custom_call.1} parent=1 // pred_fallthru
      _
    // Predicated region
    $region66: #{tpu_custom_call.1} parent=1 // pred_check
      _
    $region67: #{tpu_custom_call.1} parent=1 // pred_check_branch
      %173 = sbr.rel (0) target = $region69
    $region68: #{tpu_custom_call.1} parent=1 // pred_region
      _
    $region69: #{tpu_custom_call.1} parent=1 // pred_fallthru
      _
    // Predicated region
    $region70: #{tpu_custom_call.1} parent=1 // pred_check
      _
    $region71: #{tpu_custom_call.1} parent=1 // pred_check_branch
      %175 = sbr.rel (0) target = $region73
    $region72: #{tpu_custom_call.1} parent=1 // pred_region
      %177 = vsyncadd [#allocation17], 0
      %s179 = sshll.u32 %s17, 4
      %s180 = int_to_ptr.hbm [resolvable:$true] %s179
      %s181 = sshll.u32 [#allocation18], 4
      %s182 = int_to_ptr.vmem [resolvable:$true] %s181
      %184 = dma.hbm_to_vmem [thread:$0]  %s180, 16, %s182, [#allocation17]
    $region73: #{tpu_custom_call.1} parent=1 // pred_fallthru
      _
    // Predicated region
    $region74: #{tpu_custom_call.1} parent=1 // pred_check
      _
    $region75: #{tpu_custom_call.1} parent=1 // pred_check_branch
      %186 = sbr.rel (0) target = $region77
    $region76: #{tpu_custom_call.1} parent=1 // pred_region
      _
    $region77: #{tpu_custom_call.1} parent=1 // pred_fallthru
      _
    // Predicated region
    $region78: #{tpu_custom_call.1} parent=1 // pred_check
      _
    $region79: #{tpu_custom_call.1} parent=1 // pred_check_branch
      %188 = sbr.rel (0) target = $region81
    $region80: #{tpu_custom_call.1} parent=1 // pred_region
      %190 = vsyncadd [#allocation20], 0
      %s192 = sshll.u32 %s19, 4
      %s193 = int_to_ptr.hbm [resolvable:$true] %s192
      %s194 = sshll.u32 [#allocation19], 4
      %s195 = int_to_ptr.vmem [resolvable:$true] %s194
      %197 = dma.hbm_to_vmem [thread:$0]  %s193, 16, %s195, [#allocation20]
    $region81: #{tpu_custom_call.1} parent=1 // pred_fallthru
      _
    // Predicated region
    $region82: #{tpu_custom_call.1} parent=1 // pred_check
      _
    $region83: #{tpu_custom_call.1} parent=1 // pred_check_branch
      %199 = sbr.rel (0) target = $region85
    $region84: #{tpu_custom_call.1} parent=1 // pred_region
      %201 = vsyncadd [#allocation20], 0
      %s203 = sshll.u32 %s20, 4
      %s204 = int_to_ptr.hbm [resolvable:$true] %s203
      %s205 = sshll.u32 [#allocation21], 4
      %s206 = int_to_ptr.vmem [resolvable:$true] %s205
      %208 = dma.hbm_to_vmem [thread:$0]  %s204, 16, %s206, [#allocation20]
    $region85: #{tpu_custom_call.1} parent=1 // pred_fallthru
      _
    // Predicated region
    $region86: #{tpu_custom_call.1} parent=1 // pred_check
      _
    $region87: #{tpu_custom_call.1} parent=1 // pred_check_branch
      %210 = sbr.rel (0) target = $region89
    $region88: #{tpu_custom_call.1} parent=1 // pred_region
      _
    $region89: #{tpu_custom_call.1} parent=1 // pred_fallthru
      _
    // Predicated region
    $region90: #{tpu_custom_call.1} parent=1 // pred_check
      _
    $region91: #{tpu_custom_call.1} parent=1 // pred_check_branch
      %212 = sbr.rel (0) target = $region93
    $region92: #{tpu_custom_call.1} parent=1 // pred_region
      %214 = dma.done [#allocation3], 32
    $region93: #{tpu_custom_call.1} parent=1 // pred_fallthru
      _
    // Predicated region
    $region94: #{tpu_custom_call.1} parent=1 // pred_check
      _
    $region95: #{tpu_custom_call.1} parent=1 // pred_check_branch
      %216 = sbr.rel (0) target = $region97
    $region96: #{tpu_custom_call.1} parent=1 // pred_region
      %218 = dma.done [#allocation5], 16
    $region97: #{tpu_custom_call.1} parent=1 // pred_fallthru
      _
    // Predicated region
    $region98: #{tpu_custom_call.1} parent=1 // pred_check
      _
    $region99: #{tpu_custom_call.1} parent=1 // pred_check_branch
      %220 = sbr.rel (0) target = $region101
    $region100: #{tpu_custom_call.1} parent=1 // pred_region
      %222 = dma.done [#allocation5], 32
    $region101: #{tpu_custom_call.1} parent=1 // pred_fallthru
      _
    // Predicated region
    $region102: #{tpu_custom_call.1} parent=1 // pred_check
      _
    $region103: #{tpu_custom_call.1} parent=1 // pred_check_branch
      %224 = sbr.rel (0) target = $region105
    $region104: #{tpu_custom_call.1} parent=1 // pred_region
      %226 = dma.done [#allocation8], 32
    $region105: #{tpu_custom_call.1} parent=1 // pred_fallthru
      _
    // Predicated region
    $region106: #{tpu_custom_call.1} parent=1 // pred_check
      _
    $region107: #{tpu_custom_call.1} parent=1 // pred_check_branch
      %228 = sbr.rel (0) target = $region109
    $region108: #{tpu_custom_call.1} parent=1 // pred_region
      %230 = dma.done [#allocation8], 32
    $region109: #{tpu_custom_call.1} parent=1 // pred_fallthru
      _
    // Predicated region
    $region110: #{tpu_custom_call.1} parent=1 // pred_check
      _
    $region111: #{tpu_custom_call.1} parent=1 // pred_check_branch
      %232 = sbr.rel (0) target = $region113
    $region112: #{tpu_custom_call.1} parent=1 // pred_region
      %234 = dma.done [#allocation11], 32
    $region113: #{tpu_custom_call.1} parent=1 // pred_fallthru
      _
    // Predicated region
    $region114: #{tpu_custom_call.1} parent=1 // pred_check
      _
    $region115: #{tpu_custom_call.1} parent=1 // pred_check_branch
      %236 = sbr.rel (0) target = $region117
    $region116: #{tpu_custom_call.1} parent=1 // pred_region
      %238 = dma.done [#allocation11], 32
    $region117: #{tpu_custom_call.1} parent=1 // pred_fallthru
      _
    // Predicated region
    $region118: #{tpu_custom_call.1} parent=1 // pred_check
      _
    $region119: #{tpu_custom_call.1} parent=1 // pred_check_branch
      %240 = sbr.rel (0) target = $region121
    $region120: #{tpu_custom_call.1} parent=1 // pred_region
      %242 = dma.done [#allocation14], 32
    $region121: #{tpu_custom_call.1} parent=1 // pred_fallthru
      _
    // Predicated region
    $region122: #{tpu_custom_call.1} parent=1 // pred_check
      _
    $region123: #{tpu_custom_call.1} parent=1 // pred_check_branch
      %244 = sbr.rel (0) target = $region125
    $region124: #{tpu_custom_call.1} parent=1 // pred_region
      %246 = dma.done [#allocation14], 32
    $region125: #{tpu_custom_call.1} parent=1 // pred_fallthru
      _
    // Predicated region
    $region126: #{tpu_custom_call.1} parent=1 // pred_check
      _
    $region127: #{tpu_custom_call.1} parent=1 // pred_check_branch
      %248 = sbr.rel (0) target = $region129
    $region128: #{tpu_custom_call.1} parent=1 // pred_region
      %250 = dma.done [#allocation17], 32
    $region129: #{tpu_custom_call.1} parent=1 // pred_fallthru
      _
    // Predicated region
    $region130: #{tpu_custom_call.1} parent=1 // pred_check
      _
    $region131: #{tpu_custom_call.1} parent=1 // pred_check_branch
      %252 = sbr.rel (0) target = $region133
    $region132: #{tpu_custom_call.1} parent=1 // pred_region
      %254 = dma.done [#allocation17], 16
    $region133: #{tpu_custom_call.1} parent=1 // pred_fallthru
      _
    // Predicated region
    $region134: #{tpu_custom_call.1} parent=1 // pred_check
      _
    $region135: #{tpu_custom_call.1} parent=1 // pred_check_branch
      %256 = sbr.rel (0) target = $region137
    $region136: #{tpu_custom_call.1} parent=1 // pred_region
      %258 = dma.done [#allocation20], 16
    $region137: #{tpu_custom_call.1} parent=1 // pred_fallthru
      _
    // Predicated region
    $region138: #{tpu_custom_call.1} parent=1 // pred_check
      _
    $region139: #{tpu_custom_call.1} parent=1 // pred_check_branch
      %260 = sbr.rel (0) target = $region141
    $region140: #{tpu_custom_call.1} parent=1 // pred_region
      %262 = dma.done [#allocation20], 16
    $region141: #{tpu_custom_call.1} parent=1 // pred_fallthru
      _
    %v263 = vld [vmem:[#allocation2] sm:$0x3]
    %v264 = vld [vmem:[%s0] sm:$0xff]
    %v265 = vld [vmem:[%s0 + $0x8] sm:$0xff]
    %v266 = vld [vmem:[#allocation4] sm:$0x1]
    %v267 = vld [vmem:[%s3] sm:$0x1]
    %vm268 = vcmask 261120
    %v269 = vsel %vm268, %v264, 0.0
    %270 = vadd.xlane.f32.xlu0 %v269
    %v271 = vpop.xlane.xlu0 %270
    %v272 = vsel %vm268, %v265, 0.0
    %273 = vadd.xlane.f32.xlu0 %v272
    %v274 = vpop.xlane.xlu0 %273
    %v275 = vrcp.pop 32.0
    %v276 = vmul.f32 32.0, %v275
    %v277 = vsub.f32 1.0, %v276
    %v278 = vmul.f32 %v275, %v277
    %v279 = vadd.f32 %v275, %v278
    %vm280 = vweird.f32 %v275
    %v281 = vsel %vm280, %v275, %v279
    %v282 = vmul.f32 %v271, %v281
    %v283 = vmul.f32 %v274, %v281
    %v284 = vsub.f32 %v264, %v282
    %v285 = vsub.f32 %v265, %v283
    %v286 = vmul.f32 %v284, %v284
    %v287 = vmul.f32 %v285, %v285
    %v288 = vsel %vm268, %v286, 0.0
    %289 = vadd.xlane.f32.xlu0 %v288
    %v290 = vpop.xlane.xlu0 %289
    %v291 = vsel %vm268, %v287, 0.0
    %292 = vadd.xlane.f32.xlu0 %v291
    %v293 = vpop.xlane.xlu0 %292
    %v294 = vmul.f32 %v290, %v281
    %v295 = vmul.f32 %v293, %v281
    %v296 = vadd.f32 %v294, 1e-05
    %v297 = vadd.f32 %v295, 1e-05
    %v298 = vrsqrt.pop %v296
    %v299 = vmul.f32 %v298, %v296
    %v300 = vmul.f32 %v299, %v298
    %v301 = vmul.f32 0.5, %v300
    %v302 = vsub.f32 1.5, %v301
    %v303 = vmul.f32 %v298, %v302
    %vm304 = vweird.f32 %v296
    %vm305 = vweird.f32 %v298
    %vm306 = vmor %vm304, %vm305
    %v307 = vsel %vm306, %v298, %v303
    %v308 = vrsqrt.pop %v297
    %v309 = vmul.f32 %v308, %v297
    %v310 = vmul.f32 %v309, %v308
    %v311 = vmul.f32 0.5, %v310
    %v312 = vsub.f32 1.5, %v311
    %v313 = vmul.f32 %v308, %v312
    %vm314 = vweird.f32 %v297
    %vm315 = vweird.f32 %v308
    %vm316 = vmor %vm314, %vm315
    %v317 = vsel %vm316, %v308, %v313
    %v318 = vmul.f32 %v284, %v307
    %v319 = vmul.f32 %v285, %v317
    %v321 = vperm.slane %v266, 0
    %v323 = vmul.f32 %v318, %v321
    %v324 = vmul.f32 %v319, %v321
    %v326 = vperm.slane %v267, 0
    %v328 = vadd.f32 %v323, %v326
    %v329 = vadd.f32 %v324, %v326
    %v330 = vld [vmem:[%s4] sm:$0xff]
    %v331 = vld [vmem:[%s4 + $0x8] sm:$0xff]
    %v332 = vld [vmem:[%s4 + $0x10] sm:$0xff]
    %v333 = vld [vmem:[%s4 + $0x18] sm:$0xff]
    %v334 = vld [vmem:[#allocation6] sm:$0x1]
    %v336 = vperm.slane %v334, 0
    %v339 = vsel %vm268, %v328, 0
    %v342 = vsel %vm268, %v329, 0
    %344 = vmatpush.msra.mxu0 0.0
    %345 = vmatpush.msra.mxu0 0.0
    %346 = vmatpush.msra.mxu0 0.0
    %347 = vmatpush.msra.mxu0 0.0
    %348 = vmatpush.msra.mxu0 0.0
    %349 = vmatpush.msra.mxu0 0.0
    %350 = vmatpush.msra.mxu0 0.0
    %351 = vmatpush.msra.mxu0 0.0
    %352 = vmatpush.msra.mxu0 0.0
    %353 = vmatpush.msra.mxu0 0.0
    %354 = vmatpush.msra.mxu0 0.0
    %355 = vmatpush.msra.mxu0 0.0
    %356 = vmatpush.msra.mxu0 %v333
    %357 = vmatpush.msra.mxu0 %v332
    %358 = vmatpush.msra.mxu0 %v331
    %359 = vmatpush.msra.mxu0 %v330
    %360 = vmatmul.f32.gmra.mxu0 %v339
    %v361 = vpop.f32.mrf.mxu0
    %v362 = vadd.f32 %v336, %v361
    %363 = vmatmul.f32.gmra.mxu0 %v342
    %v364 = vpop.f32.mrf.mxu0
    %v365 = vadd.f32 %v336, %v364
    %366 = vdwg.mxu0
    %368 = vrot.lane.b32.xlu0 %v362, 96
    %v369 = vpop.permute.xlu0 %368
    %vm370 = vcmask 64512
    %v371 = vsel %vm370, %v362, 0
    %v373 = vsel %vm370, %v369, 0
    %375 = vmatpush.xpose.msra.mxu0 0.0
    %376 = vmatpush.xpose.msra.mxu0 0.0
    %377 = vmatpush.xpose.msra.mxu0 0.0
    %378 = vmatpush.xpose.msra.mxu0 0.0
    %379 = vmatpush.xpose.msra.mxu0 0.0
    %380 = vmatpush.xpose.msra.mxu0 0.0
    %381 = vmatpush.xpose.msra.mxu0 0.0
    %382 = vmatpush.xpose.msra.mxu0 0.0
    %383 = vmatpush.xpose.msra.mxu0 0.0
    %384 = vmatpush.xpose.msra.mxu0 0.0
    %385 = vmatpush.xpose.msra.mxu0 0.0
    %386 = vmatpush.xpose.msra.mxu0 0.0
    %387 = vmatpush.xpose.msra.mxu0 0.0
    %388 = vmatpush.xpose.msra.mxu0 0.0
    %389 = vmatpush.xpose.msra.mxu0 0.0
    %390 = vmatpush.xpose.msra.mxu0 %v373
    %391 = vmatmul.f32.gmra.mxu0 %v371
    %v392 = vpop.f32.mrf.mxu0
    %v393 = vadd.f32 0.0, %v392
    %394 = vdwg.mxu0
    %v395 = vmul.f32 %v393, 0.35355338
    %v396 = vperm.slane %v263, 0
    %v397 = vadd.f32 %v395, %v396
    %v398 = vsel %vm370, %v397, -inf
    %399 = vmax.xlane.f32.xlu0 %v398
    %v400 = vpop.xlane.xlu0 %399
    %v401 = vsub.f32 %v397, %v400
    %v402 = vmul.f32 %v401, 1.442695
    %v403 = vpow.pop %v402
    %v404 = vsel %vm370, %v403, 0.0
    %405 = vadd.xlane.f32.xlu0 %v404
    %v406 = vpop.xlane.xlu0 %405
    %v407 = vrcp.pop %v406
    %v408 = vmul.f32 %v403, %v407
    %409 = vrot.lane.b32.xlu0 %v362, 64
    %v410 = vpop.permute.xlu0 %409
    %v413 = vsel %vm370, %v408, 0
    %415 = vmatpush.msra.mxu0 0.0
    %416 = vmatpush.msra.mxu0 0.0
    %417 = vmatpush.msra.mxu0 0.0
    %418 = vmatpush.msra.mxu0 0.0
    %419 = vmatpush.msra.mxu0 0.0
    %420 = vmatpush.msra.mxu0 0.0
    %421 = vmatpush.msra.mxu0 0.0
    %422 = vmatpush.msra.mxu0 0.0
    %423 = vmatpush.msra.mxu0 0.0
    %424 = vmatpush.msra.mxu0 0.0
    %425 = vmatpush.msra.mxu0 0.0
    %426 = vmatpush.msra.mxu0 0.0
    %427 = vmatpush.msra.mxu0 0.0
    %428 = vmatpush.msra.mxu0 0.0
    %429 = vmatpush.msra.mxu0 0.0
    %430 = vmatpush.msra.mxu0 %v410
    %431 = vmatmul.f32.gmra.mxu0 %v413
    %v432 = vpop.f32.mrf.mxu0
    %v433 = vadd.f32 0.0, %v432
    %434 = vdwg.mxu0
    %435 = vrot.lane.b32.xlu0 %v362, 120
    %v436 = vpop.permute.xlu0 %435
    %437 = vrot.lane.b32.xlu0 %v362, 88
    %v438 = vpop.permute.xlu0 %437
    %v439 = vsel %vm370, %v436, 0
    %v441 = vsel %vm370, %v438, 0
    %443 = vmatpush.xpose.msra.mxu0 0.0
    %444 = vmatpush.xpose.msra.mxu0 0.0
    %445 = vmatpush.xpose.msra.mxu0 0.0
    %446 = vmatpush.xpose.msra.mxu0 0.0
    %447 = vmatpush.xpose.msra.mxu0 0.0
    %448 = vmatpush.xpose.msra.mxu0 0.0
    %449 = vmatpush.xpose.msra.mxu0 0.0
    %450 = vmatpush.xpose.msra.mxu0 0.0
    %451 = vmatpush.xpose.msra.mxu0 0.0
    %452 = vmatpush.xpose.msra.mxu0 0.0
    %453 = vmatpush.xpose.msra.mxu0 0.0
    %454 = vmatpush.xpose.msra.mxu0 0.0
    %455 = vmatpush.xpose.msra.mxu0 0.0
    %456 = vmatpush.xpose.msra.mxu0 0.0
    %457 = vmatpush.xpose.msra.mxu0 0.0
    %458 = vmatpush.xpose.msra.mxu0 %v441
    %459 = vmatmul.f32.gmra.mxu0 %v439
    %v460 = vpop.f32.mrf.mxu0
    %v461 = vadd.f32 0.0, %v460
    %462 = vdwg.mxu0
    %v463 = vmul.f32 %v461, 0.35355338
    %v464 = vadd.f32 %v463, %v396
    %v465 = vsel %vm370, %v464, -inf
    %466 = vmax.xlane.f32.xlu0 %v465
    %v467 = vpop.xlane.xlu0 %466
    %v468 = vsub.f32 %v464, %v467
    %v469 = vmul.f32 %v468, 1.442695
    %v470 = vpow.pop %v469
    %v471 = vsel %vm370, %v470, 0.0
    %472 = vadd.xlane.f32.xlu0 %v471
    %v473 = vpop.xlane.xlu0 %472
    %v474 = vrcp.pop %v473
    %v475 = vmul.f32 %v470, %v474
    %476 = vrot.lane.b32.xlu0 %v362, 56
    %v477 = vpop.permute.xlu0 %476
    %v480 = vsel %vm370, %v475, 0
    %482 = vmatpush.msra.mxu0 0.0
    %483 = vmatpush.msra.mxu0 0.0
    %484 = vmatpush.msra.mxu0 0.0
    %485 = vmatpush.msra.mxu0 0.0
    %486 = vmatpush.msra.mxu0 0.0
    %487 = vmatpush.msra.mxu0 0.0
    %488 = vmatpush.msra.mxu0 0.0
    %489 = vmatpush.msra.mxu0 0.0
    %490 = vmatpush.msra.mxu0 0.0
    %491 = vmatpush.msra.mxu0 0.0
    %492 = vmatpush.msra.mxu0 0.0
    %493 = vmatpush.msra.mxu0 0.0
    %494 = vmatpush.msra.mxu0 0.0
    %495 = vmatpush.msra.mxu0 0.0
    %496 = vmatpush.msra.mxu0 0.0
    %497 = vmatpush.msra.mxu0 %v477
    %498 = vmatmul.f32.gmra.mxu0 %v480
    %v499 = vpop.f32.mrf.mxu0
    %v500 = vadd.f32 0.0, %v499
    %501 = vdwg.mxu0
    %502 = vrot.lane.b32.xlu0 %v362, 112
    %v503 = vpop.permute.xlu0 %502
    %504 = vrot.lane.b32.xlu0 %v362, 80
    %v505 = vpop.permute.xlu0 %504
    %v506 = vsel %vm370, %v503, 0
    %v508 = vsel %vm370, %v505, 0
    %510 = vmatpush.xpose.msra.mxu0 0.0
    %511 = vmatpush.xpose.msra.mxu0 0.0
    %512 = vmatpush.xpose.msra.mxu0 0.0
    %513 = vmatpush.xpose.msra.mxu0 0.0
    %514 = vmatpush.xpose.msra.mxu0 0.0
    %515 = vmatpush.xpose.msra.mxu0 0.0
    %516 = vmatpush.xpose.msra.mxu0 0.0
    %517 = vmatpush.xpose.msra.mxu0 0.0
    %518 = vmatpush.xpose.msra.mxu0 0.0
    %519 = vmatpush.xpose.msra.mxu0 0.0
    %520 = vmatpush.xpose.msra.mxu0 0.0
    %521 = vmatpush.xpose.msra.mxu0 0.0
    %522 = vmatpush.xpose.msra.mxu0 0.0
    %523 = vmatpush.xpose.msra.mxu0 0.0
    %524 = vmatpush.xpose.msra.mxu0 0.0
    %525 = vmatpush.xpose.msra.mxu0 %v508
    %526 = vmatmul.f32.gmra.mxu0 %v506
    %v527 = vpop.f32.mrf.mxu0
    %v528 = vadd.f32 0.0, %v527
    %529 = vdwg.mxu0
    %v530 = vmul.f32 %v528, 0.35355338
    %v531 = vadd.f32 %v530, %v396
    %v532 = vsel %vm370, %v531, -inf
    %533 = vmax.xlane.f32.xlu0 %v532
    %v534 = vpop.xlane.xlu0 %533
    %v535 = vsub.f32 %v531, %v534
    %v536 = vmul.f32 %v535, 1.442695
    %v537 = vpow.pop %v536
    %v538 = vsel %vm370, %v537, 0.0
    %539 = vadd.xlane.f32.xlu0 %v538
    %v540 = vpop.xlane.xlu0 %539
    %v541 = vrcp.pop %v540
    %v542 = vmul.f32 %v537, %v541
    %543 = vrot.lane.b32.xlu0 %v362, 48
    %v544 = vpop.permute.xlu0 %543
    %v547 = vsel %vm370, %v542, 0
    %549 = vmatpush.msra.mxu0 0.0
    %550 = vmatpush.msra.mxu0 0.0
    %551 = vmatpush.msra.mxu0 0.0
    %552 = vmatpush.msra.mxu0 0.0
    %553 = vmatpush.msra.mxu0 0.0
    %554 = vmatpush.msra.mxu0 0.0
    %555 = vmatpush.msra.mxu0 0.0
    %556 = vmatpush.msra.mxu0 0.0
    %557 = vmatpush.msra.mxu0 0.0
    %558 = vmatpush.msra.mxu0 0.0
    %559 = vmatpush.msra.mxu0 0.0
    %560 = vmatpush.msra.mxu0 0.0
    %561 = vmatpush.msra.mxu0 0.0
    %562 = vmatpush.msra.mxu0 0.0
    %563 = vmatpush.msra.mxu0 0.0
    %564 = vmatpush.msra.mxu0 %v544
    %565 = vmatmul.f32.gmra.mxu0 %v547
    %v566 = vpop.f32.mrf.mxu0
    %v567 = vadd.f32 0.0, %v566
    %568 = vdwg.mxu0
    %569 = vrot.lane.b32.xlu0 %v362, 104
    %v570 = vpop.permute.xlu0 %569
    %571 = vrot.lane.b32.xlu0 %v362, 72
    %v572 = vpop.permute.xlu0 %571
    %v573 = vsel %vm370, %v570, 0
    %v575 = vsel %vm370, %v572, 0
    %577 = vmatpush.xpose.msra.mxu0 0.0
    %578 = vmatpush.xpose.msra.mxu0 0.0
    %579 = vmatpush.xpose.msra.mxu0 0.0
    %580 = vmatpush.xpose.msra.mxu0 0.0
    %581 = vmatpush.xpose.msra.mxu0 0.0
    %582 = vmatpush.xpose.msra.mxu0 0.0
    %583 = vmatpush.xpose.msra.mxu0 0.0
    %584 = vmatpush.xpose.msra.mxu0 0.0
    %585 = vmatpush.xpose.msra.mxu0 0.0
    %586 = vmatpush.xpose.msra.mxu0 0.0
    %587 = vmatpush.xpose.msra.mxu0 0.0
    %588 = vmatpush.xpose.msra.mxu0 0.0
    %589 = vmatpush.xpose.msra.mxu0 0.0
    %590 = vmatpush.xpose.msra.mxu0 0.0
    %591 = vmatpush.xpose.msra.mxu0 0.0
    %592 = vmatpush.xpose.msra.mxu0 %v575
    %593 = vmatmul.f32.gmra.mxu0 %v573
    %v594 = vpop.f32.mrf.mxu0
    %v595 = vadd.f32 0.0, %v594
    %596 = vdwg.mxu0
    %v597 = vmul.f32 %v595, 0.35355338
    %v598 = vadd.f32 %v597, %v396
    %v599 = vsel %vm370, %v598, -inf
    %600 = vmax.xlane.f32.xlu0 %v599
    %v601 = vpop.xlane.xlu0 %600
    %v602 = vsub.f32 %v598, %v601
    %v603 = vmul.f32 %v602, 1.442695
    %v604 = vpow.pop %v603
    %v605 = vsel %vm370, %v604, 0.0
    %606 = vadd.xlane.f32.xlu0 %v605
    %v607 = vpop.xlane.xlu0 %606
    %v608 = vrcp.pop %v607
    %v609 = vmul.f32 %v604, %v608
    %610 = vrot.lane.b32.xlu0 %v362, 40
    %v611 = vpop.permute.xlu0 %610
    %v614 = vsel %vm370, %v609, 0
    %616 = vmatpush.msra.mxu0 0.0
    %617 = vmatpush.msra.mxu0 0.0
    %618 = vmatpush.msra.mxu0 0.0
    %619 = vmatpush.msra.mxu0 0.0
    %620 = vmatpush.msra.mxu0 0.0
    %621 = vmatpush.msra.mxu0 0.0
    %622 = vmatpush.msra.mxu0 0.0
    %623 = vmatpush.msra.mxu0 0.0
    %624 = vmatpush.msra.mxu0 0.0
    %625 = vmatpush.msra.mxu0 0.0
    %626 = vmatpush.msra.mxu0 0.0
    %627 = vmatpush.msra.mxu0 0.0
    %628 = vmatpush.msra.mxu0 0.0
    %629 = vmatpush.msra.mxu0 0.0
    %630 = vmatpush.msra.mxu0 0.0
    %631 = vmatpush.msra.mxu0 %v611
    %632 = vmatmul.f32.gmra.mxu0 %v614
    %v633 = vpop.f32.mrf.mxu0
    %v634 = vadd.f32 0.0, %v633
    %635 = vdwg.mxu0
    %637 = vrot.lane.b32.xlu0 %v500, 8
    %v638 = vpop.permute.xlu0 %637
    %641 = vrot.lane.b32.xlu0 %v567, 16
    %v642 = vpop.permute.xlu0 %641
    %645 = vrot.lane.b32.xlu0 %v634, 24
    %v646 = vpop.permute.xlu0 %645
    %v648 = vsel %vm370, %v433, %v638
    %vm649 = vcmask 130048
    %v650 = vsel %vm649, %v648, %v642
    %vm651 = vcmask 195584
    %v652 = vsel %vm651, %v650, %v646
    %654 = vrot.lane.b32.xlu0 %v365, 96
    %v655 = vpop.permute.xlu0 %654
    %v656 = vsel %vm370, %v365, 0
    %v658 = vsel %vm370, %v655, 0
    %660 = vmatpush.xpose.msra.mxu0 0.0
    %661 = vmatpush.xpose.msra.mxu0 0.0
    %662 = vmatpush.xpose.msra.mxu0 0.0
    %663 = vmatpush.xpose.msra.mxu0 0.0
    %664 = vmatpush.xpose.msra.mxu0 0.0
    %665 = vmatpush.xpose.msra.mxu0 0.0
    %666 = vmatpush.xpose.msra.mxu0 0.0
    %667 = vmatpush.xpose.msra.mxu0 0.0
    %668 = vmatpush.xpose.msra.mxu0 0.0
    %669 = vmatpush.xpose.msra.mxu0 0.0
    %670 = vmatpush.xpose.msra.mxu0 0.0
    %671 = vmatpush.xpose.msra.mxu0 0.0
    %672 = vmatpush.xpose.msra.mxu0 0.0
    %673 = vmatpush.xpose.msra.mxu0 0.0
    %674 = vmatpush.xpose.msra.mxu0 0.0
    %675 = vmatpush.xpose.msra.mxu0 %v658
    %676 = vmatmul.f32.gmra.mxu0 %v656
    %v677 = vpop.f32.mrf.mxu0
    %v678 = vadd.f32 0.0, %v677
    %679 = vdwg.mxu0
    %v680 = vmul.f32 %v678, 0.35355338
    %v681 = vperm.slane %v263, 1
    %v682 = vadd.f32 %v680, %v681
    %v683 = vsel %vm370, %v682, -inf
    %684 = vmax.xlane.f32.xlu0 %v683
    %v685 = vpop.xlane.xlu0 %684
    %v686 = vsub.f32 %v682, %v685
    %v687 = vmul.f32 %v686, 1.442695
    %v688 = vpow.pop %v687
    %v689 = vsel %vm370, %v688, 0.0
    %690 = vadd.xlane.f32.xlu0 %v689
    %v691 = vpop.xlane.xlu0 %690
    %v692 = vrcp.pop %v691
    %v693 = vmul.f32 %v688, %v692
    %694 = vrot.lane.b32.xlu0 %v365, 64
    %v695 = vpop.permute.xlu0 %694
    %v698 = vsel %vm370, %v693, 0
    %700 = vmatpush.msra.mxu0 0.0
    %701 = vmatpush.msra.mxu0 0.0
    %702 = vmatpush.msra.mxu0 0.0
    %703 = vmatpush.msra.mxu0 0.0
    %704 = vmatpush.msra.mxu0 0.0
    %705 = vmatpush.msra.mxu0 0.0
    %706 = vmatpush.msra.mxu0 0.0
    %707 = vmatpush.msra.mxu0 0.0
    %708 = vmatpush.msra.mxu0 0.0
    %709 = vmatpush.msra.mxu0 0.0
    %710 = vmatpush.msra.mxu0 0.0
    %711 = vmatpush.msra.mxu0 0.0
    %712 = vmatpush.msra.mxu0 0.0
    %713 = vmatpush.msra.mxu0 0.0
    %714 = vmatpush.msra.mxu0 0.0
    %715 = vmatpush.msra.mxu0 %v695
    %716 = vmatmul.f32.gmra.mxu0 %v698
    %v717 = vpop.f32.mrf.mxu0
    %v718 = vadd.f32 0.0, %v717
    %719 = vdwg.mxu0
    %720 = vrot.lane.b32.xlu0 %v365, 120
    %v721 = vpop.permute.xlu0 %720
    %722 = vrot.lane.b32.xlu0 %v365, 88
    %v723 = vpop.permute.xlu0 %722
    %v724 = vsel %vm370, %v721, 0
    %v726 = vsel %vm370, %v723, 0
    %728 = vmatpush.xpose.msra.mxu0 0.0
    %729 = vmatpush.xpose.msra.mxu0 0.0
    %730 = vmatpush.xpose.msra.mxu0 0.0
    %731 = vmatpush.xpose.msra.mxu0 0.0
    %732 = vmatpush.xpose.msra.mxu0 0.0
    %733 = vmatpush.xpose.msra.mxu0 0.0
    %734 = vmatpush.xpose.msra.mxu0 0.0
    %735 = vmatpush.xpose.msra.mxu0 0.0
    %736 = vmatpush.xpose.msra.mxu0 0.0
    %737 = vmatpush.xpose.msra.mxu0 0.0
    %738 = vmatpush.xpose.msra.mxu0 0.0
    %739 = vmatpush.xpose.msra.mxu0 0.0
    %740 = vmatpush.xpose.msra.mxu0 0.0
    %741 = vmatpush.xpose.msra.mxu0 0.0
    %742 = vmatpush.xpose.msra.mxu0 0.0
    %743 = vmatpush.xpose.msra.mxu0 %v726
    %744 = vmatmul.f32.gmra.mxu0 %v724
    %v745 = vpop.f32.mrf.mxu0
    %v746 = vadd.f32 0.0, %v745
    %747 = vdwg.mxu0
    %v748 = vmul.f32 %v746, 0.35355338
    %v749 = vadd.f32 %v748, %v681
    %v750 = vsel %vm370, %v749, -inf
    %751 = vmax.xlane.f32.xlu0 %v750
    %v752 = vpop.xlane.xlu0 %751
    %v753 = vsub.f32 %v749, %v752
    %v754 = vmul.f32 %v753, 1.442695
    %v755 = vpow.pop %v754
    %v756 = vsel %vm370, %v755, 0.0
    %757 = vadd.xlane.f32.xlu0 %v756
    %v758 = vpop.xlane.xlu0 %757
    %v759 = vrcp.pop %v758
    %v760 = vmul.f32 %v755, %v759
    %761 = vrot.lane.b32.xlu0 %v365, 56
    %v762 = vpop.permute.xlu0 %761
    %v765 = vsel %vm370, %v760, 0
    %767 = vmatpush.msra.mxu0 0.0
    %768 = vmatpush.msra.mxu0 0.0
    %769 = vmatpush.msra.mxu0 0.0
    %770 = vmatpush.msra.mxu0 0.0
    %771 = vmatpush.msra.mxu0 0.0
    %772 = vmatpush.msra.mxu0 0.0
    %773 = vmatpush.msra.mxu0 0.0
    %774 = vmatpush.msra.mxu0 0.0
    %775 = vmatpush.msra.mxu0 0.0
    %776 = vmatpush.msra.mxu0 0.0
    %777 = vmatpush.msra.mxu0 0.0
    %778 = vmatpush.msra.mxu0 0.0
    %779 = vmatpush.msra.mxu0 0.0
    %780 = vmatpush.msra.mxu0 0.0
    %781 = vmatpush.msra.mxu0 0.0
    %782 = vmatpush.msra.mxu0 %v762
    %783 = vmatmul.f32.gmra.mxu0 %v765
    %v784 = vpop.f32.mrf.mxu0
    %v785 = vadd.f32 0.0, %v784
    %786 = vdwg.mxu0
    %787 = vrot.lane.b32.xlu0 %v365, 112
    %v788 = vpop.permute.xlu0 %787
    %789 = vrot.lane.b32.xlu0 %v365, 80
    %v790 = vpop.permute.xlu0 %789
    %v791 = vsel %vm370, %v788, 0
    %v793 = vsel %vm370, %v790, 0
    %795 = vmatpush.xpose.msra.mxu0 0.0
    %796 = vmatpush.xpose.msra.mxu0 0.0
    %797 = vmatpush.xpose.msra.mxu0 0.0
    %798 = vmatpush.xpose.msra.mxu0 0.0
    %799 = vmatpush.xpose.msra.mxu0 0.0
    %800 = vmatpush.xpose.msra.mxu0 0.0
    %801 = vmatpush.xpose.msra.mxu0 0.0
    %802 = vmatpush.xpose.msra.mxu0 0.0
    %803 = vmatpush.xpose.msra.mxu0 0.0
    %804 = vmatpush.xpose.msra.mxu0 0.0
    %805 = vmatpush.xpose.msra.mxu0 0.0
    %806 = vmatpush.xpose.msra.mxu0 0.0
    %807 = vmatpush.xpose.msra.mxu0 0.0
    %808 = vmatpush.xpose.msra.mxu0 0.0
    %809 = vmatpush.xpose.msra.mxu0 0.0
    %810 = vmatpush.xpose.msra.mxu0 %v793
    %811 = vmatmul.f32.gmra.mxu0 %v791
    %v812 = vpop.f32.mrf.mxu0
    %v813 = vadd.f32 0.0, %v812
    %814 = vdwg.mxu0
    %v815 = vmul.f32 %v813, 0.35355338
    %v816 = vadd.f32 %v815, %v681
    %v817 = vsel %vm370, %v816, -inf
    %818 = vmax.xlane.f32.xlu0 %v817
    %v819 = vpop.xlane.xlu0 %818
    %v820 = vsub.f32 %v816, %v819
    %v821 = vmul.f32 %v820, 1.442695
    %v822 = vpow.pop %v821
    %v823 = vsel %vm370, %v822, 0.0
    %824 = vadd.xlane.f32.xlu0 %v823
    %v825 = vpop.xlane.xlu0 %824
    %v826 = vrcp.pop %v825
    %v827 = vmul.f32 %v822, %v826
    %828 = vrot.lane.b32.xlu0 %v365, 48
    %v829 = vpop.permute.xlu0 %828
    %v832 = vsel %vm370, %v827, 0
    %834 = vmatpush.msra.mxu0 0.0
    %835 = vmatpush.msra.mxu0 0.0
    %836 = vmatpush.msra.mxu0 0.0
    %837 = vmatpush.msra.mxu0 0.0
    %838 = vmatpush.msra.mxu0 0.0
    %839 = vmatpush.msra.mxu0 0.0
    %840 = vmatpush.msra.mxu0 0.0
    %841 = vmatpush.msra.mxu0 0.0
    %842 = vmatpush.msra.mxu0 0.0
    %843 = vmatpush.msra.mxu0 0.0
    %844 = vmatpush.msra.mxu0 0.0
    %845 = vmatpush.msra.mxu0 0.0
    %846 = vmatpush.msra.mxu0 0.0
    %847 = vmatpush.msra.mxu0 0.0
    %848 = vmatpush.msra.mxu0 0.0
    %849 = vmatpush.msra.mxu0 %v829
    %850 = vmatmul.f32.gmra.mxu0 %v832
    %v851 = vpop.f32.mrf.mxu0
    %v852 = vadd.f32 0.0, %v851
    %853 = vdwg.mxu0
    %854 = vrot.lane.b32.xlu0 %v365, 104
    %v855 = vpop.permute.xlu0 %854
    %856 = vrot.lane.b32.xlu0 %v365, 72
    %v857 = vpop.permute.xlu0 %856
    %v858 = vsel %vm370, %v855, 0
    %v860 = vsel %vm370, %v857, 0
    %862 = vmatpush.xpose.msra.mxu0 0.0
    %863 = vmatpush.xpose.msra.mxu0 0.0
    %864 = vmatpush.xpose.msra.mxu0 0.0
    %865 = vmatpush.xpose.msra.mxu0 0.0
    %866 = vmatpush.xpose.msra.mxu0 0.0
    %867 = vmatpush.xpose.msra.mxu0 0.0
    %868 = vmatpush.xpose.msra.mxu0 0.0
    %869 = vmatpush.xpose.msra.mxu0 0.0
    %870 = vmatpush.xpose.msra.mxu0 0.0
    %871 = vmatpush.xpose.msra.mxu0 0.0
    %872 = vmatpush.xpose.msra.mxu0 0.0
    %873 = vmatpush.xpose.msra.mxu0 0.0
    %874 = vmatpush.xpose.msra.mxu0 0.0
    %875 = vmatpush.xpose.msra.mxu0 0.0
    %876 = vmatpush.xpose.msra.mxu0 0.0
    %877 = vmatpush.xpose.msra.mxu0 %v860
    %878 = vmatmul.f32.gmra.mxu0 %v858
    %v879 = vpop.f32.mrf.mxu0
    %v880 = vadd.f32 0.0, %v879
    %881 = vdwg.mxu0
    %v882 = vmul.f32 %v880, 0.35355338
    %v883 = vadd.f32 %v882, %v681
    %v884 = vsel %vm370, %v883, -inf
    %885 = vmax.xlane.f32.xlu0 %v884
    %v886 = vpop.xlane.xlu0 %885
    %v887 = vsub.f32 %v883, %v886
    %v888 = vmul.f32 %v887, 1.442695
    %v889 = vpow.pop %v888
    %v890 = vsel %vm370, %v889, 0.0
    %891 = vadd.xlane.f32.xlu0 %v890
    %v892 = vpop.xlane.xlu0 %891
    %v893 = vrcp.pop %v892
    %v894 = vmul.f32 %v889, %v893
    %895 = vrot.lane.b32.xlu0 %v365, 40
    %v896 = vpop.permute.xlu0 %895
    %v899 = vsel %vm370, %v894, 0
    %901 = vmatpush.msra.mxu0 0.0
    %902 = vmatpush.msra.mxu0 0.0
    %903 = vmatpush.msra.mxu0 0.0
    %904 = vmatpush.msra.mxu0 0.0
    %905 = vmatpush.msra.mxu0 0.0
    %906 = vmatpush.msra.mxu0 0.0
    %907 = vmatpush.msra.mxu0 0.0
    %908 = vmatpush.msra.mxu0 0.0
    %909 = vmatpush.msra.mxu0 0.0
    %910 = vmatpush.msra.mxu0 0.0
    %911 = vmatpush.msra.mxu0 0.0
    %912 = vmatpush.msra.mxu0 0.0
    %913 = vmatpush.msra.mxu0 0.0
    %914 = vmatpush.msra.mxu0 0.0
    %915 = vmatpush.msra.mxu0 0.0
    %916 = vmatpush.msra.mxu0 %v896
    %917 = vmatmul.f32.gmra.mxu0 %v899
    %v918 = vpop.f32.mrf.mxu0
    %v919 = vadd.f32 0.0, %v918
    %920 = vdwg.mxu0
    %922 = vrot.lane.b32.xlu0 %v785, 8
    %v923 = vpop.permute.xlu0 %922
    %926 = vrot.lane.b32.xlu0 %v852, 16
    %v927 = vpop.permute.xlu0 %926
    %930 = vrot.lane.b32.xlu0 %v919, 24
    %v931 = vpop.permute.xlu0 %930
    %v933 = vsel %vm370, %v718, %v923
    %v934 = vsel %vm649, %v933, %v927
    %v935 = vsel %vm651, %v934, %v931
    %v936 = vld [vmem:[%s6] sm:$0xff]
    %v937 = vld [vmem:[%s6 + $0x8] sm:$0xff]
    %v938 = vld [vmem:[%s6 + $0x10] sm:$0xff]
    %v939 = vld [vmem:[%s6 + $0x18] sm:$0xff]
    %v940 = vld [vmem:[#allocation7] sm:$0x1]
    %v942 = vperm.slane %v940, 0
    %v945 = vsel %vm268, %v652, 0
    %v948 = vsel %vm268, %v935, 0
    %950 = vmatpush.msra.mxu0 0.0
    %951 = vmatpush.msra.mxu0 0.0
    %952 = vmatpush.msra.mxu0 0.0
    %953 = vmatpush.msra.mxu0 0.0
    %954 = vmatpush.msra.mxu0 0.0
    %955 = vmatpush.msra.mxu0 0.0
    %956 = vmatpush.msra.mxu0 0.0
    %957 = vmatpush.msra.mxu0 0.0
    %958 = vmatpush.msra.mxu0 0.0
    %959 = vmatpush.msra.mxu0 0.0
    %960 = vmatpush.msra.mxu0 0.0
    %961 = vmatpush.msra.mxu0 0.0
    %962 = vmatpush.msra.mxu0 %v939
    %963 = vmatpush.msra.mxu0 %v938
    %964 = vmatpush.msra.mxu0 %v937
    %965 = vmatpush.msra.mxu0 %v936
    %966 = vmatmul.f32.gmra.mxu0 %v945
    %v967 = vpop.f32.mrf.mxu0
    %v968 = vadd.f32 %v942, %v967
    %969 = vmatmul.f32.gmra.mxu0 %v948
    %v970 = vpop.f32.mrf.mxu0
    %v971 = vadd.f32 %v942, %v970
    %972 = vdwg.mxu0
    %v973 = vadd.f32 %v328, %v968
    %v974 = vadd.f32 %v329, %v971
    %v975 = vld [vmem:[#allocation9] sm:$0x1]
    %v976 = vld [vmem:[#allocation10] sm:$0x1]
    %v977 = vsel %vm268, %v973, 0.0
    %978 = vadd.xlane.f32.xlu0 %v977
    %v979 = vpop.xlane.xlu0 %978
    %v980 = vsel %vm268, %v974, 0.0
    %981 = vadd.xlane.f32.xlu0 %v980
    %v982 = vpop.xlane.xlu0 %981
    %v983 = vmul.f32 %v979, %v281
    %v984 = vmul.f32 %v982, %v281
    %v985 = vsub.f32 %v973, %v983
    %v986 = vsub.f32 %v974, %v984
    %v987 = vmul.f32 %v985, %v985
    %v988 = vmul.f32 %v986, %v986
    %v989 = vsel %vm268, %v987, 0.0
    %990 = vadd.xlane.f32.xlu0 %v989
    %v991 = vpop.xlane.xlu0 %990
    %v992 = vsel %vm268, %v988, 0.0
    %993 = vadd.xlane.f32.xlu0 %v992
    %v994 = vpop.xlane.xlu0 %993
    %v995 = vmul.f32 %v991, %v281
    %v996 = vmul.f32 %v994, %v281
    %v997 = vadd.f32 %v995, 1e-05
    %v998 = vadd.f32 %v996, 1e-05
    %v999 = vrsqrt.pop %v997
    %v1000 = vmul.f32 %v999, %v997
    %v1001 = vmul.f32 %v1000, %v999
    %v1002 = vmul.f32 0.5, %v1001
    %v1003 = vsub.f32 1.5, %v1002
    %v1004 = vmul.f32 %v999, %v1003
    %vm1005 = vweird.f32 %v997
    %vm1006 = vweird.f32 %v999
    %vm1007 = vmor %vm1005, %vm1006
    %v1008 = vsel %vm1007, %v999, %v1004
    %v1009 = vrsqrt.pop %v998
    %v1010 = vmul.f32 %v1009, %v998
    %v1011 = vmul.f32 %v1010, %v1009
    %v1012 = vmul.f32 0.5, %v1011
    %v1013 = vsub.f32 1.5, %v1012
    %v1014 = vmul.f32 %v1009, %v1013
    %vm1015 = vweird.f32 %v998
    %vm1016 = vweird.f32 %v1009
    %vm1017 = vmor %vm1015, %vm1016
    %v1018 = vsel %vm1017, %v1009, %v1014
    %v1019 = vmul.f32 %v985, %v1008
    %v1020 = vmul.f32 %v986, %v1018
    %v1022 = vperm.slane %v975, 0
    %v1024 = vmul.f32 %v1019, %v1022
    %v1025 = vmul.f32 %v1020, %v1022
    %v1027 = vperm.slane %v976, 0
    %v1029 = vadd.f32 %v1024, %v1027
    %v1030 = vadd.f32 %v1025, %v1027
    %v1031 = vld [vmem:[%s10] sm:$0xff]
    %v1032 = vld [vmem:[%s10 + $0x8] sm:$0xff]
    %v1033 = vld [vmem:[%s10 + $0x10] sm:$0xff]
    %v1034 = vld [vmem:[%s10 + $0x18] sm:$0xff]
    %v1035 = vld [vmem:[#allocation12] sm:$0x1]
    %v1037 = vperm.slane %v1035, 0
    %v1040 = vsel %vm268, %v1029, 0
    %v1043 = vsel %vm268, %v1030, 0
    %1045 = vmatpush.msra.mxu0 0.0
    %1046 = vmatpush.msra.mxu0 0.0
    %1047 = vmatpush.msra.mxu0 0.0
    %1048 = vmatpush.msra.mxu0 0.0
    %1049 = vmatpush.msra.mxu0 0.0
    %1050 = vmatpush.msra.mxu0 0.0
    %1051 = vmatpush.msra.mxu0 0.0
    %1052 = vmatpush.msra.mxu0 0.0
    %1053 = vmatpush.msra.mxu0 0.0
    %1054 = vmatpush.msra.mxu0 0.0
    %1055 = vmatpush.msra.mxu0 0.0
    %1056 = vmatpush.msra.mxu0 0.0
    %1057 = vmatpush.msra.mxu0 %v1034
    %1058 = vmatpush.msra.mxu0 %v1033
    %1059 = vmatpush.msra.mxu0 %v1032
    %1060 = vmatpush.msra.mxu0 %v1031
    %1061 = vmatmul.f32.gmra.mxu0 %v1040
    %v1062 = vpop.f32.mrf.mxu0
    %v1063 = vadd.f32 %v1037, %v1062
    %1064 = vmatmul.f32.gmra.mxu0 %v1043
    %v1065 = vpop.f32.mrf.mxu0
    %v1066 = vadd.f32 %v1037, %v1065
    %1067 = vdwg.mxu0
    %v1068 = vmul.f32 %v1063, %v1063
    %v1069 = vmul.f32 %v1066, %v1066
    %v1070 = vmul.f32 %v1063, %v1068
    %v1071 = vmul.f32 %v1066, %v1069
    %v1072 = vmul.f32 %v1070, 0.044715
    %v1073 = vmul.f32 %v1071, 0.044715
    %v1074 = vadd.f32 %v1063, %v1072
    %v1075 = vadd.f32 %v1066, %v1073
    %v1076 = vmul.f32 %v1074, 0.7978846
    %v1077 = vmul.f32 %v1075, 0.7978846
    %v1078 = vtanh.pop %v1076
    %v1079 = vtanh.pop %v1077
    %v1080 = vadd.f32 %v1078, 1.0
    %v1081 = vadd.f32 %v1079, 1.0
    %v1082 = vmul.f32 %v1080, 0.5
    %v1083 = vmul.f32 %v1081, 0.5
    %v1084 = vmul.f32 %v1063, %v1082
    %v1085 = vmul.f32 %v1066, %v1083
    %v1086 = vld [vmem:[%s12] sm:$0xff]
    %v1087 = vld [vmem:[%s12 + $0x8] sm:$0xff]
    %v1088 = vld [vmem:[%s12 + $0x10] sm:$0xff]
    %v1089 = vld [vmem:[%s12 + $0x18] sm:$0xff]
    %v1090 = vld [vmem:[%s12 + $0x20] sm:$0xff]
    %v1091 = vld [vmem:[%s12 + $0x28] sm:$0xff]
    %v1092 = vld [vmem:[%s12 + $0x30] sm:$0xff]
    %v1093 = vld [vmem:[%s12 + $0x38] sm:$0xff]
    %v1094 = vld [vmem:[#allocation13] sm:$0x1]
    %v1096 = vperm.slane %v1094, 0
    %vm1098 = vcmask 523264
    %v1100 = vsel %vm1098, %v1084, 0
    %v1103 = vsel %vm1098, %v1085, 0
    %1105 = vmatpush.msra.mxu0 0.0
    %1106 = vmatpush.msra.mxu0 0.0
    %1107 = vmatpush.msra.mxu0 0.0
    %1108 = vmatpush.msra.mxu0 0.0
    %1109 = vmatpush.msra.mxu0 0.0
    %1110 = vmatpush.msra.mxu0 0.0
    %1111 = vmatpush.msra.mxu0 0.0
    %1112 = vmatpush.msra.mxu0 0.0
    %1113 = vmatpush.msra.mxu0 %v1093
    %1114 = vmatpush.msra.mxu0 %v1092
    %1115 = vmatpush.msra.mxu0 %v1091
    %1116 = vmatpush.msra.mxu0 %v1090
    %1117 = vmatpush.msra.mxu0 %v1089
    %1118 = vmatpush.msra.mxu0 %v1088
    %1119 = vmatpush.msra.mxu0 %v1087
    %1120 = vmatpush.msra.mxu0 %v1086
    %1121 = vmatmul.f32.gmra.mxu0 %v1100
    %v1122 = vpop.f32.mrf.mxu0
    %v1123 = vadd.f32 %v1096, %v1122
    %1124 = vmatmul.f32.gmra.mxu0 %v1103
    %v1125 = vpop.f32.mrf.mxu0
    %v1126 = vadd.f32 %v1096, %v1125
    %1127 = vdwg.mxu0
    %v1128 = vadd.f32 %v1029, %v1123
    %v1129 = vadd.f32 %v1030, %v1126
    %v1130 = vld [vmem:[#allocation15] sm:$0x1]
    %v1131 = vld [vmem:[#allocation16] sm:$0x1]
    %v1132 = vsel %vm268, %v1128, 0.0
    %1133 = vadd.xlane.f32.xlu0 %v1132
    %v1134 = vpop.xlane.xlu0 %1133
    %v1135 = vsel %vm268, %v1129, 0.0
    %1136 = vadd.xlane.f32.xlu0 %v1135
    %v1137 = vpop.xlane.xlu0 %1136
    %v1138 = vmul.f32 %v1134, %v281
    %v1139 = vmul.f32 %v1137, %v281
    %v1140 = vsub.f32 %v1128, %v1138
    %v1141 = vsub.f32 %v1129, %v1139
    %v1142 = vmul.f32 %v1140, %v1140
    %v1143 = vmul.f32 %v1141, %v1141
    %v1144 = vsel %vm268, %v1142, 0.0
    %1145 = vadd.xlane.f32.xlu0 %v1144
    %v1146 = vpop.xlane.xlu0 %1145
    %v1147 = vsel %vm268, %v1143, 0.0
    %1148 = vadd.xlane.f32.xlu0 %v1147
    %v1149 = vpop.xlane.xlu0 %1148
    %v1150 = vmul.f32 %v1146, %v281
    %v1151 = vmul.f32 %v1149, %v281
    %v1152 = vadd.f32 %v1150, 1e-05
    %v1153 = vadd.f32 %v1151, 1e-05
    %v1154 = vrsqrt.pop %v1152
    %v1155 = vmul.f32 %v1154, %v1152
    %v1156 = vmul.f32 %v1155, %v1154
    %v1157 = vmul.f32 0.5, %v1156
    %v1158 = vsub.f32 1.5, %v1157
    %v1159 = vmul.f32 %v1154, %v1158
    %vm1160 = vweird.f32 %v1152
    %vm1161 = vweird.f32 %v1154
    %vm1162 = vmor %vm1160, %vm1161
    %v1163 = vsel %vm1162, %v1154, %v1159
    %v1164 = vrsqrt.pop %v1153
    %v1165 = vmul.f32 %v1164, %v1153
    %v1166 = vmul.f32 %v1165, %v1164
    %v1167 = vmul.f32 0.5, %v1166
    %v1168 = vsub.f32 1.5, %v1167
    %v1169 = vmul.f32 %v1164, %v1168
    %vm1170 = vweird.f32 %v1153
    %vm1171 = vweird.f32 %v1164
    %vm1172 = vmor %vm1170, %vm1171
    %v1173 = vsel %vm1172, %v1164, %v1169
    %v1174 = vmul.f32 %v1140, %v1163
    %v1175 = vmul.f32 %v1141, %v1173
    %v1177 = vperm.slane %v1130, 0
    %v1179 = vmul.f32 %v1174, %v1177
    %v1180 = vmul.f32 %v1175, %v1177
    %v1182 = vperm.slane %v1131, 0
    %v1184 = vadd.f32 %v1179, %v1182
    %v1185 = vadd.f32 %v1180, %v1182
    %s1186 = scalar_lea.vmem %s4, 32
    %v1187 = vld [vmem:[%s1186] sm:$0xff]
    %v1188 = vld [vmem:[%s1186 + $0x8] sm:$0xff]
    %v1189 = vld [vmem:[%s1186 + $0x10] sm:$0xff]
    %v1190 = vld [vmem:[%s1186 + $0x18] sm:$0xff]
    %s1191 = scalar_lea.vmem [#allocation6], 1
    %v1192 = vld [vmem:[%s1191] sm:$0x1]
    %v1194 = vperm.slane %v1192, 0
    %v1197 = vsel %vm268, %v1184, 0
    %v1200 = vsel %vm268, %v1185, 0
    %1202 = vmatpush.msra.mxu0 0.0
    %1203 = vmatpush.msra.mxu0 0.0
    %1204 = vmatpush.msra.mxu0 0.0
    %1205 = vmatpush.msra.mxu0 0.0
    %1206 = vmatpush.msra.mxu0 0.0
    %1207 = vmatpush.msra.mxu0 0.0
    %1208 = vmatpush.msra.mxu0 0.0
    %1209 = vmatpush.msra.mxu0 0.0
    %1210 = vmatpush.msra.mxu0 0.0
    %1211 = vmatpush.msra.mxu0 0.0
    %1212 = vmatpush.msra.mxu0 0.0
    %1213 = vmatpush.msra.mxu0 0.0
    %1214 = vmatpush.msra.mxu0 %v1190
    %1215 = vmatpush.msra.mxu0 %v1189
    %1216 = vmatpush.msra.mxu0 %v1188
    %1217 = vmatpush.msra.mxu0 %v1187
    %1218 = vmatmul.f32.gmra.mxu0 %v1197
    %v1219 = vpop.f32.mrf.mxu0
    %v1220 = vadd.f32 %v1194, %v1219
    %1221 = vmatmul.f32.gmra.mxu0 %v1200
    %v1222 = vpop.f32.mrf.mxu0
    %v1223 = vadd.f32 %v1194, %v1222
    %1224 = vdwg.mxu0
    %1226 = vrot.lane.b32.xlu0 %v1220, 96
    %v1227 = vpop.permute.xlu0 %1226
    %v1228 = vsel %vm370, %v1220, 0
    %v1230 = vsel %vm370, %v1227, 0
    %1232 = vmatpush.xpose.msra.mxu0 0.0
    %1233 = vmatpush.xpose.msra.mxu0 0.0
    %1234 = vmatpush.xpose.msra.mxu0 0.0
    %1235 = vmatpush.xpose.msra.mxu0 0.0
    %1236 = vmatpush.xpose.msra.mxu0 0.0
    %1237 = vmatpush.xpose.msra.mxu0 0.0
    %1238 = vmatpush.xpose.msra.mxu0 0.0
    %1239 = vmatpush.xpose.msra.mxu0 0.0
    %1240 = vmatpush.xpose.msra.mxu0 0.0
    %1241 = vmatpush.xpose.msra.mxu0 0.0
    %1242 = vmatpush.xpose.msra.mxu0 0.0
    %1243 = vmatpush.xpose.msra.mxu0 0.0
    %1244 = vmatpush.xpose.msra.mxu0 0.0
    %1245 = vmatpush.xpose.msra.mxu0 0.0
    %1246 = vmatpush.xpose.msra.mxu0 0.0
    %1247 = vmatpush.xpose.msra.mxu0 %v1230
    %1248 = vmatmul.f32.gmra.mxu0 %v1228
    %v1249 = vpop.f32.mrf.mxu0
    %v1250 = vadd.f32 0.0, %v1249
    %1251 = vdwg.mxu0
    %v1252 = vmul.f32 %v1250, 0.35355338
    %v1253 = vadd.f32 %v1252, %v396
    %v1254 = vsel %vm370, %v1253, -inf
    %1255 = vmax.xlane.f32.xlu0 %v1254
    %v1256 = vpop.xlane.xlu0 %1255
    %v1257 = vsub.f32 %v1253, %v1256
    %v1258 = vmul.f32 %v1257, 1.442695
    %v1259 = vpow.pop %v1258
    %v1260 = vsel %vm370, %v1259, 0.0
    %1261 = vadd.xlane.f32.xlu0 %v1260
    %v1262 = vpop.xlane.xlu0 %1261
    %v1263 = vrcp.pop %v1262
    %v1264 = vmul.f32 %v1259, %v1263
    %1265 = vrot.lane.b32.xlu0 %v1220, 64
    %v1266 = vpop.permute.xlu0 %1265
    %v1269 = vsel %vm370, %v1264, 0
    %1271 = vmatpush.msra.mxu0 0.0
    %1272 = vmatpush.msra.mxu0 0.0
    %1273 = vmatpush.msra.mxu0 0.0
    %1274 = vmatpush.msra.mxu0 0.0
    %1275 = vmatpush.msra.mxu0 0.0
    %1276 = vmatpush.msra.mxu0 0.0
    %1277 = vmatpush.msra.mxu0 0.0
    %1278 = vmatpush.msra.mxu0 0.0
    %1279 = vmatpush.msra.mxu0 0.0
    %1280 = vmatpush.msra.mxu0 0.0
    %1281 = vmatpush.msra.mxu0 0.0
    %1282 = vmatpush.msra.mxu0 0.0
    %1283 = vmatpush.msra.mxu0 0.0
    %1284 = vmatpush.msra.mxu0 0.0
    %1285 = vmatpush.msra.mxu0 0.0
    %1286 = vmatpush.msra.mxu0 %v1266
    %1287 = vmatmul.f32.gmra.mxu0 %v1269
    %v1288 = vpop.f32.mrf.mxu0
    %v1289 = vadd.f32 0.0, %v1288
    %1290 = vdwg.mxu0
    %1291 = vrot.lane.b32.xlu0 %v1220, 120
    %v1292 = vpop.permute.xlu0 %1291
    %1293 = vrot.lane.b32.xlu0 %v1220, 88
    %v1294 = vpop.permute.xlu0 %1293
    %v1295 = vsel %vm370, %v1292, 0
    %v1297 = vsel %vm370, %v1294, 0
    %1299 = vmatpush.xpose.msra.mxu0 0.0
    %1300 = vmatpush.xpose.msra.mxu0 0.0
    %1301 = vmatpush.xpose.msra.mxu0 0.0
    %1302 = vmatpush.xpose.msra.mxu0 0.0
    %1303 = vmatpush.xpose.msra.mxu0 0.0
    %1304 = vmatpush.xpose.msra.mxu0 0.0
    %1305 = vmatpush.xpose.msra.mxu0 0.0
    %1306 = vmatpush.xpose.msra.mxu0 0.0
    %1307 = vmatpush.xpose.msra.mxu0 0.0
    %1308 = vmatpush.xpose.msra.mxu0 0.0
    %1309 = vmatpush.xpose.msra.mxu0 0.0
    %1310 = vmatpush.xpose.msra.mxu0 0.0
    %1311 = vmatpush.xpose.msra.mxu0 0.0
    %1312 = vmatpush.xpose.msra.mxu0 0.0
    %1313 = vmatpush.xpose.msra.mxu0 0.0
    %1314 = vmatpush.xpose.msra.mxu0 %v1297
    %1315 = vmatmul.f32.gmra.mxu0 %v1295
    %v1316 = vpop.f32.mrf.mxu0
    %v1317 = vadd.f32 0.0, %v1316
    %1318 = vdwg.mxu0
    %v1319 = vmul.f32 %v1317, 0.35355338
    %v1320 = vadd.f32 %v1319, %v396
    %v1321 = vsel %vm370, %v1320, -inf
    %1322 = vmax.xlane.f32.xlu0 %v1321
    %v1323 = vpop.xlane.xlu0 %1322
    %v1324 = vsub.f32 %v1320, %v1323
    %v1325 = vmul.f32 %v1324, 1.442695
    %v1326 = vpow.pop %v1325
    %v1327 = vsel %vm370, %v1326, 0.0
    %1328 = vadd.xlane.f32.xlu0 %v1327
    %v1329 = vpop.xlane.xlu0 %1328
    %v1330 = vrcp.pop %v1329
    %v1331 = vmul.f32 %v1326, %v1330
    %1332 = vrot.lane.b32.xlu0 %v1220, 56
    %v1333 = vpop.permute.xlu0 %1332
    %v1336 = vsel %vm370, %v1331, 0
    %1338 = vmatpush.msra.mxu0 0.0
    %1339 = vmatpush.msra.mxu0 0.0
    %1340 = vmatpush.msra.mxu0 0.0
    %1341 = vmatpush.msra.mxu0 0.0
    %1342 = vmatpush.msra.mxu0 0.0
    %1343 = vmatpush.msra.mxu0 0.0
    %1344 = vmatpush.msra.mxu0 0.0
    %1345 = vmatpush.msra.mxu0 0.0
    %1346 = vmatpush.msra.mxu0 0.0
    %1347 = vmatpush.msra.mxu0 0.0
    %1348 = vmatpush.msra.mxu0 0.0
    %1349 = vmatpush.msra.mxu0 0.0
    %1350 = vmatpush.msra.mxu0 0.0
    %1351 = vmatpush.msra.mxu0 0.0
    %1352 = vmatpush.msra.mxu0 0.0
    %1353 = vmatpush.msra.mxu0 %v1333
    %1354 = vmatmul.f32.gmra.mxu0 %v1336
    %v1355 = vpop.f32.mrf.mxu0
    %v1356 = vadd.f32 0.0, %v1355
    %1357 = vdwg.mxu0
    %1358 = vrot.lane.b32.xlu0 %v1220, 112
    %v1359 = vpop.permute.xlu0 %1358
    %1360 = vrot.lane.b32.xlu0 %v1220, 80
    %v1361 = vpop.permute.xlu0 %1360
    %v1362 = vsel %vm370, %v1359, 0
    %v1364 = vsel %vm370, %v1361, 0
    %1366 = vmatpush.xpose.msra.mxu0 0.0
    %1367 = vmatpush.xpose.msra.mxu0 0.0
    %1368 = vmatpush.xpose.msra.mxu0 0.0
    %1369 = vmatpush.xpose.msra.mxu0 0.0
    %1370 = vmatpush.xpose.msra.mxu0 0.0
    %1371 = vmatpush.xpose.msra.mxu0 0.0
    %1372 = vmatpush.xpose.msra.mxu0 0.0
    %1373 = vmatpush.xpose.msra.mxu0 0.0
    %1374 = vmatpush.xpose.msra.mxu0 0.0
    %1375 = vmatpush.xpose.msra.mxu0 0.0
    %1376 = vmatpush.xpose.msra.mxu0 0.0
    %1377 = vmatpush.xpose.msra.mxu0 0.0
    %1378 = vmatpush.xpose.msra.mxu0 0.0
    %1379 = vmatpush.xpose.msra.mxu0 0.0
    %1380 = vmatpush.xpose.msra.mxu0 0.0
    %1381 = vmatpush.xpose.msra.mxu0 %v1364
    %1382 = vmatmul.f32.gmra.mxu0 %v1362
    %v1383 = vpop.f32.mrf.mxu0
    %v1384 = vadd.f32 0.0, %v1383
    %1385 = vdwg.mxu0
    %v1386 = vmul.f32 %v1384, 0.35355338
    %v1387 = vadd.f32 %v1386, %v396
    %v1388 = vsel %vm370, %v1387, -inf
    %1389 = vmax.xlane.f32.xlu0 %v1388
    %v1390 = vpop.xlane.xlu0 %1389
    %v1391 = vsub.f32 %v1387, %v1390
    %v1392 = vmul.f32 %v1391, 1.442695
    %v1393 = vpow.pop %v1392
    %v1394 = vsel %vm370, %v1393, 0.0
    %1395 = vadd.xlane.f32.xlu0 %v1394
    %v1396 = vpop.xlane.xlu0 %1395
    %v1397 = vrcp.pop %v1396
    %v1398 = vmul.f32 %v1393, %v1397
    %1399 = vrot.lane.b32.xlu0 %v1220, 48
    %v1400 = vpop.permute.xlu0 %1399
    %v1403 = vsel %vm370, %v1398, 0
    %1405 = vmatpush.msra.mxu0 0.0
    %1406 = vmatpush.msra.mxu0 0.0
    %1407 = vmatpush.msra.mxu0 0.0
    %1408 = vmatpush.msra.mxu0 0.0
    %1409 = vmatpush.msra.mxu0 0.0
    %1410 = vmatpush.msra.mxu0 0.0
    %1411 = vmatpush.msra.mxu0 0.0
    %1412 = vmatpush.msra.mxu0 0.0
    %1413 = vmatpush.msra.mxu0 0.0
    %1414 = vmatpush.msra.mxu0 0.0
    %1415 = vmatpush.msra.mxu0 0.0
    %1416 = vmatpush.msra.mxu0 0.0
    %1417 = vmatpush.msra.mxu0 0.0
    %1418 = vmatpush.msra.mxu0 0.0
    %1419 = vmatpush.msra.mxu0 0.0
    %1420 = vmatpush.msra.mxu0 %v1400
    %1421 = vmatmul.f32.gmra.mxu0 %v1403
    %v1422 = vpop.f32.mrf.mxu0
    %v1423 = vadd.f32 0.0, %v1422
    %1424 = vdwg.mxu0
    %1425 = vrot.lane.b32.xlu0 %v1220, 104
    %v1426 = vpop.permute.xlu0 %1425
    %1427 = vrot.lane.b32.xlu0 %v1220, 72
    %v1428 = vpop.permute.xlu0 %1427
    %v1429 = vsel %vm370, %v1426, 0
    %v1431 = vsel %vm370, %v1428, 0
    %1433 = vmatpush.xpose.msra.mxu0 0.0
    %1434 = vmatpush.xpose.msra.mxu0 0.0
    %1435 = vmatpush.xpose.msra.mxu0 0.0
    %1436 = vmatpush.xpose.msra.mxu0 0.0
    %1437 = vmatpush.xpose.msra.mxu0 0.0
    %1438 = vmatpush.xpose.msra.mxu0 0.0
    %1439 = vmatpush.xpose.msra.mxu0 0.0
    %1440 = vmatpush.xpose.msra.mxu0 0.0
    %1441 = vmatpush.xpose.msra.mxu0 0.0
    %1442 = vmatpush.xpose.msra.mxu0 0.0
    %1443 = vmatpush.xpose.msra.mxu0 0.0
    %1444 = vmatpush.xpose.msra.mxu0 0.0
    %1445 = vmatpush.xpose.msra.mxu0 0.0
    %1446 = vmatpush.xpose.msra.mxu0 0.0
    %1447 = vmatpush.xpose.msra.mxu0 0.0
    %1448 = vmatpush.xpose.msra.mxu0 %v1431
    %1449 = vmatmul.f32.gmra.mxu0 %v1429
    %v1450 = vpop.f32.mrf.mxu0
    %v1451 = vadd.f32 0.0, %v1450
    %1452 = vdwg.mxu0
    %v1453 = vmul.f32 %v1451, 0.35355338
    %v1454 = vadd.f32 %v1453, %v396
    %v1455 = vsel %vm370, %v1454, -inf
    %1456 = vmax.xlane.f32.xlu0 %v1455
    %v1457 = vpop.xlane.xlu0 %1456
    %v1458 = vsub.f32 %v1454, %v1457
    %v1459 = vmul.f32 %v1458, 1.442695
    %v1460 = vpow.pop %v1459
    %v1461 = vsel %vm370, %v1460, 0.0
    %1462 = vadd.xlane.f32.xlu0 %v1461
    %v1463 = vpop.xlane.xlu0 %1462
    %v1464 = vrcp.pop %v1463
    %v1465 = vmul.f32 %v1460, %v1464
    %1466 = vrot.lane.b32.xlu0 %v1220, 40
    %v1467 = vpop.permute.xlu0 %1466
    %v1470 = vsel %vm370, %v1465, 0
    %1472 = vmatpush.msra.mxu0 0.0
    %1473 = vmatpush.msra.mxu0 0.0
    %1474 = vmatpush.msra.mxu0 0.0
    %1475 = vmatpush.msra.mxu0 0.0
    %1476 = vmatpush.msra.mxu0 0.0
    %1477 = vmatpush.msra.mxu0 0.0
    %1478 = vmatpush.msra.mxu0 0.0
    %1479 = vmatpush.msra.mxu0 0.0
    %1480 = vmatpush.msra.mxu0 0.0
    %1481 = vmatpush.msra.mxu0 0.0
    %1482 = vmatpush.msra.mxu0 0.0
    %1483 = vmatpush.msra.mxu0 0.0
    %1484 = vmatpush.msra.mxu0 0.0
    %1485 = vmatpush.msra.mxu0 0.0
    %1486 = vmatpush.msra.mxu0 0.0
    %1487 = vmatpush.msra.mxu0 %v1467
    %1488 = vmatmul.f32.gmra.mxu0 %v1470
    %v1489 = vpop.f32.mrf.mxu0
    %v1490 = vadd.f32 0.0, %v1489
    %1491 = vdwg.mxu0
    %1493 = vrot.lane.b32.xlu0 %v1356, 8
    %v1494 = vpop.permute.xlu0 %1493
    %1497 = vrot.lane.b32.xlu0 %v1423, 16
    %v1498 = vpop.permute.xlu0 %1497
    %1501 = vrot.lane.b32.xlu0 %v1490, 24
    %v1502 = vpop.permute.xlu0 %1501
    %v1504 = vsel %vm370, %v1289, %v1494
    %v1505 = vsel %vm649, %v1504, %v1498
    %v1506 = vsel %vm651, %v1505, %v1502
    %1508 = vrot.lane.b32.xlu0 %v1223, 96
    %v1509 = vpop.permute.xlu0 %1508
    %v1510 = vsel %vm370, %v1223, 0
    %v1512 = vsel %vm370, %v1509, 0
    %1514 = vmatpush.xpose.msra.mxu0 0.0
    %1515 = vmatpush.xpose.msra.mxu0 0.0
    %1516 = vmatpush.xpose.msra.mxu0 0.0
    %1517 = vmatpush.xpose.msra.mxu0 0.0
    %1518 = vmatpush.xpose.msra.mxu0 0.0
    %1519 = vmatpush.xpose.msra.mxu0 0.0
    %1520 = vmatpush.xpose.msra.mxu0 0.0
    %1521 = vmatpush.xpose.msra.mxu0 0.0
    %1522 = vmatpush.xpose.msra.mxu0 0.0
    %1523 = vmatpush.xpose.msra.mxu0 0.0
    %1524 = vmatpush.xpose.msra.mxu0 0.0
    %1525 = vmatpush.xpose.msra.mxu0 0.0
    %1526 = vmatpush.xpose.msra.mxu0 0.0
    %1527 = vmatpush.xpose.msra.mxu0 0.0
    %1528 = vmatpush.xpose.msra.mxu0 0.0
    %1529 = vmatpush.xpose.msra.mxu0 %v1512
    %1530 = vmatmul.f32.gmra.mxu0 %v1510
    %v1531 = vpop.f32.mrf.mxu0
    %v1532 = vadd.f32 0.0, %v1531
    %1533 = vdwg.mxu0
    %v1534 = vmul.f32 %v1532, 0.35355338
    %v1535 = vadd.f32 %v1534, %v681
    %v1536 = vsel %vm370, %v1535, -inf
    %1537 = vmax.xlane.f32.xlu0 %v1536
    %v1538 = vpop.xlane.xlu0 %1537
    %v1539 = vsub.f32 %v1535, %v1538
    %v1540 = vmul.f32 %v1539, 1.442695
    %v1541 = vpow.pop %v1540
    %v1542 = vsel %vm370, %v1541, 0.0
    %1543 = vadd.xlane.f32.xlu0 %v1542
    %v1544 = vpop.xlane.xlu0 %1543
    %v1545 = vrcp.pop %v1544
    %v1546 = vmul.f32 %v1541, %v1545
    %1547 = vrot.lane.b32.xlu0 %v1223, 64
    %v1548 = vpop.permute.xlu0 %1547
    %v1551 = vsel %vm370, %v1546, 0
    %1553 = vmatpush.msra.mxu0 0.0
    %1554 = vmatpush.msra.mxu0 0.0
    %1555 = vmatpush.msra.mxu0 0.0
    %1556 = vmatpush.msra.mxu0 0.0
    %1557 = vmatpush.msra.mxu0 0.0
    %1558 = vmatpush.msra.mxu0 0.0
    %1559 = vmatpush.msra.mxu0 0.0
    %1560 = vmatpush.msra.mxu0 0.0
    %1561 = vmatpush.msra.mxu0 0.0
    %1562 = vmatpush.msra.mxu0 0.0
    %1563 = vmatpush.msra.mxu0 0.0
    %1564 = vmatpush.msra.mxu0 0.0
    %1565 = vmatpush.msra.mxu0 0.0
    %1566 = vmatpush.msra.mxu0 0.0
    %1567 = vmatpush.msra.mxu0 0.0
    %1568 = vmatpush.msra.mxu0 %v1548
    %1569 = vmatmul.f32.gmra.mxu0 %v1551
    %v1570 = vpop.f32.mrf.mxu0
    %v1571 = vadd.f32 0.0, %v1570
    %1572 = vdwg.mxu0
    %1573 = vrot.lane.b32.xlu0 %v1223, 120
    %v1574 = vpop.permute.xlu0 %1573
    %1575 = vrot.lane.b32.xlu0 %v1223, 88
    %v1576 = vpop.permute.xlu0 %1575
    %v1577 = vsel %vm370, %v1574, 0
    %v1579 = vsel %vm370, %v1576, 0
    %1581 = vmatpush.xpose.msra.mxu0 0.0
    %1582 = vmatpush.xpose.msra.mxu0 0.0
    %1583 = vmatpush.xpose.msra.mxu0 0.0
    %1584 = vmatpush.xpose.msra.mxu0 0.0
    %1585 = vmatpush.xpose.msra.mxu0 0.0
    %1586 = vmatpush.xpose.msra.mxu0 0.0
    %1587 = vmatpush.xpose.msra.mxu0 0.0
    %1588 = vmatpush.xpose.msra.mxu0 0.0
    %1589 = vmatpush.xpose.msra.mxu0 0.0
    %1590 = vmatpush.xpose.msra.mxu0 0.0
    %1591 = vmatpush.xpose.msra.mxu0 0.0
    %1592 = vmatpush.xpose.msra.mxu0 0.0
    %1593 = vmatpush.xpose.msra.mxu0 0.0
    %1594 = vmatpush.xpose.msra.mxu0 0.0
    %1595 = vmatpush.xpose.msra.mxu0 0.0
    %1596 = vmatpush.xpose.msra.mxu0 %v1579
    %1597 = vmatmul.f32.gmra.mxu0 %v1577
    %v1598 = vpop.f32.mrf.mxu0
    %v1599 = vadd.f32 0.0, %v1598
    %1600 = vdwg.mxu0
    %v1601 = vmul.f32 %v1599, 0.35355338
    %v1602 = vadd.f32 %v1601, %v681
    %v1603 = vsel %vm370, %v1602, -inf
    %1604 = vmax.xlane.f32.xlu0 %v1603
    %v1605 = vpop.xlane.xlu0 %1604
    %v1606 = vsub.f32 %v1602, %v1605
    %v1607 = vmul.f32 %v1606, 1.442695
    %v1608 = vpow.pop %v1607
    %v1609 = vsel %vm370, %v1608, 0.0
    %1610 = vadd.xlane.f32.xlu0 %v1609
    %v1611 = vpop.xlane.xlu0 %1610
    %v1612 = vrcp.pop %v1611
    %v1613 = vmul.f32 %v1608, %v1612
    %1614 = vrot.lane.b32.xlu0 %v1223, 56
    %v1615 = vpop.permute.xlu0 %1614
    %v1618 = vsel %vm370, %v1613, 0
    %1620 = vmatpush.msra.mxu0 0.0
    %1621 = vmatpush.msra.mxu0 0.0
    %1622 = vmatpush.msra.mxu0 0.0
    %1623 = vmatpush.msra.mxu0 0.0
    %1624 = vmatpush.msra.mxu0 0.0
    %1625 = vmatpush.msra.mxu0 0.0
    %1626 = vmatpush.msra.mxu0 0.0
    %1627 = vmatpush.msra.mxu0 0.0
    %1628 = vmatpush.msra.mxu0 0.0
    %1629 = vmatpush.msra.mxu0 0.0
    %1630 = vmatpush.msra.mxu0 0.0
    %1631 = vmatpush.msra.mxu0 0.0
    %1632 = vmatpush.msra.mxu0 0.0
    %1633 = vmatpush.msra.mxu0 0.0
    %1634 = vmatpush.msra.mxu0 0.0
    %1635 = vmatpush.msra.mxu0 %v1615
    %1636 = vmatmul.f32.gmra.mxu0 %v1618
    %v1637 = vpop.f32.mrf.mxu0
    %v1638 = vadd.f32 0.0, %v1637
    %1639 = vdwg.mxu0
    %1640 = vrot.lane.b32.xlu0 %v1223, 112
    %v1641 = vpop.permute.xlu0 %1640
    %1642 = vrot.lane.b32.xlu0 %v1223, 80
    %v1643 = vpop.permute.xlu0 %1642
    %v1644 = vsel %vm370, %v1641, 0
    %v1646 = vsel %vm370, %v1643, 0
    %1648 = vmatpush.xpose.msra.mxu0 0.0
    %1649 = vmatpush.xpose.msra.mxu0 0.0
    %1650 = vmatpush.xpose.msra.mxu0 0.0
    %1651 = vmatpush.xpose.msra.mxu0 0.0
    %1652 = vmatpush.xpose.msra.mxu0 0.0
    %1653 = vmatpush.xpose.msra.mxu0 0.0
    %1654 = vmatpush.xpose.msra.mxu0 0.0
    %1655 = vmatpush.xpose.msra.mxu0 0.0
    %1656 = vmatpush.xpose.msra.mxu0 0.0
    %1657 = vmatpush.xpose.msra.mxu0 0.0
    %1658 = vmatpush.xpose.msra.mxu0 0.0
    %1659 = vmatpush.xpose.msra.mxu0 0.0
    %1660 = vmatpush.xpose.msra.mxu0 0.0
    %1661 = vmatpush.xpose.msra.mxu0 0.0
    %1662 = vmatpush.xpose.msra.mxu0 0.0
    %1663 = vmatpush.xpose.msra.mxu0 %v1646
    %1664 = vmatmul.f32.gmra.mxu0 %v1644
    %v1665 = vpop.f32.mrf.mxu0
    %v1666 = vadd.f32 0.0, %v1665
    %1667 = vdwg.mxu0
    %v1668 = vmul.f32 %v1666, 0.35355338
    %v1669 = vadd.f32 %v1668, %v681
    %v1670 = vsel %vm370, %v1669, -inf
    %1671 = vmax.xlane.f32.xlu0 %v1670
    %v1672 = vpop.xlane.xlu0 %1671
    %v1673 = vsub.f32 %v1669, %v1672
    %v1674 = vmul.f32 %v1673, 1.442695
    %v1675 = vpow.pop %v1674
    %v1676 = vsel %vm370, %v1675, 0.0
    %1677 = vadd.xlane.f32.xlu0 %v1676
    %v1678 = vpop.xlane.xlu0 %1677
    %v1679 = vrcp.pop %v1678
    %v1680 = vmul.f32 %v1675, %v1679
    %1681 = vrot.lane.b32.xlu0 %v1223, 48
    %v1682 = vpop.permute.xlu0 %1681
    %v1685 = vsel %vm370, %v1680, 0
    %1687 = vmatpush.msra.mxu0 0.0
    %1688 = vmatpush.msra.mxu0 0.0
    %1689 = vmatpush.msra.mxu0 0.0
    %1690 = vmatpush.msra.mxu0 0.0
    %1691 = vmatpush.msra.mxu0 0.0
    %1692 = vmatpush.msra.mxu0 0.0
    %1693 = vmatpush.msra.mxu0 0.0
    %1694 = vmatpush.msra.mxu0 0.0
    %1695 = vmatpush.msra.mxu0 0.0
    %1696 = vmatpush.msra.mxu0 0.0
    %1697 = vmatpush.msra.mxu0 0.0
    %1698 = vmatpush.msra.mxu0 0.0
    %1699 = vmatpush.msra.mxu0 0.0
    %1700 = vmatpush.msra.mxu0 0.0
    %1701 = vmatpush.msra.mxu0 0.0
    %1702 = vmatpush.msra.mxu0 %v1682
    %1703 = vmatmul.f32.gmra.mxu0 %v1685
    %v1704 = vpop.f32.mrf.mxu0
    %v1705 = vadd.f32 0.0, %v1704
    %1706 = vdwg.mxu0
    %1707 = vrot.lane.b32.xlu0 %v1223, 104
    %v1708 = vpop.permute.xlu0 %1707
    %1709 = vrot.lane.b32.xlu0 %v1223, 72
    %v1710 = vpop.permute.xlu0 %1709
    %v1711 = vsel %vm370, %v1708, 0
    %v1713 = vsel %vm370, %v1710, 0
    %1715 = vmatpush.xpose.msra.mxu0 0.0
    %1716 = vmatpush.xpose.msra.mxu0 0.0
    %1717 = vmatpush.xpose.msra.mxu0 0.0
    %1718 = vmatpush.xpose.msra.mxu0 0.0
    %1719 = vmatpush.xpose.msra.mxu0 0.0
    %1720 = vmatpush.xpose.msra.mxu0 0.0
    %1721 = vmatpush.xpose.msra.mxu0 0.0
    %1722 = vmatpush.xpose.msra.mxu0 0.0
    %1723 = vmatpush.xpose.msra.mxu0 0.0
    %1724 = vmatpush.xpose.msra.mxu0 0.0
    %1725 = vmatpush.xpose.msra.mxu0 0.0
    %1726 = vmatpush.xpose.msra.mxu0 0.0
    %1727 = vmatpush.xpose.msra.mxu0 0.0
    %1728 = vmatpush.xpose.msra.mxu0 0.0
    %1729 = vmatpush.xpose.msra.mxu0 0.0
    %1730 = vmatpush.xpose.msra.mxu0 %v1713
    %1731 = vmatmul.f32.gmra.mxu0 %v1711
    %v1732 = vpop.f32.mrf.mxu0
    %v1733 = vadd.f32 0.0, %v1732
    %1734 = vdwg.mxu0
    %v1735 = vmul.f32 %v1733, 0.35355338
    %v1736 = vadd.f32 %v1735, %v681
    %v1737 = vsel %vm370, %v1736, -inf
    %1738 = vmax.xlane.f32.xlu0 %v1737
    %v1739 = vpop.xlane.xlu0 %1738
    %v1740 = vsub.f32 %v1736, %v1739
    %v1741 = vmul.f32 %v1740, 1.442695
    %v1742 = vpow.pop %v1741
    %v1743 = vsel %vm370, %v1742, 0.0
    %1744 = vadd.xlane.f32.xlu0 %v1743
    %v1745 = vpop.xlane.xlu0 %1744
    %v1746 = vrcp.pop %v1745
    %v1747 = vmul.f32 %v1742, %v1746
    %1748 = vrot.lane.b32.xlu0 %v1223, 40
    %v1749 = vpop.permute.xlu0 %1748
    %v1752 = vsel %vm370, %v1747, 0
    %1754 = vmatpush.msra.mxu0 0.0
    %1755 = vmatpush.msra.mxu0 0.0
    %1756 = vmatpush.msra.mxu0 0.0
    %1757 = vmatpush.msra.mxu0 0.0
    %1758 = vmatpush.msra.mxu0 0.0
    %1759 = vmatpush.msra.mxu0 0.0
    %1760 = vmatpush.msra.mxu0 0.0
    %1761 = vmatpush.msra.mxu0 0.0
    %1762 = vmatpush.msra.mxu0 0.0
    %1763 = vmatpush.msra.mxu0 0.0
    %1764 = vmatpush.msra.mxu0 0.0
    %1765 = vmatpush.msra.mxu0 0.0
    %1766 = vmatpush.msra.mxu0 0.0
    %1767 = vmatpush.msra.mxu0 0.0
    %1768 = vmatpush.msra.mxu0 0.0
    %1769 = vmatpush.msra.mxu0 %v1749
    %1770 = vmatmul.f32.gmra.mxu0 %v1752
    %v1771 = vpop.f32.mrf.mxu0
    %v1772 = vadd.f32 0.0, %v1771
    %1773 = vdwg.mxu0
    %1775 = vrot.lane.b32.xlu0 %v1638, 8
    %v1776 = vpop.permute.xlu0 %1775
    %1779 = vrot.lane.b32.xlu0 %v1705, 16
    %v1780 = vpop.permute.xlu0 %1779
    %1783 = vrot.lane.b32.xlu0 %v1772, 24
    %v1784 = vpop.permute.xlu0 %1783
    %v1786 = vsel %vm370, %v1571, %v1776
    %v1787 = vsel %vm649, %v1786, %v1780
    %v1788 = vsel %vm651, %v1787, %v1784
    %s1789 = scalar_lea.vmem %s6, 32
    %v1790 = vld [vmem:[%s1789] sm:$0xff]
    %v1791 = vld [vmem:[%s1789 + $0x8] sm:$0xff]
    %v1792 = vld [vmem:[%s1789 + $0x10] sm:$0xff]
    %v1793 = vld [vmem:[%s1789 + $0x18] sm:$0xff]
    %s1794 = scalar_lea.vmem [#allocation7], 1
    %v1795 = vld [vmem:[%s1794] sm:$0x1]
    %v1797 = vperm.slane %v1795, 0
    %v1800 = vsel %vm268, %v1506, 0
    %v1803 = vsel %vm268, %v1788, 0
    %1805 = vmatpush.msra.mxu0 0.0
    %1806 = vmatpush.msra.mxu0 0.0
    %1807 = vmatpush.msra.mxu0 0.0
    %1808 = vmatpush.msra.mxu0 0.0
    %1809 = vmatpush.msra.mxu0 0.0
    %1810 = vmatpush.msra.mxu0 0.0
    %1811 = vmatpush.msra.mxu0 0.0
    %1812 = vmatpush.msra.mxu0 0.0
    %1813 = vmatpush.msra.mxu0 0.0
    %1814 = vmatpush.msra.mxu0 0.0
    %1815 = vmatpush.msra.mxu0 0.0
    %1816 = vmatpush.msra.mxu0 0.0
    %1817 = vmatpush.msra.mxu0 %v1793
    %1818 = vmatpush.msra.mxu0 %v1792
    %1819 = vmatpush.msra.mxu0 %v1791
    %1820 = vmatpush.msra.mxu0 %v1790
    %1821 = vmatmul.f32.gmra.mxu0 %v1800
    %v1822 = vpop.f32.mrf.mxu0
    %v1823 = vadd.f32 %v1797, %v1822
    %1824 = vmatmul.f32.gmra.mxu0 %v1803
    %v1825 = vpop.f32.mrf.mxu0
    %v1826 = vadd.f32 %v1797, %v1825
    %1827 = vdwg.mxu0
    %v1828 = vadd.f32 %v1184, %v1823
    %v1829 = vadd.f32 %v1185, %v1826
    %s1830 = scalar_lea.vmem [#allocation9], 1
    %v1831 = vld [vmem:[%s1830] sm:$0x1]
    %s1832 = scalar_lea.vmem [#allocation10], 1
    %v1833 = vld [vmem:[%s1832] sm:$0x1]
    %v1834 = vsel %vm268, %v1828, 0.0
    %1835 = vadd.xlane.f32.xlu0 %v1834
    %v1836 = vpop.xlane.xlu0 %1835
    %v1837 = vsel %vm268, %v1829, 0.0
    %1838 = vadd.xlane.f32.xlu0 %v1837
    %v1839 = vpop.xlane.xlu0 %1838
    %v1840 = vmul.f32 %v1836, %v281
    %v1841 = vmul.f32 %v1839, %v281
    %v1842 = vsub.f32 %v1828, %v1840
    %v1843 = vsub.f32 %v1829, %v1841
    %v1844 = vmul.f32 %v1842, %v1842
    %v1845 = vmul.f32 %v1843, %v1843
    %v1846 = vsel %vm268, %v1844, 0.0
    %1847 = vadd.xlane.f32.xlu0 %v1846
    %v1848 = vpop.xlane.xlu0 %1847
    %v1849 = vsel %vm268, %v1845, 0.0
    %1850 = vadd.xlane.f32.xlu0 %v1849
    %v1851 = vpop.xlane.xlu0 %1850
    %v1852 = vmul.f32 %v1848, %v281
    %v1853 = vmul.f32 %v1851, %v281
    %v1854 = vadd.f32 %v1852, 1e-05
    %v1855 = vadd.f32 %v1853, 1e-05
    %v1856 = vrsqrt.pop %v1854
    %v1857 = vmul.f32 %v1856, %v1854
    %v1858 = vmul.f32 %v1857, %v1856
    %v1859 = vmul.f32 0.5, %v1858
    %v1860 = vsub.f32 1.5, %v1859
    %v1861 = vmul.f32 %v1856, %v1860
    %vm1862 = vweird.f32 %v1854
    %vm1863 = vweird.f32 %v1856
    %vm1864 = vmor %vm1862, %vm1863
    %v1865 = vsel %vm1864, %v1856, %v1861
    %v1866 = vrsqrt.pop %v1855
    %v1867 = vmul.f32 %v1866, %v1855
    %v1868 = vmul.f32 %v1867, %v1866
    %v1869 = vmul.f32 0.5, %v1868
    %v1870 = vsub.f32 1.5, %v1869
    %v1871 = vmul.f32 %v1866, %v1870
    %vm1872 = vweird.f32 %v1855
    %vm1873 = vweird.f32 %v1866
    %vm1874 = vmor %vm1872, %vm1873
    %v1875 = vsel %vm1874, %v1866, %v1871
    %v1876 = vmul.f32 %v1842, %v1865
    %v1877 = vmul.f32 %v1843, %v1875
    %v1879 = vperm.slane %v1831, 0
    %v1881 = vmul.f32 %v1876, %v1879
    %v1882 = vmul.f32 %v1877, %v1879
    %v1884 = vperm.slane %v1833, 0
    %v1886 = vadd.f32 %v1881, %v1884
    %v1887 = vadd.f32 %v1882, %v1884
    %s1888 = scalar_lea.vmem %s10, 32
    %v1889 = vld [vmem:[%s1888] sm:$0xff]
    %v1890 = vld [vmem:[%s1888 + $0x8] sm:$0xff]
    %v1891 = vld [vmem:[%s1888 + $0x10] sm:$0xff]
    %v1892 = vld [vmem:[%s1888 + $0x18] sm:$0xff]
    %s1893 = scalar_lea.vmem [#allocation12], 1
    %v1894 = vld [vmem:[%s1893] sm:$0x1]
    %v1896 = vperm.slane %v1894, 0
    %v1899 = vsel %vm268, %v1886, 0
    %v1902 = vsel %vm268, %v1887, 0
    %1904 = vmatpush.msra.mxu0 0.0
    %1905 = vmatpush.msra.mxu0 0.0
    %1906 = vmatpush.msra.mxu0 0.0
    %1907 = vmatpush.msra.mxu0 0.0
    %1908 = vmatpush.msra.mxu0 0.0
    %1909 = vmatpush.msra.mxu0 0.0
    %1910 = vmatpush.msra.mxu0 0.0
    %1911 = vmatpush.msra.mxu0 0.0
    %1912 = vmatpush.msra.mxu0 0.0
    %1913 = vmatpush.msra.mxu0 0.0
    %1914 = vmatpush.msra.mxu0 0.0
    %1915 = vmatpush.msra.mxu0 0.0
    %1916 = vmatpush.msra.mxu0 %v1892
    %1917 = vmatpush.msra.mxu0 %v1891
    %1918 = vmatpush.msra.mxu0 %v1890
    %1919 = vmatpush.msra.mxu0 %v1889
    %1920 = vmatmul.f32.gmra.mxu0 %v1899
    %v1921 = vpop.f32.mrf.mxu0
    %v1922 = vadd.f32 %v1896, %v1921
    %1923 = vmatmul.f32.gmra.mxu0 %v1902
    %v1924 = vpop.f32.mrf.mxu0
    %v1925 = vadd.f32 %v1896, %v1924
    %1926 = vdwg.mxu0
    %v1927 = vmul.f32 %v1922, %v1922
    %v1928 = vmul.f32 %v1925, %v1925
    %v1929 = vmul.f32 %v1922, %v1927
    %v1930 = vmul.f32 %v1925, %v1928
    %v1931 = vmul.f32 %v1929, 0.044715
    %v1932 = vmul.f32 %v1930, 0.044715
    %v1933 = vadd.f32 %v1922, %v1931
    %v1934 = vadd.f32 %v1925, %v1932
    %v1935 = vmul.f32 %v1933, 0.7978846
    %v1936 = vmul.f32 %v1934, 0.7978846
    %v1937 = vtanh.pop %v1935
    %v1938 = vtanh.pop %v1936
    %v1939 = vadd.f32 %v1937, 1.0
    %v1940 = vadd.f32 %v1938, 1.0
    %v1941 = vmul.f32 %v1939, 0.5
    %v1942 = vmul.f32 %v1940, 0.5
    %v1943 = vmul.f32 %v1922, %v1941
    %v1944 = vmul.f32 %v1925, %v1942
    %s1945 = scalar_lea.vmem %s12, 64
    %v1946 = vld [vmem:[%s1945] sm:$0xff]
    %v1947 = vld [vmem:[%s1945 + $0x8] sm:$0xff]
    %v1948 = vld [vmem:[%s1945 + $0x10] sm:$0xff]
    %v1949 = vld [vmem:[%s1945 + $0x18] sm:$0xff]
    %v1950 = vld [vmem:[%s1945 + $0x20] sm:$0xff]
    %v1951 = vld [vmem:[%s1945 + $0x28] sm:$0xff]
    %v1952 = vld [vmem:[%s1945 + $0x30] sm:$0xff]
    %v1953 = vld [vmem:[%s1945 + $0x38] sm:$0xff]
    %s1954 = scalar_lea.vmem [#allocation13], 1
    %v1955 = vld [vmem:[%s1954] sm:$0x1]
    %v1957 = vperm.slane %v1955, 0
    %v1960 = vsel %vm1098, %v1943, 0
    %v1963 = vsel %vm1098, %v1944, 0
    %1965 = vmatpush.msra.mxu0 0.0
    %1966 = vmatpush.msra.mxu0 0.0
    %1967 = vmatpush.msra.mxu0 0.0
    %1968 = vmatpush.msra.mxu0 0.0
    %1969 = vmatpush.msra.mxu0 0.0
    %1970 = vmatpush.msra.mxu0 0.0
    %1971 = vmatpush.msra.mxu0 0.0
    %1972 = vmatpush.msra.mxu0 0.0
    %1973 = vmatpush.msra.mxu0 %v1953
    %1974 = vmatpush.msra.mxu0 %v1952
    %1975 = vmatpush.msra.mxu0 %v1951
    %1976 = vmatpush.msra.mxu0 %v1950
    %1977 = vmatpush.msra.mxu0 %v1949
    %1978 = vmatpush.msra.mxu0 %v1948
    %1979 = vmatpush.msra.mxu0 %v1947
    %1980 = vmatpush.msra.mxu0 %v1946
    %1981 = vmatmul.f32.gmra.mxu0 %v1960
    %v1982 = vpop.f32.mrf.mxu0
    %v1983 = vadd.f32 %v1957, %v1982
    %1984 = vmatmul.f32.gmra.mxu0 %v1963
    %v1985 = vpop.f32.mrf.mxu0
    %v1986 = vadd.f32 %v1957, %v1985
    %1987 = vdwg.mxu0
    %v1988 = vadd.f32 %v1886, %v1983
    %v1989 = vadd.f32 %v1887, %v1986
    %s1990 = scalar_lea.vmem [#allocation15], 1
    %v1991 = vld [vmem:[%s1990] sm:$0x1]
    %s1992 = scalar_lea.vmem [#allocation16], 1
    %v1993 = vld [vmem:[%s1992] sm:$0x1]
    %v1994 = vsel %vm268, %v1988, 0.0
    %1995 = vadd.xlane.f32.xlu0 %v1994
    %v1996 = vpop.xlane.xlu0 %1995
    %v1997 = vsel %vm268, %v1989, 0.0
    %1998 = vadd.xlane.f32.xlu0 %v1997
    %v1999 = vpop.xlane.xlu0 %1998
    %v2000 = vmul.f32 %v1996, %v281
    %v2001 = vmul.f32 %v1999, %v281
    %v2002 = vsub.f32 %v1988, %v2000
    %v2003 = vsub.f32 %v1989, %v2001
    %v2004 = vmul.f32 %v2002, %v2002
    %v2005 = vmul.f32 %v2003, %v2003
    %v2006 = vsel %vm268, %v2004, 0.0
    %2007 = vadd.xlane.f32.xlu0 %v2006
    %v2008 = vpop.xlane.xlu0 %2007
    %v2009 = vsel %vm268, %v2005, 0.0
    %2010 = vadd.xlane.f32.xlu0 %v2009
    %v2011 = vpop.xlane.xlu0 %2010
    %v2012 = vmul.f32 %v2008, %v281
    %v2013 = vmul.f32 %v2011, %v281
    %v2014 = vadd.f32 %v2012, 1e-05
    %v2015 = vadd.f32 %v2013, 1e-05
    %v2016 = vrsqrt.pop %v2014
    %v2017 = vmul.f32 %v2016, %v2014
    %v2018 = vmul.f32 %v2017, %v2016
    %v2019 = vmul.f32 0.5, %v2018
    %v2020 = vsub.f32 1.5, %v2019
    %v2021 = vmul.f32 %v2016, %v2020
    %vm2022 = vweird.f32 %v2014
    %vm2023 = vweird.f32 %v2016
    %vm2024 = vmor %vm2022, %vm2023
    %v2025 = vsel %vm2024, %v2016, %v2021
    %v2026 = vrsqrt.pop %v2015
    %v2027 = vmul.f32 %v2026, %v2015
    %v2028 = vmul.f32 %v2027, %v2026
    %v2029 = vmul.f32 0.5, %v2028
    %v2030 = vsub.f32 1.5, %v2029
    %v2031 = vmul.f32 %v2026, %v2030
    %vm2032 = vweird.f32 %v2015
    %vm2033 = vweird.f32 %v2026
    %vm2034 = vmor %vm2032, %vm2033
    %v2035 = vsel %vm2034, %v2026, %v2031
    %v2036 = vmul.f32 %v2002, %v2025
    %v2037 = vmul.f32 %v2003, %v2035
    %v2039 = vperm.slane %v1991, 0
    %v2041 = vmul.f32 %v2036, %v2039
    %v2042 = vmul.f32 %v2037, %v2039
    %v2044 = vperm.slane %v1993, 0
    %v2046 = vadd.f32 %v2041, %v2044
    %v2047 = vadd.f32 %v2042, %v2044
    %v2049 = vrot.slane %v2047, 7
    %vm2051 = vcmask 1040384
    %v2052 = vsel %vm2051, %v2046, %v2049
    %v2053 = vld [vmem:[%s16] sm:$0xff]
    %v2054 = vld [vmem:[%s16 + $0x8] sm:$0xff]
    %v2055 = vld [vmem:[%s16 + $0x10] sm:$0xff]
    %v2056 = vld [vmem:[%s16 + $0x18] sm:$0xff]
    %v2057 = vld [vmem:[#allocation18] sm:$0x1]
    %v2059 = vperm.slane %v2057, 0
    %v2062 = vsel %vm268, %v2052, 0
    %2064 = vmatpush.msra.mxu0 0.0
    %2065 = vmatpush.msra.mxu0 0.0
    %2066 = vmatpush.msra.mxu0 0.0
    %2067 = vmatpush.msra.mxu0 0.0
    %2068 = vmatpush.msra.mxu0 0.0
    %2069 = vmatpush.msra.mxu0 0.0
    %2070 = vmatpush.msra.mxu0 0.0
    %2071 = vmatpush.msra.mxu0 0.0
    %2072 = vmatpush.msra.mxu0 0.0
    %2073 = vmatpush.msra.mxu0 0.0
    %2074 = vmatpush.msra.mxu0 0.0
    %2075 = vmatpush.msra.mxu0 0.0
    %2076 = vmatpush.msra.mxu0 %v2056
    %2077 = vmatpush.msra.mxu0 %v2055
    %2078 = vmatpush.msra.mxu0 %v2054
    %2079 = vmatpush.msra.mxu0 %v2053
    %2080 = vmatmul.f32.gmra.mxu0 %v2062
    %v2081 = vpop.f32.mrf.mxu0
    %v2082 = vadd.f32 %v2059, %v2081
    %2083 = vdwg.mxu0
    %v2084 = vtanh.pop %v2082
    %v2085 = vld [vmem:[%s18] sm:$0xff]
    %v2086 = vld [vmem:[%s18 + $0x8] sm:$0xff]
    %v2087 = vld [vmem:[%s18 + $0x10] sm:$0xff]
    %v2088 = vld [vmem:[%s18 + $0x18] sm:$0xff]
    %v2089 = vld [vmem:[#allocation19] sm:$0x1]
    %v2091 = vperm.slane %v2089, 0
    %v2094 = vsel %vm268, %v2046, 0
    %v2096 = vsel %vm268, %v2047, 0
    %v2099 = vsel %vm268, %v2084, 0
    %2101 = vmatpush.msra.mxu0 0.0
    %2102 = vmatpush.msra.mxu0 0.0
    %2103 = vmatpush.msra.mxu0 0.0
    %2104 = vmatpush.msra.mxu0 0.0
    %2105 = vmatpush.msra.mxu0 0.0
    %2106 = vmatpush.msra.mxu0 0.0
    %2107 = vmatpush.msra.mxu0 0.0
    %2108 = vmatpush.msra.mxu0 0.0
    %2109 = vmatpush.msra.mxu0 0.0
    %2110 = vmatpush.msra.mxu0 0.0
    %2111 = vmatpush.msra.mxu0 0.0
    %2112 = vmatpush.msra.mxu0 0.0
    %2113 = vmatpush.msra.mxu0 %v2088
    %2114 = vmatpush.msra.mxu0 %v2087
    %2115 = vmatpush.msra.mxu0 %v2086
    %2116 = vmatpush.msra.mxu0 %v2085
    %2117 = vmatmul.f32.gmra.mxu0 %v2094
    %v2118 = vpop.f32.mrf.mxu0
    %v2119 = vadd.f32 %v2091, %v2118
    %2120 = vmatmul.f32.gmra.mxu0 %v2096
    %v2121 = vpop.f32.mrf.mxu0
    %v2122 = vadd.f32 %v2091, %v2121
    %2123 = vmatmul.f32.gmra.mxu0 %v2099
    %v2124 = vpop.f32.mrf.mxu0
    %v2125 = vadd.f32 %v2091, %v2124
    %2126 = vdwg.mxu0
    %v2127 = vld [vmem:[#allocation21] sm:$0x1]
    %v2128 = vld [vmem:[%s21] sm:$0x1]
    %v2129 = vsel %vm649, %v2119, 0.0
    %2130 = vadd.xlane.f32.xlu0 %v2129
    %v2131 = vpop.xlane.xlu0 %2130
    %v2132 = vsel %vm649, %v2122, 0.0
    %2133 = vadd.xlane.f32.xlu0 %v2132
    %v2134 = vpop.xlane.xlu0 %2133
    %vm2135 = vcmask 123904
    %v2136 = vsel %vm2135, %v2125, 0.0
    %2137 = vadd.xlane.f32.xlu0 %v2136
    %v2138 = vpop.xlane.xlu0 %2137
    %v2139 = vrcp.pop 16.0
    %v2140 = vmul.f32 16.0, %v2139
    %v2141 = vsub.f32 1.0, %v2140
    %v2142 = vmul.f32 %v2139, %v2141
    %v2143 = vadd.f32 %v2139, %v2142
    %vm2144 = vweird.f32 %v2139
    %v2145 = vsel %vm2144, %v2139, %v2143
    %v2146 = vmul.f32 %v2131, %v2145
    %v2147 = vmul.f32 %v2134, %v2145
    %v2148 = vmul.f32 %v2138, %v2145
    %v2149 = vsub.f32 %v2119, %v2146
    %v2150 = vsub.f32 %v2122, %v2147
    %v2151 = vsub.f32 %v2125, %v2148
    %v2152 = vmul.f32 %v2149, %v2149
    %v2153 = vmul.f32 %v2150, %v2150
    %v2154 = vmul.f32 %v2151, %v2151
    %v2155 = vsel %vm649, %v2152, 0.0
    %2156 = vadd.xlane.f32.xlu0 %v2155
    %v2157 = vpop.xlane.xlu0 %2156
    %v2158 = vsel %vm649, %v2153, 0.0
    %2159 = vadd.xlane.f32.xlu0 %v2158
    %v2160 = vpop.xlane.xlu0 %2159
    %v2161 = vsel %vm2135, %v2154, 0.0
    %2162 = vadd.xlane.f32.xlu0 %v2161
    %v2163 = vpop.xlane.xlu0 %2162
    %v2164 = vmul.f32 %v2157, %v2145
    %v2165 = vmul.f32 %v2160, %v2145
    %v2166 = vmul.f32 %v2163, %v2145
    %v2167 = vadd.f32 %v2164, 1e-12
    %v2168 = vadd.f32 %v2165, 1e-12
    %v2169 = vadd.f32 %v2166, 1e-12
    %v2170 = vrsqrt.pop %v2167
    %v2171 = vmul.f32 %v2170, %v2167
    %v2172 = vmul.f32 %v2171, %v2170
    %v2173 = vmul.f32 0.5, %v2172
    %v2174 = vsub.f32 1.5, %v2173
    %v2175 = vmul.f32 %v2170, %v2174
    %vm2176 = vweird.f32 %v2167
    %vm2177 = vweird.f32 %v2170
    %vm2178 = vmor %vm2176, %vm2177
    %v2179 = vsel %vm2178, %v2170, %v2175
    %v2180 = vrsqrt.pop %v2168
    %v2181 = vmul.f32 %v2180, %v2168
    %v2182 = vmul.f32 %v2181, %v2180
    %v2183 = vmul.f32 0.5, %v2182
    %v2184 = vsub.f32 1.5, %v2183
    %v2185 = vmul.f32 %v2180, %v2184
    %vm2186 = vweird.f32 %v2168
    %vm2187 = vweird.f32 %v2180
    %vm2188 = vmor %vm2186, %vm2187
    %v2189 = vsel %vm2188, %v2180, %v2185
    %v2190 = vrsqrt.pop %v2169
    %v2191 = vmul.f32 %v2190, %v2169
    %v2192 = vmul.f32 %v2191, %v2190
    %v2193 = vmul.f32 0.5, %v2192
    %v2194 = vsub.f32 1.5, %v2193
    %v2195 = vmul.f32 %v2190, %v2194
    %vm2196 = vweird.f32 %v2169
    %vm2197 = vweird.f32 %v2190
    %vm2198 = vmor %vm2196, %vm2197
    %v2199 = vsel %vm2198, %v2190, %v2195
    %v2200 = vmul.f32 %v2149, %v2179
    %v2201 = vmul.f32 %v2150, %v2189
    %v2202 = vmul.f32 %v2151, %v2199
    %v2204 = vperm.slane %v2127, 0
    %v2206 = vmul.f32 %v2200, %v2204
    %v2207 = vmul.f32 %v2201, %v2204
    %v2208 = vmul.f32 %v2202, %v2204
    %v2210 = vperm.slane %v2128, 0
    %v2212 = vadd.f32 %v2206, %v2210
    %v2213 = vadd.f32 %v2207, %v2210
    %v2214 = vadd.f32 %v2208, %v2210
    %2215 = vst.msk [vmem:[%s22] sm:$0xff] %vm649, %v2212
    %2216 = vst.msk [vmem:[%s22 + $0x8] sm:$0xff] %vm649, %v2213
    %2217 = vst.msk [vmem:[%s22 + $0x10] sm:$0x3] %vm2135, %v2214
    // Predicated region
    $region142: #{tpu_custom_call.1} parent=1 // pred_check
      _
    $region143: #{tpu_custom_call.1} parent=1 // pred_check_branch
      %2219 = sbr.rel (0) target = $region145
    $region144: #{tpu_custom_call.1} parent=1 // pred_region
      _
    $region145: #{tpu_custom_call.1} parent=1 // pred_fallthru
      _
    // Predicated region
    $region146: #{tpu_custom_call.1} parent=1 // pred_check
      _
    $region147: #{tpu_custom_call.1} parent=1 // pred_check_branch
      %2221 = sbr.rel (0) target = $region149
    $region148: #{tpu_custom_call.1} parent=1 // pred_region
      _
    $region149: #{tpu_custom_call.1} parent=1 // pred_fallthru
      _
    %2222 = vsyncpa [#allocation3], 1
    %2223 = vsyncpa [#allocation5], 1
    %2224 = vsyncpa [#allocation8], 1
    %2225 = vsyncpa [#allocation11], 1
    %2226 = vsyncpa [#allocation14], 1
    %2227 = vsyncpa [#allocation17], 1
    %2228 = vsyncpa [#allocation20], 1

</llo_original>
